<compile_context>
chip_gen: v7x
topology: tpu7x:2x2x1
jax: 0.10.0
libtpu: 0.0.40
codegen_flags: <defaults>
</compile_context>

<pallas_src>
import jax
import jax.numpy as jnp
import numpy as np
from jax.experimental import pallas as pl
from jax.experimental.pallas import tpu as pltpu

# ---------------- config (small, consistent with the module) ----------------
VOCAB    = 64     # config.vocab_size
WIDTH    = 32     # config.clip.text_width
SEQ      = 8      # config.text_seq_length
HEADS    = 2      # config.clip.text_heads
LAYERS   = 2      # config.clip.text_layers
R_MLP    = 4      # config.clip.r_mlp
LATENT   = 16     # config.latent_dim
BATCH    = 2
LN_EPS   = 1e-5   # PyTorch nn.LayerNorm default
HEAD_DIM = WIDTH // HEADS
HIDDEN   = R_MLP * WIDTH
BS       = BATCH * SEQ


def _full_spec(shape):
    # grid=(1,): every block is the full array (satisfies the (8,128) rule).
    return pl.BlockSpec(shape, lambda i, _n=len(shape): (0,) * _n)


def _layer_norm(x, gamma, beta):
    mu = jnp.mean(x, axis=-1, keepdims=True)
    var = jnp.mean((x - mu) ** 2, axis=-1, keepdims=True)
    return (x - mu) * jax.lax.rsqrt(var + LN_EPS) * gamma + beta


# ----------------------- single fused text-tower kernel ----------------------
def tower_kernel(text_ref, mask_ref, emb_ref, pos_ref,
                 wqkv_ref, bqkv_ref, wo_ref, bo_ref,
                 w1_ref, b1_ref, w2_ref, b2_ref, ln_ref,
                 fln_ref, proj_ref, out_ref):
    text = text_ref[...]                 # [B*S, 1] int32 (pre-flattened in wrapper)
    mask = mask_ref[...]                 # [B, S]   int32 (1 = valid, 0 = pad)

    # ---- embedding lookup (one-hot matmul, gather-free) + positional add ----
    vocab_iota = jax.lax.broadcasted_iota(jnp.int32, (BS, VOCAB), 1)
    onehot = (vocab_iota == text).astype(jnp.float32)               # [BS, V]
    x = jnp.dot(onehot, emb_ref[...],
                preferred_element_type=jnp.float32)                 # [BS, D]
    x = x + jnp.tile(pos_ref[...], (BATCH, 1))                      # [BS, D]

    # ---- key-padding bias: computed ONCE, reused by every layer -------------
    key_bias = jnp.where(mask > 0, 0.0, -1e9).astype(jnp.float32)   # [B, S]

    scale = jnp.float32(1.0 / np.sqrt(HEAD_DIM))

    # ---- transformer layers (static unroll; weights stacked on layer axis) --
    for l in range(LAYERS):
        ln = ln_ref[l]                                              # [4, D]

        # attention sub-block (pre-LN), fused QKV projection
        h = _layer_norm(x, ln[0:1, :], ln[1:2, :])                  # [BS, D]
        qkv = jnp.dot(h, wqkv_ref[l],
                      preferred_element_type=jnp.float32) + bqkv_ref[l]  # [BS, 3D]

        rows = []
        for b in range(BATCH):                                      # static
            r0 = b * SEQ
            heads = []
            for hh in range(HEADS):                                 # static
                c0 = hh * HEAD_DIM
                qb = qkv[r0:r0 + SEQ, c0:c0 + HEAD_DIM]                       # [S, hd]
                kb = qkv[r0:r0 + SEQ, WIDTH + c0:WIDTH + c0 + HEAD_DIM]       # [S, hd]
                vb = qkv[r0:r0 + SEQ, 2 * WIDTH + c0:2 * WIDTH + c0 + HEAD_DIM]

                s = jax.lax.dot_general(
                    qb, kb, (((1,), (1,)), ((), ())),
                    preferred_element_type=jnp.float32) * scale     # [S, S]
                s = s + key_bias[b:b + 1, :]                        # key padding mask
                s = s - jnp.max(s, axis=-1, keepdims=True)
                p = jnp.exp(s)
                p = p / jnp.sum(p, axis=-1, keepdims=True)
                heads.append(jnp.dot(p, vb,
                                     preferred_element_type=jnp.float32))  # [S, hd]
            rows.append(jnp.concatenate(heads, axis=1))             # [S, D]
        attn = jnp.concatenate(rows, axis=0)                        # [BS, D]

        x = x + jnp.dot(attn, wo_ref[l],
                        preferred_element_type=jnp.float32) + bo_ref[l]

        # MLP sub-block (pre-LN)
        h2 = _layer_norm(x, ln[2:3, :], ln[3:4, :])
        h2 = jnp.dot(h2, w1_ref[l],
                     preferred_element_type=jnp.float32) + b1_ref[l]
        # TODO(synk): PyTorch nn.GELU() default is exact erf; tanh approx used here.
        h2 = jax.nn.gelu(h2, approximate=True)
        x = x + jnp.dot(h2, w2_ref[l],
                        preferred_element_type=jnp.float32) + b2_ref[l]

    # ---- final LN + last-valid-token gather (one-hot contraction) + proj ----
    fln = fln_ref[...]                                              # [2, D]
    xn = _layer_norm(x, fln[0:1, :], fln[1:2, :])                   # [BS, D]

    idx = jnp.sum(mask, axis=1, keepdims=True) - 1                  # [B, 1]
    b_iota = jax.lax.broadcasted_iota(jnp.int32, (BATCH, 1), 0)     # [B, 1]
    tgt = b_iota * SEQ + idx                                        # flat row index
    row_iota = jax.lax.broadcasted_iota(jnp.int32, (BATCH, BS), 1)  # [B, BS]
    sel = (row_iota == tgt).astype(jnp.float32)                     # [B, BS]
    pooled = jnp.dot(sel, xn, preferred_element_type=jnp.float32)   # [B, D]

    out_ref[...] = jnp.dot(pooled, proj_ref[...],
                           preferred_element_type=jnp.float32)      # [B, LATENT]


def text_encoder_forward(params, text, mask):
    text_flat = text.reshape(BS, 1).astype(jnp.int32)
    args = (text_flat, mask.astype(jnp.int32),
            params['emb'], params['pos'],
            params['wqkv'], params['bqkv'], params['wo'], params['bo'],
            params['w1'], params['b1'], params['w2'], params['b2'],
            params['ln'], params['fln'], params['proj'])
    return pl.pallas_call(
        tower_kernel,
        out_shape=jax.ShapeDtypeStruct((BATCH, LATENT), jnp.float32),
        grid=(1,),
        in_specs=[_full_spec(a.shape) for a in args],
        out_specs=_full_spec((BATCH, LATENT)),
        compiler_params=pltpu.CompilerParams(
            dimension_semantics=("arbitrary",)),
    )(*args)


# ------------------------------ parameter init -------------------------------
def init_params(key):
    std = WIDTH ** (-0.5)
    ks = iter(jax.random.split(key, 10))
    ln_pattern = jnp.array([1.0, 0.0, 1.0, 0.0], jnp.float32)       # g1,b1,g2,b2
    return {
        'emb':  std * jax.random.normal(next(ks), (VOCAB, WIDTH), jnp.float32),
        'pos':  std * jax.random.normal(next(ks), (SEQ, WIDTH), jnp.float32),
        # stacked per-layer weights
        'wqkv': 0.02 * jax.random.normal(next(ks), (LAYERS, WIDTH, 3 * WIDTH),
                                         jnp.float32),
        'bqkv': jnp.zeros((LAYERS, 1, 3 * WIDTH), jnp.float32),
        'wo':   0.02 * jax.random.normal(next(ks), (LAYERS, WIDTH, WIDTH),
                                         jnp.float32),
        'bo':   jnp.zeros((LAYERS, 1, WIDTH), jnp.float32),
        'w1':   0.02 * jax.random.normal(next(ks), (LAYERS, WIDTH, HIDDEN),
                                         jnp.float32),
        'b1':   jnp.zeros((LAYERS, 1, HIDDEN), jnp.float32),
        'w2':   0.02 * jax.random.normal(next(ks), (LAYERS, HIDDEN, WIDTH),
                                         jnp.float32),
        'b2':   jnp.zeros((LAYERS, 1, WIDTH), jnp.float32),
        # packed LN params: [L, 4, D] rows = (ln1_g, ln1_b, ln2_g, ln2_b)
        'ln':   jnp.tile(ln_pattern[None, :, None], (LAYERS, 1, WIDTH)),
        # packed final LN params: [2, D] rows = (gamma, beta)
        'fln':  jnp.stack([jnp.ones((WIDTH,), jnp.float32),
                           jnp.zeros((WIDTH,), jnp.float32)], axis=0),
        'proj': std * jax.random.normal(next(ks), (WIDTH, LATENT), jnp.float32),
    }


# --------------------------------- main ---------------------------------------
if __name__ == "__main__":
    key = jax.random.PRNGKey(0)
    k_param, k_text = jax.random.split(key)

    params = init_params(k_param)

    text = jax.random.randint(k_text, (BATCH, SEQ), 0, VOCAB, dtype=jnp.int32)
    lengths = jnp.array([SEQ, 5], dtype=jnp.int32)            # per-example valid lengths
    mask = (jnp.arange(SEQ, dtype=jnp.int32)[None, :]
            < lengths[:, None]).astype(jnp.int32)             # [B, S], 1 = valid

    out = text_encoder_forward(params, text, mask)
    out = jax.block_until_ready(out)

    assert out.shape == (BATCH, LATENT), out.shape
    assert bool(jnp.all(jnp.isfinite(out)))
    print("KERNEL_OK")
</pallas_src>

<mosaic_0001>
module attributes {stable_mosaic.version = 11 : i64} {
  func.func @tower_kernel(%arg0: i32, %arg1: memref<16x1xi32, #tpu.memory_space<vmem>>, %arg2: memref<2x8xi32, #tpu.memory_space<vmem>>, %arg3: memref<64x32xf32, #tpu.memory_space<vmem>>, %arg4: memref<8x32xf32, #tpu.memory_space<vmem>>, %arg5: memref<2x32x96xf32, #tpu.memory_space<vmem>>, %arg6: memref<2x1x96xf32, #tpu.memory_space<vmem>>, %arg7: memref<2x32x32xf32, #tpu.memory_space<vmem>>, %arg8: memref<2x1x32xf32, #tpu.memory_space<vmem>>, %arg9: memref<2x32x128xf32, #tpu.memory_space<vmem>>, %arg10: memref<2x1x128xf32, #tpu.memory_space<vmem>>, %arg11: memref<2x128x32xf32, #tpu.memory_space<vmem>>, %arg12: memref<2x1x32xf32, #tpu.memory_space<vmem>>, %arg13: memref<2x4x32xf32, #tpu.memory_space<vmem>>, %arg14: memref<2x32xf32, #tpu.memory_space<vmem>>, %arg15: memref<32x16xf32, #tpu.memory_space<vmem>>, %arg16: memref<2x16xf32, #tpu.memory_space<vmem>>) attributes {dimension_semantics = [#tpu.dimension_semantics<arbitrary>], iteration_bounds = array<i64: 1>, scalar_prefetch = 0 : i64, scratch_operands = 0 : i64, tpu.core_type = #tpu.core_type<tc>, window_params = [{pipeline_mode = #tpu.pipeline_mode<synchronous>, transform_indices = @transform_0, window_bounds = array<i64: 16, 1>}, {pipeline_mode = #tpu.pipeline_mode<synchronous>, transform_indices = @transform_1, window_bounds = array<i64: 2, 8>}, {pipeline_mode = #tpu.pipeline_mode<synchronous>, transform_indices = @transform_2, window_bounds = array<i64: 64, 32>}, {pipeline_mode = #tpu.pipeline_mode<synchronous>, transform_indices = @transform_3, window_bounds = array<i64: 8, 32>}, {pipeline_mode = #tpu.pipeline_mode<synchronous>, transform_indices = @transform_4, window_bounds = array<i64: 2, 32, 96>}, {pipeline_mode = #tpu.pipeline_mode<synchronous>, transform_indices = @transform_5, window_bounds = array<i64: 2, 1, 96>}, {pipeline_mode = #tpu.pipeline_mode<synchronous>, transform_indices = @transform_6, window_bounds = array<i64: 2, 32, 32>}, {pipeline_mode = #tpu.pipeline_mode<synchronous>, transform_indices = @transform_7, window_bounds = array<i64: 2, 1, 32>}, {pipeline_mode = #tpu.pipeline_mode<synchronous>, transform_indices = @transform_8, window_bounds = array<i64: 2, 32, 128>}, {pipeline_mode = #tpu.pipeline_mode<synchronous>, transform_indices = @transform_9, window_bounds = array<i64: 2, 1, 128>}, {pipeline_mode = #tpu.pipeline_mode<synchronous>, transform_indices = @transform_10, window_bounds = array<i64: 2, 128, 32>}, {pipeline_mode = #tpu.pipeline_mode<synchronous>, transform_indices = @transform_11, window_bounds = array<i64: 2, 1, 32>}, {pipeline_mode = #tpu.pipeline_mode<synchronous>, transform_indices = @transform_12, window_bounds = array<i64: 2, 4, 32>}, {pipeline_mode = #tpu.pipeline_mode<synchronous>, transform_indices = @transform_13, window_bounds = array<i64: 2, 32>}, {pipeline_mode = #tpu.pipeline_mode<synchronous>, transform_indices = @transform_14, window_bounds = array<i64: 32, 16>}, {pipeline_mode = #tpu.pipeline_mode<synchronous>, transform_indices = @transform_15, window_bounds = array<i64: 2, 16>}]} {
    %c0 = arith.constant 0 : index
    %c0_0 = arith.constant 0 : index
    %0 = vector.load %arg1[%c0, %c0_0] : memref<16x1xi32, #tpu.memory_space<vmem>>, vector<16x1xi32>
    %c0_1 = arith.constant 0 : index
    %c0_2 = arith.constant 0 : index
    %1 = vector.load %arg2[%c0_1, %c0_2] : memref<2x8xi32, #tpu.memory_space<vmem>>, vector<2x8xi32>
    %2 = tpu.iota {dimensions = array<i32: 1>} : vector<16x64xi32>
    %3 = vector.broadcast %0 : vector<16x1xi32> to vector<16x64xi32>
    %4 = arith.cmpi eq, %2, %3 : vector<16x64xi32>
    %5 = arith.extui %4 : vector<16x64xi1> to vector<16x64xi32>
    %6 = arith.sitofp %5 : vector<16x64xi32> to vector<16x64xf32>
    %c0_3 = arith.constant 0 : index
    %c0_4 = arith.constant 0 : index
    %7 = vector.load %arg3[%c0_3, %c0_4] : memref<64x32xf32, #tpu.memory_space<vmem>>, vector<64x32xf32>
    %cst = arith.constant dense<0.000000e+00> : vector<16x32xf32>
    %8 = tpu.matmul %6, %7, %cst {dimension_numbers = #tpu.dot_dimension_numbers<[1], [0], [0], [1], [0, 0, 1, 1], [], []>} : vector<16x64xf32>, vector<64x32xf32>, vector<16x32xf32> -> vector<16x32xf32>
    %c0_5 = arith.constant 0 : index
    %c0_6 = arith.constant 0 : index
    %9 = vector.load %arg4[%c0_5, %c0_6] : memref<8x32xf32, #tpu.memory_space<vmem>>, vector<8x32xf32>
    %10 = tpu.concatenate %9, %9 in 0 : vector<8x32xf32>, vector<8x32xf32> -> vector<16x32xf32>
    %11 = arith.addf %8, %10 : vector<16x32xf32>
    %c0_i32 = arith.constant 0 : i32
    %12 = vector.broadcast %c0_i32 : i32 to vector<2x8xi32>
    %13 = arith.cmpi sgt, %1, %12 : vector<2x8xi32>
    %cst_7 = arith.constant 0.000000e+00 : f32
    %cst_8 = arith.constant -1.000000e+09 : f32
    %14 = vector.broadcast %cst_7 : f32 to vector<2x8xf32>
    %15 = vector.broadcast %cst_8 : f32 to vector<2x8xf32>
    %16 = arith.select %13, %14, %15 : vector<2x8xi1>, vector<2x8xf32>
    %c0_9 = arith.constant 0 : index
    %c0_10 = arith.constant 0 : index
    %c0_11 = arith.constant 0 : index
    %17 = vector.load %arg13[%c0_9, %c0_10, %c0_11] : memref<2x4x32xf32, #tpu.memory_space<vmem>>, vector<1x4x32xf32>
    %18 = vector.shape_cast %17 : vector<1x4x32xf32> to vector<4x32xf32>
    %19 = vector.extract_strided_slice %18 {offsets = [0, 0], sizes = [1, 32], strides = [1, 1]} : vector<4x32xf32> to vector<1x32xf32>
    %20 = vector.extract_strided_slice %18 {offsets = [1, 0], sizes = [1, 32], strides = [1, 1]} : vector<4x32xf32> to vector<1x32xf32>
    %cst_12 = arith.constant dense<0.000000e+00> : vector<16xf32>
    %21 = vector.multi_reduction <add>, %11, %cst_12 [1] : vector<16x32xf32> to vector<16xf32>
    %22 = vector.shape_cast %21 : vector<16xf32> to vector<16x1xf32>
    %cst_13 = arith.constant 3.200000e+01 : f32
    %23 = vector.broadcast %cst_13 : f32 to vector<16x1xf32>
    %24 = arith.divf %22, %23 : vector<16x1xf32>
    %25 = vector.broadcast %24 : vector<16x1xf32> to vector<16x32xf32>
    %26 = arith.subf %11, %25 : vector<16x32xf32>
    %27 = arith.mulf %26, %26 : vector<16x32xf32>
    %cst_14 = arith.constant dense<0.000000e+00> : vector<16xf32>
    %28 = vector.multi_reduction <add>, %27, %cst_14 [1] : vector<16x32xf32> to vector<16xf32>
    %29 = vector.shape_cast %28 : vector<16xf32> to vector<16x1xf32>
    %cst_15 = arith.constant 3.200000e+01 : f32
    %30 = vector.broadcast %cst_15 : f32 to vector<16x1xf32>
    %31 = arith.divf %29, %30 : vector<16x1xf32>
    %32 = vector.broadcast %24 : vector<16x1xf32> to vector<16x32xf32>
    %33 = arith.subf %11, %32 : vector<16x32xf32>
    %cst_16 = arith.constant 9.99999974E-6 : f32
    %34 = vector.broadcast %cst_16 : f32 to vector<16x1xf32>
    %35 = arith.addf %31, %34 : vector<16x1xf32>
    %36 = math.rsqrt %35 : vector<16x1xf32>
    %37 = vector.broadcast %36 : vector<16x1xf32> to vector<16x32xf32>
    %38 = arith.mulf %33, %37 : vector<16x32xf32>
    %39 = vector.broadcast %19 : vector<1x32xf32> to vector<16x32xf32>
    %40 = arith.mulf %38, %39 : vector<16x32xf32>
    %41 = vector.broadcast %20 : vector<1x32xf32> to vector<16x32xf32>
    %42 = arith.addf %40, %41 : vector<16x32xf32>
    %c0_17 = arith.constant 0 : index
    %c0_18 = arith.constant 0 : index
    %c0_19 = arith.constant 0 : index
    %43 = vector.load %arg5[%c0_17, %c0_18, %c0_19] : memref<2x32x96xf32, #tpu.memory_space<vmem>>, vector<1x32x96xf32>
    %44 = vector.shape_cast %43 : vector<1x32x96xf32> to vector<32x96xf32>
    %cst_20 = arith.constant dense<0.000000e+00> : vector<16x96xf32>
    %45 = tpu.matmul %42, %44, %cst_20 {dimension_numbers = #tpu.dot_dimension_numbers<[1], [0], [0], [1], [0, 0, 1, 1], [], []>} : vector<16x32xf32>, vector<32x96xf32>, vector<16x96xf32> -> vector<16x96xf32>
    %c0_21 = arith.constant 0 : index
    %c0_22 = arith.constant 0 : index
    %c0_23 = arith.constant 0 : index
    %46 = vector.load %arg6[%c0_21, %c0_22, %c0_23] : memref<2x1x96xf32, #tpu.memory_space<vmem>>, vector<1x1x96xf32>
    %47 = vector.shape_cast %46 : vector<1x1x96xf32> to vector<1x96xf32>
    %48 = vector.broadcast %47 : vector<1x96xf32> to vector<16x96xf32>
    %49 = arith.addf %45, %48 : vector<16x96xf32>
    %50 = vector.extract_strided_slice %49 {offsets = [0, 0], sizes = [8, 16], strides = [1, 1]} : vector<16x96xf32> to vector<8x16xf32>
    %51 = vector.extract_strided_slice %49 {offsets = [0, 32], sizes = [8, 16], strides = [1, 1]} : vector<16x96xf32> to vector<8x16xf32>
    %52 = vector.extract_strided_slice %49 {offsets = [0, 64], sizes = [8, 16], strides = [1, 1]} : vector<16x96xf32> to vector<8x16xf32>
    %cst_24 = arith.constant dense<0.000000e+00> : vector<8x8xf32>
    %53 = tpu.matmul %50, %51, %cst_24 {dimension_numbers = #tpu.dot_dimension_numbers<[1], [1], [0], [0], [0, 0, 1, 0], [], []>} : vector<8x16xf32>, vector<8x16xf32>, vector<8x8xf32> -> vector<8x8xf32>
    %cst_25 = arith.constant 2.500000e-01 : f32
    %54 = vector.broadcast %cst_25 : f32 to vector<8x8xf32>
    %55 = arith.mulf %53, %54 : vector<8x8xf32>
    %56 = vector.extract_strided_slice %16 {offsets = [0, 0], sizes = [1, 8], strides = [1, 1]} : vector<2x8xf32> to vector<1x8xf32>
    %57 = vector.broadcast %56 : vector<1x8xf32> to vector<8x8xf32>
    %58 = arith.addf %55, %57 : vector<8x8xf32>
    %cst_26 = arith.constant dense<0xFF800000> : vector<8xf32>
    %59 = vector.multi_reduction <maximumf>, %58, %cst_26 [1] : vector<8x8xf32> to vector<8xf32>
    %60 = vector.shape_cast %59 : vector<8xf32> to vector<8x1xf32>
    %61 = vector.broadcast %60 : vector<8x1xf32> to vector<8x8xf32>
    %62 = arith.subf %58, %61 : vector<8x8xf32>
    %63 = math.exp %62 : vector<8x8xf32>
    %cst_27 = arith.constant dense<0.000000e+00> : vector<8xf32>
    %64 = vector.multi_reduction <add>, %63, %cst_27 [1] : vector<8x8xf32> to vector<8xf32>
    %65 = vector.shape_cast %64 : vector<8xf32> to vector<8x1xf32>
    %66 = vector.broadcast %65 : vector<8x1xf32> to vector<8x8xf32>
    %67 = arith.divf %63, %66 : vector<8x8xf32>
    %cst_28 = arith.constant dense<0.000000e+00> : vector<8x16xf32>
    %68 = tpu.matmul %67, %52, %cst_28 {dimension_numbers = #tpu.dot_dimension_numbers<[1], [0], [0], [1], [0, 0, 1, 1], [], []>} : vector<8x8xf32>, vector<8x16xf32>, vector<8x16xf32> -> vector<8x16xf32>
    %69 = vector.extract_strided_slice %49 {offsets = [0, 16], sizes = [8, 16], strides = [1, 1]} : vector<16x96xf32> to vector<8x16xf32>
    %70 = vector.extract_strided_slice %49 {offsets = [0, 48], sizes = [8, 16], strides = [1, 1]} : vector<16x96xf32> to vector<8x16xf32>
    %71 = vector.extract_strided_slice %49 {offsets = [0, 80], sizes = [8, 16], strides = [1, 1]} : vector<16x96xf32> to vector<8x16xf32>
    %cst_29 = arith.constant dense<0.000000e+00> : vector<8x8xf32>
    %72 = tpu.matmul %69, %70, %cst_29 {dimension_numbers = #tpu.dot_dimension_numbers<[1], [1], [0], [0], [0, 0, 1, 0], [], []>} : vector<8x16xf32>, vector<8x16xf32>, vector<8x8xf32> -> vector<8x8xf32>
    %cst_30 = arith.constant 2.500000e-01 : f32
    %73 = vector.broadcast %cst_30 : f32 to vector<8x8xf32>
    %74 = arith.mulf %72, %73 : vector<8x8xf32>
    %75 = vector.extract_strided_slice %16 {offsets = [0, 0], sizes = [1, 8], strides = [1, 1]} : vector<2x8xf32> to vector<1x8xf32>
    %76 = vector.broadcast %75 : vector<1x8xf32> to vector<8x8xf32>
    %77 = arith.addf %74, %76 : vector<8x8xf32>
    %cst_31 = arith.constant dense<0xFF800000> : vector<8xf32>
    %78 = vector.multi_reduction <maximumf>, %77, %cst_31 [1] : vector<8x8xf32> to vector<8xf32>
    %79 = vector.shape_cast %78 : vector<8xf32> to vector<8x1xf32>
    %80 = vector.broadcast %79 : vector<8x1xf32> to vector<8x8xf32>
    %81 = arith.subf %77, %80 : vector<8x8xf32>
    %82 = math.exp %81 : vector<8x8xf32>
    %cst_32 = arith.constant dense<0.000000e+00> : vector<8xf32>
    %83 = vector.multi_reduction <add>, %82, %cst_32 [1] : vector<8x8xf32> to vector<8xf32>
    %84 = vector.shape_cast %83 : vector<8xf32> to vector<8x1xf32>
    %85 = vector.broadcast %84 : vector<8x1xf32> to vector<8x8xf32>
    %86 = arith.divf %82, %85 : vector<8x8xf32>
    %cst_33 = arith.constant dense<0.000000e+00> : vector<8x16xf32>
    %87 = tpu.matmul %86, %71, %cst_33 {dimension_numbers = #tpu.dot_dimension_numbers<[1], [0], [0], [1], [0, 0, 1, 1], [], []>} : vector<8x8xf32>, vector<8x16xf32>, vector<8x16xf32> -> vector<8x16xf32>
    %88 = tpu.concatenate %68, %87 in 1 : vector<8x16xf32>, vector<8x16xf32> -> vector<8x32xf32>
    %89 = vector.extract_strided_slice %49 {offsets = [8, 0], sizes = [8, 16], strides = [1, 1]} : vector<16x96xf32> to vector<8x16xf32>
    %90 = vector.extract_strided_slice %49 {offsets = [8, 32], sizes = [8, 16], strides = [1, 1]} : vector<16x96xf32> to vector<8x16xf32>
    %91 = vector.extract_strided_slice %49 {offsets = [8, 64], sizes = [8, 16], strides = [1, 1]} : vector<16x96xf32> to vector<8x16xf32>
    %cst_34 = arith.constant dense<0.000000e+00> : vector<8x8xf32>
    %92 = tpu.matmul %89, %90, %cst_34 {dimension_numbers = #tpu.dot_dimension_numbers<[1], [1], [0], [0], [0, 0, 1, 0], [], []>} : vector<8x16xf32>, vector<8x16xf32>, vector<8x8xf32> -> vector<8x8xf32>
    %cst_35 = arith.constant 2.500000e-01 : f32
    %93 = vector.broadcast %cst_35 : f32 to vector<8x8xf32>
    %94 = arith.mulf %92, %93 : vector<8x8xf32>
    %95 = vector.extract_strided_slice %16 {offsets = [1, 0], sizes = [1, 8], strides = [1, 1]} : vector<2x8xf32> to vector<1x8xf32>
    %96 = vector.broadcast %95 : vector<1x8xf32> to vector<8x8xf32>
    %97 = arith.addf %94, %96 : vector<8x8xf32>
    %cst_36 = arith.constant dense<0xFF800000> : vector<8xf32>
    %98 = vector.multi_reduction <maximumf>, %97, %cst_36 [1] : vector<8x8xf32> to vector<8xf32>
    %99 = vector.shape_cast %98 : vector<8xf32> to vector<8x1xf32>
    %100 = vector.broadcast %99 : vector<8x1xf32> to vector<8x8xf32>
    %101 = arith.subf %97, %100 : vector<8x8xf32>
    %102 = math.exp %101 : vector<8x8xf32>
    %cst_37 = arith.constant dense<0.000000e+00> : vector<8xf32>
    %103 = vector.multi_reduction <add>, %102, %cst_37 [1] : vector<8x8xf32> to vector<8xf32>
    %104 = vector.shape_cast %103 : vector<8xf32> to vector<8x1xf32>
    %105 = vector.broadcast %104 : vector<8x1xf32> to vector<8x8xf32>
    %106 = arith.divf %102, %105 : vector<8x8xf32>
    %cst_38 = arith.constant dense<0.000000e+00> : vector<8x16xf32>
    %107 = tpu.matmul %106, %91, %cst_38 {dimension_numbers = #tpu.dot_dimension_numbers<[1], [0], [0], [1], [0, 0, 1, 1], [], []>} : vector<8x8xf32>, vector<8x16xf32>, vector<8x16xf32> -> vector<8x16xf32>
    %108 = vector.extract_strided_slice %49 {offsets = [8, 16], sizes = [8, 16], strides = [1, 1]} : vector<16x96xf32> to vector<8x16xf32>
    %109 = vector.extract_strided_slice %49 {offsets = [8, 48], sizes = [8, 16], strides = [1, 1]} : vector<16x96xf32> to vector<8x16xf32>
    %110 = vector.extract_strided_slice %49 {offsets = [8, 80], sizes = [8, 16], strides = [1, 1]} : vector<16x96xf32> to vector<8x16xf32>
    %cst_39 = arith.constant dense<0.000000e+00> : vector<8x8xf32>
    %111 = tpu.matmul %108, %109, %cst_39 {dimension_numbers = #tpu.dot_dimension_numbers<[1], [1], [0], [0], [0, 0, 1, 0], [], []>} : vector<8x16xf32>, vector<8x16xf32>, vector<8x8xf32> -> vector<8x8xf32>
    %cst_40 = arith.constant 2.500000e-01 : f32
    %112 = vector.broadcast %cst_40 : f32 to vector<8x8xf32>
    %113 = arith.mulf %111, %112 : vector<8x8xf32>
    %114 = vector.extract_strided_slice %16 {offsets = [1, 0], sizes = [1, 8], strides = [1, 1]} : vector<2x8xf32> to vector<1x8xf32>
    %115 = vector.broadcast %114 : vector<1x8xf32> to vector<8x8xf32>
    %116 = arith.addf %113, %115 : vector<8x8xf32>
    %cst_41 = arith.constant dense<0xFF800000> : vector<8xf32>
    %117 = vector.multi_reduction <maximumf>, %116, %cst_41 [1] : vector<8x8xf32> to vector<8xf32>
    %118 = vector.shape_cast %117 : vector<8xf32> to vector<8x1xf32>
    %119 = vector.broadcast %118 : vector<8x1xf32> to vector<8x8xf32>
    %120 = arith.subf %116, %119 : vector<8x8xf32>
    %121 = math.exp %120 : vector<8x8xf32>
    %cst_42 = arith.constant dense<0.000000e+00> : vector<8xf32>
    %122 = vector.multi_reduction <add>, %121, %cst_42 [1] : vector<8x8xf32> to vector<8xf32>
    %123 = vector.shape_cast %122 : vector<8xf32> to vector<8x1xf32>
    %124 = vector.broadcast %123 : vector<8x1xf32> to vector<8x8xf32>
    %125 = arith.divf %121, %124 : vector<8x8xf32>
    %cst_43 = arith.constant dense<0.000000e+00> : vector<8x16xf32>
    %126 = tpu.matmul %125, %110, %cst_43 {dimension_numbers = #tpu.dot_dimension_numbers<[1], [0], [0], [1], [0, 0, 1, 1], [], []>} : vector<8x8xf32>, vector<8x16xf32>, vector<8x16xf32> -> vector<8x16xf32>
    %127 = tpu.concatenate %107, %126 in 1 : vector<8x16xf32>, vector<8x16xf32> -> vector<8x32xf32>
    %128 = tpu.concatenate %88, %127 in 0 : vector<8x32xf32>, vector<8x32xf32> -> vector<16x32xf32>
    %c0_44 = arith.constant 0 : index
    %c0_45 = arith.constant 0 : index
    %c0_46 = arith.constant 0 : index
    %129 = vector.load %arg7[%c0_44, %c0_45, %c0_46] : memref<2x32x32xf32, #tpu.memory_space<vmem>>, vector<1x32x32xf32>
    %130 = vector.shape_cast %129 : vector<1x32x32xf32> to vector<32x32xf32>
    %cst_47 = arith.constant dense<0.000000e+00> : vector<16x32xf32>
    %131 = tpu.matmul %128, %130, %cst_47 {dimension_numbers = #tpu.dot_dimension_numbers<[1], [0], [0], [1], [0, 0, 1, 1], [], []>} : vector<16x32xf32>, vector<32x32xf32>, vector<16x32xf32> -> vector<16x32xf32>
    %132 = arith.addf %11, %131 : vector<16x32xf32>
    %c0_48 = arith.constant 0 : index
    %c0_49 = arith.constant 0 : index
    %c0_50 = arith.constant 0 : index
    %133 = vector.load %arg8[%c0_48, %c0_49, %c0_50] : memref<2x1x32xf32, #tpu.memory_space<vmem>>, vector<1x1x32xf32>
    %134 = vector.shape_cast %133 : vector<1x1x32xf32> to vector<1x32xf32>
    %135 = vector.broadcast %134 : vector<1x32xf32> to vector<16x32xf32>
    %136 = arith.addf %132, %135 : vector<16x32xf32>
    %137 = vector.extract_strided_slice %18 {offsets = [2, 0], sizes = [1, 32], strides = [1, 1]} : vector<4x32xf32> to vector<1x32xf32>
    %138 = vector.extract_strided_slice %18 {offsets = [3, 0], sizes = [1, 32], strides = [1, 1]} : vector<4x32xf32> to vector<1x32xf32>
    %cst_51 = arith.constant dense<0.000000e+00> : vector<16xf32>
    %139 = vector.multi_reduction <add>, %136, %cst_51 [1] : vector<16x32xf32> to vector<16xf32>
    %140 = vector.shape_cast %139 : vector<16xf32> to vector<16x1xf32>
    %cst_52 = arith.constant 3.200000e+01 : f32
    %141 = vector.broadcast %cst_52 : f32 to vector<16x1xf32>
    %142 = arith.divf %140, %141 : vector<16x1xf32>
    %143 = vector.broadcast %142 : vector<16x1xf32> to vector<16x32xf32>
    %144 = arith.subf %136, %143 : vector<16x32xf32>
    %145 = arith.mulf %144, %144 : vector<16x32xf32>
    %cst_53 = arith.constant dense<0.000000e+00> : vector<16xf32>
    %146 = vector.multi_reduction <add>, %145, %cst_53 [1] : vector<16x32xf32> to vector<16xf32>
    %147 = vector.shape_cast %146 : vector<16xf32> to vector<16x1xf32>
    %cst_54 = arith.constant 3.200000e+01 : f32
    %148 = vector.broadcast %cst_54 : f32 to vector<16x1xf32>
    %149 = arith.divf %147, %148 : vector<16x1xf32>
    %150 = vector.broadcast %142 : vector<16x1xf32> to vector<16x32xf32>
    %151 = arith.subf %136, %150 : vector<16x32xf32>
    %cst_55 = arith.constant 9.99999974E-6 : f32
    %152 = vector.broadcast %cst_55 : f32 to vector<16x1xf32>
    %153 = arith.addf %149, %152 : vector<16x1xf32>
    %154 = math.rsqrt %153 : vector<16x1xf32>
    %155 = vector.broadcast %154 : vector<16x1xf32> to vector<16x32xf32>
    %156 = arith.mulf %151, %155 : vector<16x32xf32>
    %157 = vector.broadcast %137 : vector<1x32xf32> to vector<16x32xf32>
    %158 = arith.mulf %156, %157 : vector<16x32xf32>
    %159 = vector.broadcast %138 : vector<1x32xf32> to vector<16x32xf32>
    %160 = arith.addf %158, %159 : vector<16x32xf32>
    %c0_56 = arith.constant 0 : index
    %c0_57 = arith.constant 0 : index
    %c0_58 = arith.constant 0 : index
    %161 = vector.load %arg9[%c0_56, %c0_57, %c0_58] : memref<2x32x128xf32, #tpu.memory_space<vmem>>, vector<1x32x128xf32>
    %162 = vector.shape_cast %161 : vector<1x32x128xf32> to vector<32x128xf32>
    %cst_59 = arith.constant dense<0.000000e+00> : vector<16x128xf32>
    %163 = tpu.matmul %160, %162, %cst_59 {dimension_numbers = #tpu.dot_dimension_numbers<[1], [0], [0], [1], [0, 0, 1, 1], [], []>} : vector<16x32xf32>, vector<32x128xf32>, vector<16x128xf32> -> vector<16x128xf32>
    %c0_60 = arith.constant 0 : index
    %c0_61 = arith.constant 0 : index
    %c0_62 = arith.constant 0 : index
    %164 = vector.load %arg10[%c0_60, %c0_61, %c0_62] : memref<2x1x128xf32, #tpu.memory_space<vmem>>, vector<1x1x128xf32>
    %165 = vector.shape_cast %164 : vector<1x1x128xf32> to vector<1x128xf32>
    %166 = vector.broadcast %165 : vector<1x128xf32> to vector<16x128xf32>
    %167 = arith.addf %163, %166 : vector<16x128xf32>
    %168 = arith.mulf %167, %167 : vector<16x128xf32>
    %169 = arith.mulf %167, %168 : vector<16x128xf32>
    %cst_63 = arith.constant 4.471500e-02 : f32
    %170 = vector.broadcast %cst_63 : f32 to vector<16x128xf32>
    %171 = arith.mulf %170, %169 : vector<16x128xf32>
    %172 = arith.addf %167, %171 : vector<16x128xf32>
    %cst_64 = arith.constant 0.797884583 : f32
    %173 = vector.broadcast %cst_64 : f32 to vector<16x128xf32>
    %174 = arith.mulf %173, %172 : vector<16x128xf32>
    %175 = math.tanh %174 : vector<16x128xf32>
    %cst_65 = arith.constant 1.000000e+00 : f32
    %176 = vector.broadcast %cst_65 : f32 to vector<16x128xf32>
    %177 = arith.addf %176, %175 : vector<16x128xf32>
    %cst_66 = arith.constant 5.000000e-01 : f32
    %178 = vector.broadcast %cst_66 : f32 to vector<16x128xf32>
    %179 = arith.mulf %178, %177 : vector<16x128xf32>
    %180 = arith.mulf %167, %179 : vector<16x128xf32>
    %c0_67 = arith.constant 0 : index
    %c0_68 = arith.constant 0 : index
    %c0_69 = arith.constant 0 : index
    %181 = vector.load %arg11[%c0_67, %c0_68, %c0_69] : memref<2x128x32xf32, #tpu.memory_space<vmem>>, vector<1x128x32xf32>
    %182 = vector.shape_cast %181 : vector<1x128x32xf32> to vector<128x32xf32>
    %cst_70 = arith.constant dense<0.000000e+00> : vector<16x32xf32>
    %183 = tpu.matmul %180, %182, %cst_70 {dimension_numbers = #tpu.dot_dimension_numbers<[1], [0], [0], [1], [0, 0, 1, 1], [], []>} : vector<16x128xf32>, vector<128x32xf32>, vector<16x32xf32> -> vector<16x32xf32>
    %184 = arith.addf %136, %183 : vector<16x32xf32>
    %c0_71 = arith.constant 0 : index
    %c0_72 = arith.constant 0 : index
    %c0_73 = arith.constant 0 : index
    %185 = vector.load %arg12[%c0_71, %c0_72, %c0_73] : memref<2x1x32xf32, #tpu.memory_space<vmem>>, vector<1x1x32xf32>
    %186 = vector.shape_cast %185 : vector<1x1x32xf32> to vector<1x32xf32>
    %187 = vector.broadcast %186 : vector<1x32xf32> to vector<16x32xf32>
    %188 = arith.addf %184, %187 : vector<16x32xf32>
    %c1 = arith.constant 1 : index
    %c0_74 = arith.constant 0 : index
    %c0_75 = arith.constant 0 : index
    %189 = vector.load %arg13[%c1, %c0_74, %c0_75] : memref<2x4x32xf32, #tpu.memory_space<vmem>>, vector<1x4x32xf32>
    %190 = vector.shape_cast %189 : vector<1x4x32xf32> to vector<4x32xf32>
    %191 = vector.extract_strided_slice %190 {offsets = [0, 0], sizes = [1, 32], strides = [1, 1]} : vector<4x32xf32> to vector<1x32xf32>
    %192 = vector.extract_strided_slice %190 {offsets = [1, 0], sizes = [1, 32], strides = [1, 1]} : vector<4x32xf32> to vector<1x32xf32>
    %cst_76 = arith.constant dense<0.000000e+00> : vector<16xf32>
    %193 = vector.multi_reduction <add>, %188, %cst_76 [1] : vector<16x32xf32> to vector<16xf32>
    %194 = vector.shape_cast %193 : vector<16xf32> to vector<16x1xf32>
    %cst_77 = arith.constant 3.200000e+01 : f32
    %195 = vector.broadcast %cst_77 : f32 to vector<16x1xf32>
    %196 = arith.divf %194, %195 : vector<16x1xf32>
    %197 = vector.broadcast %196 : vector<16x1xf32> to vector<16x32xf32>
    %198 = arith.subf %188, %197 : vector<16x32xf32>
    %199 = arith.mulf %198, %198 : vector<16x32xf32>
    %cst_78 = arith.constant dense<0.000000e+00> : vector<16xf32>
    %200 = vector.multi_reduction <add>, %199, %cst_78 [1] : vector<16x32xf32> to vector<16xf32>
    %201 = vector.shape_cast %200 : vector<16xf32> to vector<16x1xf32>
    %cst_79 = arith.constant 3.200000e+01 : f32
    %202 = vector.broadcast %cst_79 : f32 to vector<16x1xf32>
    %203 = arith.divf %201, %202 : vector<16x1xf32>
    %204 = vector.broadcast %196 : vector<16x1xf32> to vector<16x32xf32>
    %205 = arith.subf %188, %204 : vector<16x32xf32>
    %cst_80 = arith.constant 9.99999974E-6 : f32
    %206 = vector.broadcast %cst_80 : f32 to vector<16x1xf32>
    %207 = arith.addf %203, %206 : vector<16x1xf32>
    %208 = math.rsqrt %207 : vector<16x1xf32>
    %209 = vector.broadcast %208 : vector<16x1xf32> to vector<16x32xf32>
    %210 = arith.mulf %205, %209 : vector<16x32xf32>
    %211 = vector.broadcast %191 : vector<1x32xf32> to vector<16x32xf32>
    %212 = arith.mulf %210, %211 : vector<16x32xf32>
    %213 = vector.broadcast %192 : vector<1x32xf32> to vector<16x32xf32>
    %214 = arith.addf %212, %213 : vector<16x32xf32>
    %c1_81 = arith.constant 1 : index
    %c0_82 = arith.constant 0 : index
    %c0_83 = arith.constant 0 : index
    %215 = vector.load %arg5[%c1_81, %c0_82, %c0_83] : memref<2x32x96xf32, #tpu.memory_space<vmem>>, vector<1x32x96xf32>
    %216 = vector.shape_cast %215 : vector<1x32x96xf32> to vector<32x96xf32>
    %cst_84 = arith.constant dense<0.000000e+00> : vector<16x96xf32>
    %217 = tpu.matmul %214, %216, %cst_84 {dimension_numbers = #tpu.dot_dimension_numbers<[1], [0], [0], [1], [0, 0, 1, 1], [], []>} : vector<16x32xf32>, vector<32x96xf32>, vector<16x96xf32> -> vector<16x96xf32>
    %c1_85 = arith.constant 1 : index
    %c0_86 = arith.constant 0 : index
    %c0_87 = arith.constant 0 : index
    %218 = vector.load %arg6[%c1_85, %c0_86, %c0_87] : memref<2x1x96xf32, #tpu.memory_space<vmem>>, vector<1x1x96xf32>
    %219 = vector.shape_cast %218 : vector<1x1x96xf32> to vector<1x96xf32>
    %220 = vector.broadcast %219 : vector<1x96xf32> to vector<16x96xf32>
    %221 = arith.addf %217, %220 : vector<16x96xf32>
    %222 = vector.extract_strided_slice %221 {offsets = [0, 0], sizes = [8, 16], strides = [1, 1]} : vector<16x96xf32> to vector<8x16xf32>
    %223 = vector.extract_strided_slice %221 {offsets = [0, 32], sizes = [8, 16], strides = [1, 1]} : vector<16x96xf32> to vector<8x16xf32>
    %224 = vector.extract_strided_slice %221 {offsets = [0, 64], sizes = [8, 16], strides = [1, 1]} : vector<16x96xf32> to vector<8x16xf32>
    %cst_88 = arith.constant dense<0.000000e+00> : vector<8x8xf32>
    %225 = tpu.matmul %222, %223, %cst_88 {dimension_numbers = #tpu.dot_dimension_numbers<[1], [1], [0], [0], [0, 0, 1, 0], [], []>} : vector<8x16xf32>, vector<8x16xf32>, vector<8x8xf32> -> vector<8x8xf32>
    %cst_89 = arith.constant 2.500000e-01 : f32
    %226 = vector.broadcast %cst_89 : f32 to vector<8x8xf32>
    %227 = arith.mulf %225, %226 : vector<8x8xf32>
    %228 = vector.extract_strided_slice %16 {offsets = [0, 0], sizes = [1, 8], strides = [1, 1]} : vector<2x8xf32> to vector<1x8xf32>
    %229 = vector.broadcast %228 : vector<1x8xf32> to vector<8x8xf32>
    %230 = arith.addf %227, %229 : vector<8x8xf32>
    %cst_90 = arith.constant dense<0xFF800000> : vector<8xf32>
    %231 = vector.multi_reduction <maximumf>, %230, %cst_90 [1] : vector<8x8xf32> to vector<8xf32>
    %232 = vector.shape_cast %231 : vector<8xf32> to vector<8x1xf32>
    %233 = vector.broadcast %232 : vector<8x1xf32> to vector<8x8xf32>
    %234 = arith.subf %230, %233 : vector<8x8xf32>
    %235 = math.exp %234 : vector<8x8xf32>
    %cst_91 = arith.constant dense<0.000000e+00> : vector<8xf32>
    %236 = vector.multi_reduction <add>, %235, %cst_91 [1] : vector<8x8xf32> to vector<8xf32>
    %237 = vector.shape_cast %236 : vector<8xf32> to vector<8x1xf32>
    %238 = vector.broadcast %237 : vector<8x1xf32> to vector<8x8xf32>
    %239 = arith.divf %235, %238 : vector<8x8xf32>
    %cst_92 = arith.constant dense<0.000000e+00> : vector<8x16xf32>
    %240 = tpu.matmul %239, %224, %cst_92 {dimension_numbers = #tpu.dot_dimension_numbers<[1], [0], [0], [1], [0, 0, 1, 1], [], []>} : vector<8x8xf32>, vector<8x16xf32>, vector<8x16xf32> -> vector<8x16xf32>
    %241 = vector.extract_strided_slice %221 {offsets = [0, 16], sizes = [8, 16], strides = [1, 1]} : vector<16x96xf32> to vector<8x16xf32>
    %242 = vector.extract_strided_slice %221 {offsets = [0, 48], sizes = [8, 16], strides = [1, 1]} : vector<16x96xf32> to vector<8x16xf32>
    %243 = vector.extract_strided_slice %221 {offsets = [0, 80], sizes = [8, 16], strides = [1, 1]} : vector<16x96xf32> to vector<8x16xf32>
    %cst_93 = arith.constant dense<0.000000e+00> : vector<8x8xf32>
    %244 = tpu.matmul %241, %242, %cst_93 {dimension_numbers = #tpu.dot_dimension_numbers<[1], [1], [0], [0], [0, 0, 1, 0], [], []>} : vector<8x16xf32>, vector<8x16xf32>, vector<8x8xf32> -> vector<8x8xf32>
    %cst_94 = arith.constant 2.500000e-01 : f32
    %245 = vector.broadcast %cst_94 : f32 to vector<8x8xf32>
    %246 = arith.mulf %244, %245 : vector<8x8xf32>
    %247 = vector.extract_strided_slice %16 {offsets = [0, 0], sizes = [1, 8], strides = [1, 1]} : vector<2x8xf32> to vector<1x8xf32>
    %248 = vector.broadcast %247 : vector<1x8xf32> to vector<8x8xf32>
    %249 = arith.addf %246, %248 : vector<8x8xf32>
    %cst_95 = arith.constant dense<0xFF800000> : vector<8xf32>
    %250 = vector.multi_reduction <maximumf>, %249, %cst_95 [1] : vector<8x8xf32> to vector<8xf32>
    %251 = vector.shape_cast %250 : vector<8xf32> to vector<8x1xf32>
    %252 = vector.broadcast %251 : vector<8x1xf32> to vector<8x8xf32>
    %253 = arith.subf %249, %252 : vector<8x8xf32>
    %254 = math.exp %253 : vector<8x8xf32>
    %cst_96 = arith.constant dense<0.000000e+00> : vector<8xf32>
    %255 = vector.multi_reduction <add>, %254, %cst_96 [1] : vector<8x8xf32> to vector<8xf32>
    %256 = vector.shape_cast %255 : vector<8xf32> to vector<8x1xf32>
    %257 = vector.broadcast %256 : vector<8x1xf32> to vector<8x8xf32>
    %258 = arith.divf %254, %257 : vector<8x8xf32>
    %cst_97 = arith.constant dense<0.000000e+00> : vector<8x16xf32>
    %259 = tpu.matmul %258, %243, %cst_97 {dimension_numbers = #tpu.dot_dimension_numbers<[1], [0], [0], [1], [0, 0, 1, 1], [], []>} : vector<8x8xf32>, vector<8x16xf32>, vector<8x16xf32> -> vector<8x16xf32>
    %260 = tpu.concatenate %240, %259 in 1 : vector<8x16xf32>, vector<8x16xf32> -> vector<8x32xf32>
    %261 = vector.extract_strided_slice %221 {offsets = [8, 0], sizes = [8, 16], strides = [1, 1]} : vector<16x96xf32> to vector<8x16xf32>
    %262 = vector.extract_strided_slice %221 {offsets = [8, 32], sizes = [8, 16], strides = [1, 1]} : vector<16x96xf32> to vector<8x16xf32>
    %263 = vector.extract_strided_slice %221 {offsets = [8, 64], sizes = [8, 16], strides = [1, 1]} : vector<16x96xf32> to vector<8x16xf32>
    %cst_98 = arith.constant dense<0.000000e+00> : vector<8x8xf32>
    %264 = tpu.matmul %261, %262, %cst_98 {dimension_numbers = #tpu.dot_dimension_numbers<[1], [1], [0], [0], [0, 0, 1, 0], [], []>} : vector<8x16xf32>, vector<8x16xf32>, vector<8x8xf32> -> vector<8x8xf32>
    %cst_99 = arith.constant 2.500000e-01 : f32
    %265 = vector.broadcast %cst_99 : f32 to vector<8x8xf32>
    %266 = arith.mulf %264, %265 : vector<8x8xf32>
    %267 = vector.extract_strided_slice %16 {offsets = [1, 0], sizes = [1, 8], strides = [1, 1]} : vector<2x8xf32> to vector<1x8xf32>
    %268 = vector.broadcast %267 : vector<1x8xf32> to vector<8x8xf32>
    %269 = arith.addf %266, %268 : vector<8x8xf32>
    %cst_100 = arith.constant dense<0xFF800000> : vector<8xf32>
    %270 = vector.multi_reduction <maximumf>, %269, %cst_100 [1] : vector<8x8xf32> to vector<8xf32>
    %271 = vector.shape_cast %270 : vector<8xf32> to vector<8x1xf32>
    %272 = vector.broadcast %271 : vector<8x1xf32> to vector<8x8xf32>
    %273 = arith.subf %269, %272 : vector<8x8xf32>
    %274 = math.exp %273 : vector<8x8xf32>
    %cst_101 = arith.constant dense<0.000000e+00> : vector<8xf32>
    %275 = vector.multi_reduction <add>, %274, %cst_101 [1] : vector<8x8xf32> to vector<8xf32>
    %276 = vector.shape_cast %275 : vector<8xf32> to vector<8x1xf32>
    %277 = vector.broadcast %276 : vector<8x1xf32> to vector<8x8xf32>
    %278 = arith.divf %274, %277 : vector<8x8xf32>
    %cst_102 = arith.constant dense<0.000000e+00> : vector<8x16xf32>
    %279 = tpu.matmul %278, %263, %cst_102 {dimension_numbers = #tpu.dot_dimension_numbers<[1], [0], [0], [1], [0, 0, 1, 1], [], []>} : vector<8x8xf32>, vector<8x16xf32>, vector<8x16xf32> -> vector<8x16xf32>
    %280 = vector.extract_strided_slice %221 {offsets = [8, 16], sizes = [8, 16], strides = [1, 1]} : vector<16x96xf32> to vector<8x16xf32>
    %281 = vector.extract_strided_slice %221 {offsets = [8, 48], sizes = [8, 16], strides = [1, 1]} : vector<16x96xf32> to vector<8x16xf32>
    %282 = vector.extract_strided_slice %221 {offsets = [8, 80], sizes = [8, 16], strides = [1, 1]} : vector<16x96xf32> to vector<8x16xf32>
    %cst_103 = arith.constant dense<0.000000e+00> : vector<8x8xf32>
    %283 = tpu.matmul %280, %281, %cst_103 {dimension_numbers = #tpu.dot_dimension_numbers<[1], [1], [0], [0], [0, 0, 1, 0], [], []>} : vector<8x16xf32>, vector<8x16xf32>, vector<8x8xf32> -> vector<8x8xf32>
    %cst_104 = arith.constant 2.500000e-01 : f32
    %284 = vector.broadcast %cst_104 : f32 to vector<8x8xf32>
    %285 = arith.mulf %283, %284 : vector<8x8xf32>
    %286 = vector.extract_strided_slice %16 {offsets = [1, 0], sizes = [1, 8], strides = [1, 1]} : vector<2x8xf32> to vector<1x8xf32>
    %287 = vector.broadcast %286 : vector<1x8xf32> to vector<8x8xf32>
    %288 = arith.addf %285, %287 : vector<8x8xf32>
    %cst_105 = arith.constant dense<0xFF800000> : vector<8xf32>
    %289 = vector.multi_reduction <maximumf>, %288, %cst_105 [1] : vector<8x8xf32> to vector<8xf32>
    %290 = vector.shape_cast %289 : vector<8xf32> to vector<8x1xf32>
    %291 = vector.broadcast %290 : vector<8x1xf32> to vector<8x8xf32>
    %292 = arith.subf %288, %291 : vector<8x8xf32>
    %293 = math.exp %292 : vector<8x8xf32>
    %cst_106 = arith.constant dense<0.000000e+00> : vector<8xf32>
    %294 = vector.multi_reduction <add>, %293, %cst_106 [1] : vector<8x8xf32> to vector<8xf32>
    %295 = vector.shape_cast %294 : vector<8xf32> to vector<8x1xf32>
    %296 = vector.broadcast %295 : vector<8x1xf32> to vector<8x8xf32>
    %297 = arith.divf %293, %296 : vector<8x8xf32>
    %cst_107 = arith.constant dense<0.000000e+00> : vector<8x16xf32>
    %298 = tpu.matmul %297, %282, %cst_107 {dimension_numbers = #tpu.dot_dimension_numbers<[1], [0], [0], [1], [0, 0, 1, 1], [], []>} : vector<8x8xf32>, vector<8x16xf32>, vector<8x16xf32> -> vector<8x16xf32>
    %299 = tpu.concatenate %279, %298 in 1 : vector<8x16xf32>, vector<8x16xf32> -> vector<8x32xf32>
    %300 = tpu.concatenate %260, %299 in 0 : vector<8x32xf32>, vector<8x32xf32> -> vector<16x32xf32>
    %c1_108 = arith.constant 1 : index
    %c0_109 = arith.constant 0 : index
    %c0_110 = arith.constant 0 : index
    %301 = vector.load %arg7[%c1_108, %c0_109, %c0_110] : memref<2x32x32xf32, #tpu.memory_space<vmem>>, vector<1x32x32xf32>
    %302 = vector.shape_cast %301 : vector<1x32x32xf32> to vector<32x32xf32>
    %cst_111 = arith.constant dense<0.000000e+00> : vector<16x32xf32>
    %303 = tpu.matmul %300, %302, %cst_111 {dimension_numbers = #tpu.dot_dimension_numbers<[1], [0], [0], [1], [0, 0, 1, 1], [], []>} : vector<16x32xf32>, vector<32x32xf32>, vector<16x32xf32> -> vector<16x32xf32>
    %304 = arith.addf %188, %303 : vector<16x32xf32>
    %c1_112 = arith.constant 1 : index
    %c0_113 = arith.constant 0 : index
    %c0_114 = arith.constant 0 : index
    %305 = vector.load %arg8[%c1_112, %c0_113, %c0_114] : memref<2x1x32xf32, #tpu.memory_space<vmem>>, vector<1x1x32xf32>
    %306 = vector.shape_cast %305 : vector<1x1x32xf32> to vector<1x32xf32>
    %307 = vector.broadcast %306 : vector<1x32xf32> to vector<16x32xf32>
    %308 = arith.addf %304, %307 : vector<16x32xf32>
    %309 = vector.extract_strided_slice %190 {offsets = [2, 0], sizes = [1, 32], strides = [1, 1]} : vector<4x32xf32> to vector<1x32xf32>
    %310 = vector.extract_strided_slice %190 {offsets = [3, 0], sizes = [1, 32], strides = [1, 1]} : vector<4x32xf32> to vector<1x32xf32>
    %cst_115 = arith.constant dense<0.000000e+00> : vector<16xf32>
    %311 = vector.multi_reduction <add>, %308, %cst_115 [1] : vector<16x32xf32> to vector<16xf32>
    %312 = vector.shape_cast %311 : vector<16xf32> to vector<16x1xf32>
    %cst_116 = arith.constant 3.200000e+01 : f32
    %313 = vector.broadcast %cst_116 : f32 to vector<16x1xf32>
    %314 = arith.divf %312, %313 : vector<16x1xf32>
    %315 = vector.broadcast %314 : vector<16x1xf32> to vector<16x32xf32>
    %316 = arith.subf %308, %315 : vector<16x32xf32>
    %317 = arith.mulf %316, %316 : vector<16x32xf32>
    %cst_117 = arith.constant dense<0.000000e+00> : vector<16xf32>
    %318 = vector.multi_reduction <add>, %317, %cst_117 [1] : vector<16x32xf32> to vector<16xf32>
    %319 = vector.shape_cast %318 : vector<16xf32> to vector<16x1xf32>
    %cst_118 = arith.constant 3.200000e+01 : f32
    %320 = vector.broadcast %cst_118 : f32 to vector<16x1xf32>
    %321 = arith.divf %319, %320 : vector<16x1xf32>
    %322 = vector.broadcast %314 : vector<16x1xf32> to vector<16x32xf32>
    %323 = arith.subf %308, %322 : vector<16x32xf32>
    %cst_119 = arith.constant 9.99999974E-6 : f32
    %324 = vector.broadcast %cst_119 : f32 to vector<16x1xf32>
    %325 = arith.addf %321, %324 : vector<16x1xf32>
    %326 = math.rsqrt %325 : vector<16x1xf32>
    %327 = vector.broadcast %326 : vector<16x1xf32> to vector<16x32xf32>
    %328 = arith.mulf %323, %327 : vector<16x32xf32>
    %329 = vector.broadcast %309 : vector<1x32xf32> to vector<16x32xf32>
    %330 = arith.mulf %328, %329 : vector<16x32xf32>
    %331 = vector.broadcast %310 : vector<1x32xf32> to vector<16x32xf32>
    %332 = arith.addf %330, %331 : vector<16x32xf32>
    %c1_120 = arith.constant 1 : index
    %c0_121 = arith.constant 0 : index
    %c0_122 = arith.constant 0 : index
    %333 = vector.load %arg9[%c1_120, %c0_121, %c0_122] : memref<2x32x128xf32, #tpu.memory_space<vmem>>, vector<1x32x128xf32>
    %334 = vector.shape_cast %333 : vector<1x32x128xf32> to vector<32x128xf32>
    %cst_123 = arith.constant dense<0.000000e+00> : vector<16x128xf32>
    %335 = tpu.matmul %332, %334, %cst_123 {dimension_numbers = #tpu.dot_dimension_numbers<[1], [0], [0], [1], [0, 0, 1, 1], [], []>} : vector<16x32xf32>, vector<32x128xf32>, vector<16x128xf32> -> vector<16x128xf32>
    %c1_124 = arith.constant 1 : index
    %c0_125 = arith.constant 0 : index
    %c0_126 = arith.constant 0 : index
    %336 = vector.load %arg10[%c1_124, %c0_125, %c0_126] : memref<2x1x128xf32, #tpu.memory_space<vmem>>, vector<1x1x128xf32>
    %337 = vector.shape_cast %336 : vector<1x1x128xf32> to vector<1x128xf32>
    %338 = vector.broadcast %337 : vector<1x128xf32> to vector<16x128xf32>
    %339 = arith.addf %335, %338 : vector<16x128xf32>
    %340 = arith.mulf %339, %339 : vector<16x128xf32>
    %341 = arith.mulf %339, %340 : vector<16x128xf32>
    %cst_127 = arith.constant 4.471500e-02 : f32
    %342 = vector.broadcast %cst_127 : f32 to vector<16x128xf32>
    %343 = arith.mulf %342, %341 : vector<16x128xf32>
    %344 = arith.addf %339, %343 : vector<16x128xf32>
    %cst_128 = arith.constant 0.797884583 : f32
    %345 = vector.broadcast %cst_128 : f32 to vector<16x128xf32>
    %346 = arith.mulf %345, %344 : vector<16x128xf32>
    %347 = math.tanh %346 : vector<16x128xf32>
    %cst_129 = arith.constant 1.000000e+00 : f32
    %348 = vector.broadcast %cst_129 : f32 to vector<16x128xf32>
    %349 = arith.addf %348, %347 : vector<16x128xf32>
    %cst_130 = arith.constant 5.000000e-01 : f32
    %350 = vector.broadcast %cst_130 : f32 to vector<16x128xf32>
    %351 = arith.mulf %350, %349 : vector<16x128xf32>
    %352 = arith.mulf %339, %351 : vector<16x128xf32>
    %c1_131 = arith.constant 1 : index
    %c0_132 = arith.constant 0 : index
    %c0_133 = arith.constant 0 : index
    %353 = vector.load %arg11[%c1_131, %c0_132, %c0_133] : memref<2x128x32xf32, #tpu.memory_space<vmem>>, vector<1x128x32xf32>
    %354 = vector.shape_cast %353 : vector<1x128x32xf32> to vector<128x32xf32>
    %cst_134 = arith.constant dense<0.000000e+00> : vector<16x32xf32>
    %355 = tpu.matmul %352, %354, %cst_134 {dimension_numbers = #tpu.dot_dimension_numbers<[1], [0], [0], [1], [0, 0, 1, 1], [], []>} : vector<16x128xf32>, vector<128x32xf32>, vector<16x32xf32> -> vector<16x32xf32>
    %356 = arith.addf %308, %355 : vector<16x32xf32>
    %c1_135 = arith.constant 1 : index
    %c0_136 = arith.constant 0 : index
    %c0_137 = arith.constant 0 : index
    %357 = vector.load %arg12[%c1_135, %c0_136, %c0_137] : memref<2x1x32xf32, #tpu.memory_space<vmem>>, vector<1x1x32xf32>
    %358 = vector.shape_cast %357 : vector<1x1x32xf32> to vector<1x32xf32>
    %359 = vector.broadcast %358 : vector<1x32xf32> to vector<16x32xf32>
    %360 = arith.addf %356, %359 : vector<16x32xf32>
    %c0_138 = arith.constant 0 : index
    %c0_139 = arith.constant 0 : index
    %361 = vector.load %arg14[%c0_138, %c0_139] : memref<2x32xf32, #tpu.memory_space<vmem>>, vector<2x32xf32>
    %362 = vector.extract_strided_slice %361 {offsets = [0, 0], sizes = [1, 32], strides = [1, 1]} : vector<2x32xf32> to vector<1x32xf32>
    %363 = vector.extract_strided_slice %361 {offsets = [1, 0], sizes = [1, 32], strides = [1, 1]} : vector<2x32xf32> to vector<1x32xf32>
    %cst_140 = arith.constant dense<0.000000e+00> : vector<16xf32>
    %364 = vector.multi_reduction <add>, %360, %cst_140 [1] : vector<16x32xf32> to vector<16xf32>
    %365 = vector.shape_cast %364 : vector<16xf32> to vector<16x1xf32>
    %cst_141 = arith.constant 3.200000e+01 : f32
    %366 = vector.broadcast %cst_141 : f32 to vector<16x1xf32>
    %367 = arith.divf %365, %366 : vector<16x1xf32>
    %368 = vector.broadcast %367 : vector<16x1xf32> to vector<16x32xf32>
    %369 = arith.subf %360, %368 : vector<16x32xf32>
    %370 = arith.mulf %369, %369 : vector<16x32xf32>
    %cst_142 = arith.constant dense<0.000000e+00> : vector<16xf32>
    %371 = vector.multi_reduction <add>, %370, %cst_142 [1] : vector<16x32xf32> to vector<16xf32>
    %372 = vector.shape_cast %371 : vector<16xf32> to vector<16x1xf32>
    %cst_143 = arith.constant 3.200000e+01 : f32
    %373 = vector.broadcast %cst_143 : f32 to vector<16x1xf32>
    %374 = arith.divf %372, %373 : vector<16x1xf32>
    %375 = vector.broadcast %367 : vector<16x1xf32> to vector<16x32xf32>
    %376 = arith.subf %360, %375 : vector<16x32xf32>
    %cst_144 = arith.constant 9.99999974E-6 : f32
    %377 = vector.broadcast %cst_144 : f32 to vector<16x1xf32>
    %378 = arith.addf %374, %377 : vector<16x1xf32>
    %379 = math.rsqrt %378 : vector<16x1xf32>
    %380 = vector.broadcast %379 : vector<16x1xf32> to vector<16x32xf32>
    %381 = arith.mulf %376, %380 : vector<16x32xf32>
    %382 = vector.broadcast %362 : vector<1x32xf32> to vector<16x32xf32>
    %383 = arith.mulf %381, %382 : vector<16x32xf32>
    %384 = vector.broadcast %363 : vector<1x32xf32> to vector<16x32xf32>
    %385 = arith.addf %383, %384 : vector<16x32xf32>
    %cst_145 = arith.constant dense<0> : vector<2xi32>
    %386 = vector.multi_reduction <add>, %1, %cst_145 [1] : vector<2x8xi32> to vector<2xi32>
    %387 = vector.shape_cast %386 : vector<2xi32> to vector<2x1xi32>
    %c1_i32 = arith.constant 1 : i32
    %388 = vector.broadcast %c1_i32 : i32 to vector<2x1xi32>
    %389 = arith.subi %387, %388 : vector<2x1xi32>
    %390 = tpu.iota {dimensions = array<i32: 0>} : vector<2x1xi32>
    %c8_i32 = arith.constant 8 : i32
    %391 = vector.broadcast %c8_i32 : i32 to vector<2x1xi32>
    %392 = arith.muli %390, %391 : vector<2x1xi32>
    %393 = arith.addi %392, %389 : vector<2x1xi32>
    %394 = tpu.iota {dimensions = array<i32: 1>} : vector<2x16xi32>
    %395 = vector.broadcast %393 : vector<2x1xi32> to vector<2x16xi32>
    %396 = arith.cmpi eq, %394, %395 : vector<2x16xi32>
    %397 = arith.extui %396 : vector<2x16xi1> to vector<2x16xi32>
    %398 = arith.sitofp %397 : vector<2x16xi32> to vector<2x16xf32>
    %cst_146 = arith.constant dense<0.000000e+00> : vector<2x32xf32>
    %399 = tpu.matmul %398, %385, %cst_146 {dimension_numbers = #tpu.dot_dimension_numbers<[1], [0], [0], [1], [0, 0, 1, 1], [], []>} : vector<2x16xf32>, vector<16x32xf32>, vector<2x32xf32> -> vector<2x32xf32>
    %c0_147 = arith.constant 0 : index
    %c0_148 = arith.constant 0 : index
    %400 = vector.load %arg15[%c0_147, %c0_148] : memref<32x16xf32, #tpu.memory_space<vmem>>, vector<32x16xf32>
    %cst_149 = arith.constant dense<0.000000e+00> : vector<2x16xf32>
    %401 = tpu.matmul %399, %400, %cst_149 {dimension_numbers = #tpu.dot_dimension_numbers<[1], [0], [0], [1], [0, 0, 1, 1], [], []>} : vector<2x32xf32>, vector<32x16xf32>, vector<2x16xf32> -> vector<2x16xf32>
    %c0_150 = arith.constant 0 : index
    %c0_151 = arith.constant 0 : index
    %402 = vector.load %arg16[%c0_150, %c0_151] : memref<2x16xf32, #tpu.memory_space<vmem>>, vector<2x16xf32>
    tpu.vector_store %arg16[%c0_150, %c0_151], %401 {strides = array<i32>} : memref<2x16xf32, #tpu.memory_space<vmem>>, vector<2x16xf32>,
    return
  }
  func.func @transform_0(%arg0: i32) -> (i32, i32) {
    %c0_i32 = arith.constant 0 : i32
    %c0_i32_0 = arith.constant 0 : i32
    %c0_i32_1 = arith.constant 0 : i32
    return %c0_i32, %c0_i32_0 : i32, i32
  }
  func.func @transform_1(%arg0: i32) -> (i32, i32) {
    %c0_i32 = arith.constant 0 : i32
    %c0_i32_0 = arith.constant 0 : i32
    %c0_i32_1 = arith.constant 0 : i32
    return %c0_i32, %c0_i32_0 : i32, i32
  }
  func.func @transform_2(%arg0: i32) -> (i32, i32) {
    %c0_i32 = arith.constant 0 : i32
    %c0_i32_0 = arith.constant 0 : i32
    %c0_i32_1 = arith.constant 0 : i32
    return %c0_i32, %c0_i32_0 : i32, i32
  }
  func.func @transform_3(%arg0: i32) -> (i32, i32) {
    %c0_i32 = arith.constant 0 : i32
    %c0_i32_0 = arith.constant 0 : i32
    %c0_i32_1 = arith.constant 0 : i32
    return %c0_i32, %c0_i32_0 : i32, i32
  }
  func.func @transform_4(%arg0: i32) -> (i32, i32, i32) {
    %c0_i32 = arith.constant 0 : i32
    %c0_i32_0 = arith.constant 0 : i32
    %c0_i32_1 = arith.constant 0 : i32
    %c0_i32_2 = arith.constant 0 : i32
    return %c0_i32, %c0_i32_0, %c0_i32_1 : i32, i32, i32
  }
  func.func @transform_5(%arg0: i32) -> (i32, i32, i32) {
    %c0_i32 = arith.constant 0 : i32
    %c0_i32_0 = arith.constant 0 : i32
    %c0_i32_1 = arith.constant 0 : i32
    %c0_i32_2 = arith.constant 0 : i32
    return %c0_i32, %c0_i32_0, %c0_i32_1 : i32, i32, i32
  }
  func.func @transform_6(%arg0: i32) -> (i32, i32, i32) {
    %c0_i32 = arith.constant 0 : i32
    %c0_i32_0 = arith.constant 0 : i32
    %c0_i32_1 = arith.constant 0 : i32
    %c0_i32_2 = arith.constant 0 : i32
    return %c0_i32, %c0_i32_0, %c0_i32_1 : i32, i32, i32
  }
  func.func @transform_7(%arg0: i32) -> (i32, i32, i32) {
    %c0_i32 = arith.constant 0 : i32
    %c0_i32_0 = arith.constant 0 : i32
    %c0_i32_1 = arith.constant 0 : i32
    %c0_i32_2 = arith.constant 0 : i32
    return %c0_i32, %c0_i32_0, %c0_i32_1 : i32, i32, i32
  }
  func.func @transform_8(%arg0: i32) -> (i32, i32, i32) {
    %c0_i32 = arith.constant 0 : i32
    %c0_i32_0 = arith.constant 0 : i32
    %c0_i32_1 = arith.constant 0 : i32
    %c0_i32_2 = arith.constant 0 : i32
    return %c0_i32, %c0_i32_0, %c0_i32_1 : i32, i32, i32
  }
  func.func @transform_9(%arg0: i32) -> (i32, i32, i32) {
    %c0_i32 = arith.constant 0 : i32
    %c0_i32_0 = arith.constant 0 : i32
    %c0_i32_1 = arith.constant 0 : i32
    %c0_i32_2 = arith.constant 0 : i32
    return %c0_i32, %c0_i32_0, %c0_i32_1 : i32, i32, i32
  }
  func.func @transform_10(%arg0: i32) -> (i32, i32, i32) {
    %c0_i32 = arith.constant 0 : i32
    %c0_i32_0 = arith.constant 0 : i32
    %c0_i32_1 = arith.constant 0 : i32
    %c0_i32_2 = arith.constant 0 : i32
    return %c0_i32, %c0_i32_0, %c0_i32_1 : i32, i32, i32
  }
  func.func @transform_11(%arg0: i32) -> (i32, i32, i32) {
    %c0_i32 = arith.constant 0 : i32
    %c0_i32_0 = arith.constant 0 : i32
    %c0_i32_1 = arith.constant 0 : i32
    %c0_i32_2 = arith.constant 0 : i32
    return %c0_i32, %c0_i32_0, %c0_i32_1 : i32, i32, i32
  }
  func.func @transform_12(%arg0: i32) -> (i32, i32, i32) {
    %c0_i32 = arith.constant 0 : i32
    %c0_i32_0 = arith.constant 0 : i32
    %c0_i32_1 = arith.constant 0 : i32
    %c0_i32_2 = arith.constant 0 : i32
    return %c0_i32, %c0_i32_0, %c0_i32_1 : i32, i32, i32
  }
  func.func @transform_13(%arg0: i32) -> (i32, i32) {
    %c0_i32 = arith.constant 0 : i32
    %c0_i32_0 = arith.constant 0 : i32
    %c0_i32_1 = arith.constant 0 : i32
    return %c0_i32, %c0_i32_0 : i32, i32
  }
  func.func @transform_14(%arg0: i32) -> (i32, i32) {
    %c0_i32 = arith.constant 0 : i32
    %c0_i32_0 = arith.constant 0 : i32
    %c0_i32_1 = arith.constant 0 : i32
    return %c0_i32, %c0_i32_0 : i32, i32
  }
  func.func @transform_15(%arg0: i32) -> (i32, i32) {
    %c0_i32 = arith.constant 0 : i32
    %c0_i32_0 = arith.constant 0 : i32
    %c0_i32_1 = arith.constant 0 : i32
    return %c0_i32, %c0_i32_0 : i32, i32
  }
}

</mosaic_0001>

<llo_original>
// kernel: tpu_custom_call.1
$region0: #{tpu_custom_call.1}
  #allocation0 [shape = 'u32[]', space=smem, size = 0x4, offset = 0x4, fixed_abs, tag = 'smem constant byte address 0x4 - core index']
  #allocation1 [shape = 'u32[144,128]{1,0:T(1,128)}', space=vmem, size = 0x12000, scoped, tag = 'internal scratch']
  %s0 = inlined_call_operand.vmem [shape: s32[16,1], index: 0, kind: input, shape index: {}]
  %s1 = inlined_call_operand.vmem [shape: s32[2,8], index: 1, kind: input, shape index: {}]
  %s2 = inlined_call_operand.vmem [shape: f32[64,32], index: 2, kind: input, shape index: {}]
  %s3 = inlined_call_operand.vmem [shape: f32[8,32], index: 3, kind: input, shape index: {}]
  %s4 = inlined_call_operand.vmem [shape: f32[2,32,96], index: 4, kind: input, shape index: {}]
  %s5 = inlined_call_operand.vmem [shape: f32[2,1,96], index: 5, kind: input, shape index: {}]
  %s6 = inlined_call_operand.vmem [shape: f32[2,32,32], index: 6, kind: input, shape index: {}]
  %s7 = inlined_call_operand.vmem [shape: f32[2,1,32], index: 7, kind: input, shape index: {}]
  %s8 = inlined_call_operand.vmem [shape: f32[2,32,128], index: 8, kind: input, shape index: {}]
  %s9 = inlined_call_operand.vmem [shape: f32[2,1,128], index: 9, kind: input, shape index: {}]
  %s10 = inlined_call_operand.vmem [shape: f32[2,128,32], index: 10, kind: input, shape index: {}]
  %s11 = inlined_call_operand.vmem [shape: f32[2,1,32], index: 11, kind: input, shape index: {}]
  %s12 = inlined_call_operand.vmem [shape: f32[2,4,32], index: 12, kind: input, shape index: {}]
  %s13 = inlined_call_operand.vmem [shape: f32[2,32], index: 13, kind: input, shape index: {}]
  %s14 = inlined_call_operand.vmem [shape: f32[32,16], index: 14, kind: input, shape index: {}]
  %s15 = inlined_call_operand.hbm [shape: f32[2,16], index: 15, kind: output, shape index: {}]
  %s16 = sld [smem:[#allocation0]]
  $region70: #{tpu_custom_call.1} parent=0
    _
  %s18 = ssub.s32 1, %s16
  %s19 = scalar_select 0, %s18, %s16
  $region1: #{tpu_custom_call.1} parent=0
    #allocation2 [shape = 'u8[1024]{0}', space=vmem, size = 0x400, scoped, tag = 'output window, operand 0, single buffered']
    #allocation3 [shape = 's32[1]{0}', space=sflag, size = 0x4, scoped, tag = 'scoped memory for tpu_custom_call.1']
    %20 = vsyncpa [#allocation3], 0
    // Predicated region
    $region2: #{tpu_custom_call.1} parent=1 // pred_check
      _
    $region3: #{tpu_custom_call.1} parent=1 // pred_check_branch
      %22 = sbr.rel (0) target = $region5
    $region4: #{tpu_custom_call.1} parent=1 // pred_region
      _
    $region5: #{tpu_custom_call.1} parent=1 // pred_fallthru
      _
    // Predicated region
    $region6: #{tpu_custom_call.1} parent=1 // pred_check
      _
    $region7: #{tpu_custom_call.1} parent=1 // pred_check_branch
      %24 = sbr.rel (0) target = $region9
    $region8: #{tpu_custom_call.1} parent=1 // pred_region
      _
    $region9: #{tpu_custom_call.1} parent=1 // pred_fallthru
      _
    // Predicated region
    $region10: #{tpu_custom_call.1} parent=1 // pred_check
      _
    $region11: #{tpu_custom_call.1} parent=1 // pred_check_branch
      %26 = sbr.rel (0) target = $region13
    $region12: #{tpu_custom_call.1} parent=1 // pred_region
      _
    $region13: #{tpu_custom_call.1} parent=1 // pred_fallthru
      _
    // Predicated region
    $region14: #{tpu_custom_call.1} parent=1 // pred_check
      _
    $region15: #{tpu_custom_call.1} parent=1 // pred_check_branch
      %28 = sbr.rel (0) target = $region17
    $region16: #{tpu_custom_call.1} parent=1 // pred_region
      _
    $region17: #{tpu_custom_call.1} parent=1 // pred_fallthru
      _
    // Predicated region
    $region18: #{tpu_custom_call.1} parent=1 // pred_check
      _
    $region19: #{tpu_custom_call.1} parent=1 // pred_check_branch
      %30 = sbr.rel (0) target = $region21
    $region20: #{tpu_custom_call.1} parent=1 // pred_region
      _
    $region21: #{tpu_custom_call.1} parent=1 // pred_fallthru
      _
    // Predicated region
    $region22: #{tpu_custom_call.1} parent=1 // pred_check
      _
    $region23: #{tpu_custom_call.1} parent=1 // pred_check_branch
      %32 = sbr.rel (0) target = $region25
    $region24: #{tpu_custom_call.1} parent=1 // pred_region
      _
    $region25: #{tpu_custom_call.1} parent=1 // pred_fallthru
      _
    // Predicated region
    $region26: #{tpu_custom_call.1} parent=1 // pred_check
      _
    $region27: #{tpu_custom_call.1} parent=1 // pred_check_branch
      %34 = sbr.rel (0) target = $region29
    $region28: #{tpu_custom_call.1} parent=1 // pred_region
      _
    $region29: #{tpu_custom_call.1} parent=1 // pred_fallthru
      _
    // Predicated region
    $region30: #{tpu_custom_call.1} parent=1 // pred_check
      _
    $region31: #{tpu_custom_call.1} parent=1 // pred_check_branch
      %36 = sbr.rel (0) target = $region33
    $region32: #{tpu_custom_call.1} parent=1 // pred_region
      _
    $region33: #{tpu_custom_call.1} parent=1 // pred_fallthru
      _
    // Predicated region
    $region34: #{tpu_custom_call.1} parent=1 // pred_check
      _
    $region35: #{tpu_custom_call.1} parent=1 // pred_check_branch
      %38 = sbr.rel (0) target = $region37
    $region36: #{tpu_custom_call.1} parent=1 // pred_region
      _
    $region37: #{tpu_custom_call.1} parent=1 // pred_fallthru
      _
    // Predicated region
    $region38: #{tpu_custom_call.1} parent=1 // pred_check
      _
    $region39: #{tpu_custom_call.1} parent=1 // pred_check_branch
      %40 = sbr.rel (0) target = $region41
    $region40: #{tpu_custom_call.1} parent=1 // pred_region
      _
    $region41: #{tpu_custom_call.1} parent=1 // pred_fallthru
      _
    // Predicated region
    $region42: #{tpu_custom_call.1} parent=1 // pred_check
      _
    $region43: #{tpu_custom_call.1} parent=1 // pred_check_branch
      %42 = sbr.rel (0) target = $region45
    $region44: #{tpu_custom_call.1} parent=1 // pred_region
      _
    $region45: #{tpu_custom_call.1} parent=1 // pred_fallthru
      _
    // Predicated region
    $region46: #{tpu_custom_call.1} parent=1 // pred_check
      _
    $region47: #{tpu_custom_call.1} parent=1 // pred_check_branch
      %44 = sbr.rel (0) target = $region49
    $region48: #{tpu_custom_call.1} parent=1 // pred_region
      _
    $region49: #{tpu_custom_call.1} parent=1 // pred_fallthru
      _
    // Predicated region
    $region50: #{tpu_custom_call.1} parent=1 // pred_check
      _
    $region51: #{tpu_custom_call.1} parent=1 // pred_check_branch
      %46 = sbr.rel (0) target = $region53
    $region52: #{tpu_custom_call.1} parent=1 // pred_region
      _
    $region53: #{tpu_custom_call.1} parent=1 // pred_fallthru
      _
    // Predicated region
    $region54: #{tpu_custom_call.1} parent=1 // pred_check
      _
    $region55: #{tpu_custom_call.1} parent=1 // pred_check_branch
      %48 = sbr.rel (0) target = $region57
    $region56: #{tpu_custom_call.1} parent=1 // pred_region
      _
    $region57: #{tpu_custom_call.1} parent=1 // pred_fallthru
      _
    // Predicated region
    $region58: #{tpu_custom_call.1} parent=1 // pred_check
      _
    $region59: #{tpu_custom_call.1} parent=1 // pred_check_branch
      %50 = sbr.rel (0) target = $region61
    $region60: #{tpu_custom_call.1} parent=1 // pred_region
      _
    $region61: #{tpu_custom_call.1} parent=1 // pred_fallthru
      _
    %v51 = vld [vmem:[%s0] sm:$0xff]
    %v52 = vld [vmem:[%s0 + $0x8] sm:$0xff]
    %v53 = vld [vmem:[%s1] sm:$0x3]
    %v54 = vlaneseq
    %v55 = vand.u32 %v54, 127
    %56 = vset.pattern.permute.xlu0 0
    %57 = vperm.xlu0 %56, %v51
    %v58 = vpop.permute.xlu0 %57
    %59 = vset.pattern.permute.xlu0 0
    %60 = vperm.xlu0 %59, %v52
    %v61 = vpop.permute.xlu0 %60
    %vm62 = vcmp.eq.s32.totalorder %v55, %v58
    %vm63 = vcmp.eq.s32.totalorder %v55, %v61
    %v64 = vsel %vm62, 1, 0
    %v65 = vsel %vm63, 1, 0
    %v66 = vcvt.s32.f32 %v64
    %v67 = vcvt.s32.f32 %v65
    %v68 = vld [vmem:[%s2] sm:$0xff]
    %v69 = vld [vmem:[%s2 + $0x8] sm:$0xff]
    %v70 = vld [vmem:[%s2 + $0x10] sm:$0xff]
    %v71 = vld [vmem:[%s2 + $0x18] sm:$0xff]
    %v72 = vld [vmem:[%s2 + $0x20] sm:$0xff]
    %v73 = vld [vmem:[%s2 + $0x28] sm:$0xff]
    %v74 = vld [vmem:[%s2 + $0x30] sm:$0xff]
    %v75 = vld [vmem:[%s2 + $0x38] sm:$0xff]
    %v76 = vld [vmem:[%s3] sm:$0xff]
    %vm77 = vcmask 523264
    %v79 = vsel %vm77, %v66, 0
    %v82 = vsel %vm77, %v67, 0
    %84 = vmatprep.subr.mxu0 0.0
    %85 = vmatpush1.msra.mxu0 %v68
    %86 = vmatprep.subr.mxu0 0.0
    %87 = vmatpush1.msra.mxu0 %v69
    %88 = vmatprep.subr.mxu0 0.0
    %89 = vmatpush1.msra.mxu0 %v70
    %90 = vmatprep.subr.mxu0 0.0
    %91 = vmatpush1.msra.mxu0 %v71
    %92 = vmatprep.subr.mxu0 0.0
    %93 = vmatpush1.msra.mxu0 %v72
    %94 = vmatprep.subr.mxu0 0.0
    %95 = vmatpush1.msra.mxu0 %v73
    %96 = vmatprep.subr.mxu0 0.0
    %97 = vmatpush1.msra.mxu0 %v74
    %98 = vmatprep.subr.mxu0 0.0
    %99 = vmatpush1.msra.mxu0 %v75
    %100 = vmatprep.subr.mxu0 0.0
    %101 = vmatpush1.msra.mxu0 0.0
    %102 = vmatprep.subr.mxu0 0.0
    %103 = vmatpush1.msra.mxu0 0.0
    %104 = vmatprep.subr.mxu0 0.0
    %105 = vmatpush1.msra.mxu0 0.0
    %106 = vmatprep.subr.mxu0 0.0
    %107 = vmatpush1.msra.mxu0 0.0
    %108 = vmatprep.subr.mxu0 0.0
    %109 = vmatpush1.msra.mxu0 0.0
    %110 = vmatprep.subr.mxu0 0.0
    %111 = vmatpush1.msra.mxu0 0.0
    %112 = vmatprep.subr.mxu0 0.0
    %113 = vmatpush1.msra.mxu0 0.0
    %114 = vmatprep.subr.mxu0 0.0
    %115 = vmatpush1.msra.mxu0 0.0
    %116 = vmatprep.subr.mxu0 0.0
    %117 = vmatpush1.msra.mxu0 0.0
    %118 = vmatprep.subr.mxu0 0.0
    %119 = vmatpush1.msra.mxu0 0.0
    %120 = vmatprep.subr.mxu0 0.0
    %121 = vmatpush1.msra.mxu0 0.0
    %122 = vmatprep.subr.mxu0 0.0
    %123 = vmatpush1.msra.mxu0 0.0
    %124 = vmatprep.subr.mxu0 0.0
    %125 = vmatpush1.msra.mxu0 0.0
    %126 = vmatprep.subr.mxu0 0.0
    %127 = vmatpush1.msra.mxu0 0.0
    %128 = vmatprep.subr.mxu0 0.0
    %129 = vmatpush1.msra.mxu0 0.0
    %130 = vmatprep.subr.mxu0 0.0
    %131 = vmatpush1.msra.mxu0 0.0
    %132 = vmatprep.subr.mxu0 0.0
    %133 = vmatpush1.msra.mxu0 0.0
    %134 = vmatprep.subr.mxu0 0.0
    %135 = vmatpush1.msra.mxu0 0.0
    %136 = vmatprep.subr.mxu0 0.0
    %137 = vmatpush1.msra.mxu0 0.0
    %138 = vmatprep.subr.mxu0 0.0
    %139 = vmatpush1.msra.mxu0 0.0
    %140 = vmatprep.subr.mxu0 0.0
    %141 = vmatpush1.msra.mxu0 0.0
    %142 = vmatprep.subr.mxu0 0.0
    %143 = vmatpush1.msra.mxu0 0.0
    %144 = vmatprep.subr.mxu0 0.0
    %145 = vmatpush1.msra.mxu0 0.0
    %146 = vmatprep.subr.mxu0 0.0
    %147 = vmatpush1.msra.mxu0 0.0
    %148 = vmatprep.mubr.f32.mxu0 0.0
    %149 = vmatmul.mubr.f32.gmra.mrb[0].mxu0 %v79
    %v150 = vpop.f32.mrb[0].mxu0
    %v151 = vadd.f32 %v76, %v150
    %v152 = vpop.f32.mrb[0].mxu0
    %153 = vmatprep.mubr.f32.mxu0 0.0
    %154 = vmatmul.mubr.f32.gmra.mrb[0].mxu0 %v82
    %v155 = vpop.f32.mrb[0].mxu0
    %v156 = vadd.f32 %v76, %v155
    %v157 = vpop.f32.mrb[0].mxu0
    %158 = vdwg.mxu0
    %vm159 = vcmp.gt.s32.totalorder %v53, 0
    %v160 = vsel %vm159, 0.0, -1e+09
    %v161 = vld [vmem:[%s12] sm:$0xf]
    %vm162 = vcmask 261120
    %v163 = vsel %vm162, %v151, 0.0
    %164 = vadd.xlane.f32.xlu0 %v163
    %v165 = vpop.xlane.xlu0 %164
    %v166 = vsel %vm162, %v156, 0.0
    %167 = vadd.xlane.f32.xlu0 %v166
    %v168 = vpop.xlane.xlu0 %167
    %v169 = vrcp.pop 32.0
    %v170 = vmul.f32 %v165, %v169
    %v171 = vmul.f32 %v168, %v169
    %v172 = vsub.f32 %v151, %v170
    %v173 = vsub.f32 %v156, %v171
    %v174 = vmul.f32 %v172, %v172
    %v175 = vmul.f32 %v173, %v173
    %v176 = vsel %vm162, %v174, 0.0
    %177 = vadd.xlane.f32.xlu0 %v176
    %v178 = vpop.xlane.xlu0 %177
    %v179 = vsel %vm162, %v175, 0.0
    %180 = vadd.xlane.f32.xlu0 %v179
    %v181 = vpop.xlane.xlu0 %180
    %v182 = vmul.f32 %v178, %v169
    %v183 = vmul.f32 %v181, %v169
    %v184 = vadd.f32 %v182, 1e-05
    %v185 = vadd.f32 %v183, 1e-05
    %v186 = vrsqrt.pop %v184
    %v187 = vrsqrt.pop %v185
    %v188 = vmul.f32 %v172, %v186
    %v189 = vmul.f32 %v173, %v187
    %v190 = vlaneseq
    %v191 = vshrl.u32 %v190, 7
    %v192 = vsub.s32 0, %v191
    %v193 = vrot.slane %v161, %v192
    %v194 = vmul.f32 %v188, %v193
    %v195 = vmul.f32 %v189, %v193
    %v196 = vlaneseq
    %v197 = vshrl.u32 %v196, 7
    %v198 = vsub.s32 1, %v197
    %v199 = vrot.slane %v161, %v198
    %v200 = vadd.f32 %v194, %v199
    %v201 = vadd.f32 %v195, %v199
    %v202 = vld [vmem:[%s4] sm:$0xff]
    %v203 = vld [vmem:[%s4 + $0x8] sm:$0xff]
    %v204 = vld [vmem:[%s4 + $0x10] sm:$0xff]
    %v205 = vld [vmem:[%s4 + $0x18] sm:$0xff]
    %v206 = vld [vmem:[%s5] sm:$0x1]
    %v208 = vlaneseq
    %v209 = vshrl.u32 %v208, 7
    %v210 = vsub.s32 0, %v209
    %v211 = vrot.slane %v206, %v210
    %v214 = vsel %vm162, %v200, 0
    %v217 = vsel %vm162, %v201, 0
    %219 = vmatprep.subr.mxu0 0.0
    %220 = vmatpush1.msra.mxu0 %v202
    %221 = vmatprep.subr.mxu0 0.0
    %222 = vmatpush1.msra.mxu0 %v203
    %223 = vmatprep.subr.mxu0 0.0
    %224 = vmatpush1.msra.mxu0 %v204
    %225 = vmatprep.subr.mxu0 0.0
    %226 = vmatpush1.msra.mxu0 %v205
    %227 = vmatprep.subr.mxu0 0.0
    %228 = vmatpush1.msra.mxu0 0.0
    %229 = vmatprep.subr.mxu0 0.0
    %230 = vmatpush1.msra.mxu0 0.0
    %231 = vmatprep.subr.mxu0 0.0
    %232 = vmatpush1.msra.mxu0 0.0
    %233 = vmatprep.subr.mxu0 0.0
    %234 = vmatpush1.msra.mxu0 0.0
    %235 = vmatprep.subr.mxu0 0.0
    %236 = vmatpush1.msra.mxu0 0.0
    %237 = vmatprep.subr.mxu0 0.0
    %238 = vmatpush1.msra.mxu0 0.0
    %239 = vmatprep.subr.mxu0 0.0
    %240 = vmatpush1.msra.mxu0 0.0
    %241 = vmatprep.subr.mxu0 0.0
    %242 = vmatpush1.msra.mxu0 0.0
    %243 = vmatprep.subr.mxu0 0.0
    %244 = vmatpush1.msra.mxu0 0.0
    %245 = vmatprep.subr.mxu0 0.0
    %246 = vmatpush1.msra.mxu0 0.0
    %247 = vmatprep.subr.mxu0 0.0
    %248 = vmatpush1.msra.mxu0 0.0
    %249 = vmatprep.subr.mxu0 0.0
    %250 = vmatpush1.msra.mxu0 0.0
    %251 = vmatprep.subr.mxu0 0.0
    %252 = vmatpush1.msra.mxu0 0.0
    %253 = vmatprep.subr.mxu0 0.0
    %254 = vmatpush1.msra.mxu0 0.0
    %255 = vmatprep.subr.mxu0 0.0
    %256 = vmatpush1.msra.mxu0 0.0
    %257 = vmatprep.subr.mxu0 0.0
    %258 = vmatpush1.msra.mxu0 0.0
    %259 = vmatprep.subr.mxu0 0.0
    %260 = vmatpush1.msra.mxu0 0.0
    %261 = vmatprep.subr.mxu0 0.0
    %262 = vmatpush1.msra.mxu0 0.0
    %263 = vmatprep.subr.mxu0 0.0
    %264 = vmatpush1.msra.mxu0 0.0
    %265 = vmatprep.subr.mxu0 0.0
    %266 = vmatpush1.msra.mxu0 0.0
    %267 = vmatprep.subr.mxu0 0.0
    %268 = vmatpush1.msra.mxu0 0.0
    %269 = vmatprep.subr.mxu0 0.0
    %270 = vmatpush1.msra.mxu0 0.0
    %271 = vmatprep.subr.mxu0 0.0
    %272 = vmatpush1.msra.mxu0 0.0
    %273 = vmatprep.subr.mxu0 0.0
    %274 = vmatpush1.msra.mxu0 0.0
    %275 = vmatprep.subr.mxu0 0.0
    %276 = vmatpush1.msra.mxu0 0.0
    %277 = vmatprep.subr.mxu0 0.0
    %278 = vmatpush1.msra.mxu0 0.0
    %279 = vmatprep.subr.mxu0 0.0
    %280 = vmatpush1.msra.mxu0 0.0
    %281 = vmatprep.subr.mxu0 0.0
    %282 = vmatpush1.msra.mxu0 0.0
    %283 = vmatprep.mubr.f32.mxu0 0.0
    %284 = vmatmul.mubr.f32.gmra.mrb[0].mxu0 %v214
    %v285 = vpop.f32.mrb[0].mxu0
    %v286 = vadd.f32 %v211, %v285
    %v287 = vpop.f32.mrb[0].mxu0
    %288 = vmatprep.mubr.f32.mxu0 0.0
    %289 = vmatmul.mubr.f32.gmra.mrb[0].mxu0 %v217
    %v290 = vpop.f32.mrb[0].mxu0
    %v291 = vadd.f32 %v211, %v290
    %v292 = vpop.f32.mrb[0].mxu0
    %293 = vdwg.mxu0
    %295 = vrot.lane.b32.xlu0 %v286, 96
    %v296 = vpop.permute.xlu0 %295
    %vm297 = vcmask 130048
    %v298 = vsel %vm297, %v286, 0
    %v300 = vsel %vm297, %v296, 0
    %302 = vmatprep.subr.mxu0 0.0
    %303 = vmatpush1.xpose.msra.mxu0 %v300
    %304 = vmatprep.subr.mxu0 0.0
    %305 = vmatpush1.xpose.msra.mxu0 0.0
    %306 = vmatprep.subr.mxu0 0.0
    %307 = vmatpush1.xpose.msra.mxu0 0.0
    %308 = vmatprep.subr.mxu0 0.0
    %309 = vmatpush1.xpose.msra.mxu0 0.0
    %310 = vmatprep.subr.mxu0 0.0
    %311 = vmatpush1.xpose.msra.mxu0 0.0
    %312 = vmatprep.subr.mxu0 0.0
    %313 = vmatpush1.xpose.msra.mxu0 0.0
    %314 = vmatprep.subr.mxu0 0.0
    %315 = vmatpush1.xpose.msra.mxu0 0.0
    %316 = vmatprep.subr.mxu0 0.0
    %317 = vmatpush1.xpose.msra.mxu0 0.0
    %318 = vmatprep.subr.mxu0 0.0
    %319 = vmatpush1.xpose.msra.mxu0 0.0
    %320 = vmatprep.subr.mxu0 0.0
    %321 = vmatpush1.xpose.msra.mxu0 0.0
    %322 = vmatprep.subr.mxu0 0.0
    %323 = vmatpush1.xpose.msra.mxu0 0.0
    %324 = vmatprep.subr.mxu0 0.0
    %325 = vmatpush1.xpose.msra.mxu0 0.0
    %326 = vmatprep.subr.mxu0 0.0
    %327 = vmatpush1.xpose.msra.mxu0 0.0
    %328 = vmatprep.subr.mxu0 0.0
    %329 = vmatpush1.xpose.msra.mxu0 0.0
    %330 = vmatprep.subr.mxu0 0.0
    %331 = vmatpush1.xpose.msra.mxu0 0.0
    %332 = vmatprep.subr.mxu0 0.0
    %333 = vmatpush1.xpose.msra.mxu0 0.0
    %334 = vmatprep.subr.mxu0 0.0
    %335 = vmatpush1.xpose.msra.mxu0 0.0
    %336 = vmatprep.subr.mxu0 0.0
    %337 = vmatpush1.xpose.msra.mxu0 0.0
    %338 = vmatprep.subr.mxu0 0.0
    %339 = vmatpush1.xpose.msra.mxu0 0.0
    %340 = vmatprep.subr.mxu0 0.0
    %341 = vmatpush1.xpose.msra.mxu0 0.0
    %342 = vmatprep.subr.mxu0 0.0
    %343 = vmatpush1.xpose.msra.mxu0 0.0
    %344 = vmatprep.subr.mxu0 0.0
    %345 = vmatpush1.xpose.msra.mxu0 0.0
    %346 = vmatprep.subr.mxu0 0.0
    %347 = vmatpush1.xpose.msra.mxu0 0.0
    %348 = vmatprep.subr.mxu0 0.0
    %349 = vmatpush1.xpose.msra.mxu0 0.0
    %350 = vmatprep.subr.mxu0 0.0
    %351 = vmatpush1.xpose.msra.mxu0 0.0
    %352 = vmatprep.subr.mxu0 0.0
    %353 = vmatpush1.xpose.msra.mxu0 0.0
    %354 = vmatprep.subr.mxu0 0.0
    %355 = vmatpush1.xpose.msra.mxu0 0.0
    %356 = vmatprep.subr.mxu0 0.0
    %357 = vmatpush1.xpose.msra.mxu0 0.0
    %358 = vmatprep.subr.mxu0 0.0
    %359 = vmatpush1.xpose.msra.mxu0 0.0
    %360 = vmatprep.subr.mxu0 0.0
    %361 = vmatpush1.xpose.msra.mxu0 0.0
    %362 = vmatprep.subr.mxu0 0.0
    %363 = vmatpush1.xpose.msra.mxu0 0.0
    %364 = vmatprep.subr.mxu0 0.0
    %365 = vmatpush1.xpose.msra.mxu0 0.0
    %366 = vmatprep.mubr.f32.mxu0 0.0
    %367 = vmatmul.mubr.f32.gmra.mrb[0].mxu0 %v298
    %v368 = vpop.f32.mrb[0].mxu0
    %v369 = vadd.f32 0.0, %v368
    %v370 = vpop.f32.mrb[0].mxu0
    %371 = vdwg.mxu0
    %v372 = vmul.f32 %v369, 0.25
    %v373 = vlaneseq
    %v374 = vshrl.u32 %v373, 7
    %v375 = vsub.s32 0, %v374
    %v376 = vrot.slane %v160, %v375
    %v377 = vadd.f32 %v372, %v376
    %vm378 = vcmask 64512
    %v379 = vsel %vm378, %v377, -inf
    %380 = vmax.xlane.f32.xlu0 %v379
    %v381 = vpop.xlane.xlu0 %380
    %v382 = vsub.f32 %v377, %v381
    %v383 = vmul.f32 %v382, 1.442695
    %v384 = vpow.pop %v383
    %v385 = vsel %vm378, %v384, 0.0
    %386 = vadd.xlane.f32.xlu0 %v385
    %v387 = vpop.xlane.xlu0 %386
    %v388 = vrcp.pop %v387
    %v389 = vmul.f32 %v384, %v388
    %390 = vrot.lane.b32.xlu0 %v286, 64
    %v391 = vpop.permute.xlu0 %390
    %v394 = vsel %vm378, %v389, 0
    %396 = vmatprep.subr.mxu0 0.0
    %397 = vmatpush1.msra.mxu0 %v391
    %398 = vmatprep.subr.mxu0 0.0
    %399 = vmatpush1.msra.mxu0 0.0
    %400 = vmatprep.subr.mxu0 0.0
    %401 = vmatpush1.msra.mxu0 0.0
    %402 = vmatprep.subr.mxu0 0.0
    %403 = vmatpush1.msra.mxu0 0.0
    %404 = vmatprep.subr.mxu0 0.0
    %405 = vmatpush1.msra.mxu0 0.0
    %406 = vmatprep.subr.mxu0 0.0
    %407 = vmatpush1.msra.mxu0 0.0
    %408 = vmatprep.subr.mxu0 0.0
    %409 = vmatpush1.msra.mxu0 0.0
    %410 = vmatprep.subr.mxu0 0.0
    %411 = vmatpush1.msra.mxu0 0.0
    %412 = vmatprep.subr.mxu0 0.0
    %413 = vmatpush1.msra.mxu0 0.0
    %414 = vmatprep.subr.mxu0 0.0
    %415 = vmatpush1.msra.mxu0 0.0
    %416 = vmatprep.subr.mxu0 0.0
    %417 = vmatpush1.msra.mxu0 0.0
    %418 = vmatprep.subr.mxu0 0.0
    %419 = vmatpush1.msra.mxu0 0.0
    %420 = vmatprep.subr.mxu0 0.0
    %421 = vmatpush1.msra.mxu0 0.0
    %422 = vmatprep.subr.mxu0 0.0
    %423 = vmatpush1.msra.mxu0 0.0
    %424 = vmatprep.subr.mxu0 0.0
    %425 = vmatpush1.msra.mxu0 0.0
    %426 = vmatprep.subr.mxu0 0.0
    %427 = vmatpush1.msra.mxu0 0.0
    %428 = vmatprep.subr.mxu0 0.0
    %429 = vmatpush1.msra.mxu0 0.0
    %430 = vmatprep.subr.mxu0 0.0
    %431 = vmatpush1.msra.mxu0 0.0
    %432 = vmatprep.subr.mxu0 0.0
    %433 = vmatpush1.msra.mxu0 0.0
    %434 = vmatprep.subr.mxu0 0.0
    %435 = vmatpush1.msra.mxu0 0.0
    %436 = vmatprep.subr.mxu0 0.0
    %437 = vmatpush1.msra.mxu0 0.0
    %438 = vmatprep.subr.mxu0 0.0
    %439 = vmatpush1.msra.mxu0 0.0
    %440 = vmatprep.subr.mxu0 0.0
    %441 = vmatpush1.msra.mxu0 0.0
    %442 = vmatprep.subr.mxu0 0.0
    %443 = vmatpush1.msra.mxu0 0.0
    %444 = vmatprep.subr.mxu0 0.0
    %445 = vmatpush1.msra.mxu0 0.0
    %446 = vmatprep.subr.mxu0 0.0
    %447 = vmatpush1.msra.mxu0 0.0
    %448 = vmatprep.subr.mxu0 0.0
    %449 = vmatpush1.msra.mxu0 0.0
    %450 = vmatprep.subr.mxu0 0.0
    %451 = vmatpush1.msra.mxu0 0.0
    %452 = vmatprep.subr.mxu0 0.0
    %453 = vmatpush1.msra.mxu0 0.0
    %454 = vmatprep.subr.mxu0 0.0
    %455 = vmatpush1.msra.mxu0 0.0
    %456 = vmatprep.subr.mxu0 0.0
    %457 = vmatpush1.msra.mxu0 0.0
    %458 = vmatprep.subr.mxu0 0.0
    %459 = vmatpush1.msra.mxu0 0.0
    %460 = vmatprep.mubr.f32.mxu0 0.0
    %461 = vmatmul.mubr.f32.gmra.mrb[0].mxu0 %v394
    %v462 = vpop.f32.mrb[0].mxu0
    %v463 = vadd.f32 0.0, %v462
    %v464 = vpop.f32.mrb[0].mxu0
    %465 = vdwg.mxu0
    %466 = vrot.lane.b32.xlu0 %v286, 112
    %v467 = vpop.permute.xlu0 %466
    %468 = vrot.lane.b32.xlu0 %v286, 80
    %v469 = vpop.permute.xlu0 %468
    %v470 = vsel %vm297, %v467, 0
    %v472 = vsel %vm297, %v469, 0
    %474 = vmatprep.subr.mxu0 0.0
    %475 = vmatpush1.xpose.msra.mxu0 %v472
    %476 = vmatprep.subr.mxu0 0.0
    %477 = vmatpush1.xpose.msra.mxu0 0.0
    %478 = vmatprep.subr.mxu0 0.0
    %479 = vmatpush1.xpose.msra.mxu0 0.0
    %480 = vmatprep.subr.mxu0 0.0
    %481 = vmatpush1.xpose.msra.mxu0 0.0
    %482 = vmatprep.subr.mxu0 0.0
    %483 = vmatpush1.xpose.msra.mxu0 0.0
    %484 = vmatprep.subr.mxu0 0.0
    %485 = vmatpush1.xpose.msra.mxu0 0.0
    %486 = vmatprep.subr.mxu0 0.0
    %487 = vmatpush1.xpose.msra.mxu0 0.0
    %488 = vmatprep.subr.mxu0 0.0
    %489 = vmatpush1.xpose.msra.mxu0 0.0
    %490 = vmatprep.subr.mxu0 0.0
    %491 = vmatpush1.xpose.msra.mxu0 0.0
    %492 = vmatprep.subr.mxu0 0.0
    %493 = vmatpush1.xpose.msra.mxu0 0.0
    %494 = vmatprep.subr.mxu0 0.0
    %495 = vmatpush1.xpose.msra.mxu0 0.0
    %496 = vmatprep.subr.mxu0 0.0
    %497 = vmatpush1.xpose.msra.mxu0 0.0
    %498 = vmatprep.subr.mxu0 0.0
    %499 = vmatpush1.xpose.msra.mxu0 0.0
    %500 = vmatprep.subr.mxu0 0.0
    %501 = vmatpush1.xpose.msra.mxu0 0.0
    %502 = vmatprep.subr.mxu0 0.0
    %503 = vmatpush1.xpose.msra.mxu0 0.0
    %504 = vmatprep.subr.mxu0 0.0
    %505 = vmatpush1.xpose.msra.mxu0 0.0
    %506 = vmatprep.subr.mxu0 0.0
    %507 = vmatpush1.xpose.msra.mxu0 0.0
    %508 = vmatprep.subr.mxu0 0.0
    %509 = vmatpush1.xpose.msra.mxu0 0.0
    %510 = vmatprep.subr.mxu0 0.0
    %511 = vmatpush1.xpose.msra.mxu0 0.0
    %512 = vmatprep.subr.mxu0 0.0
    %513 = vmatpush1.xpose.msra.mxu0 0.0
    %514 = vmatprep.subr.mxu0 0.0
    %515 = vmatpush1.xpose.msra.mxu0 0.0
    %516 = vmatprep.subr.mxu0 0.0
    %517 = vmatpush1.xpose.msra.mxu0 0.0
    %518 = vmatprep.subr.mxu0 0.0
    %519 = vmatpush1.xpose.msra.mxu0 0.0
    %520 = vmatprep.subr.mxu0 0.0
    %521 = vmatpush1.xpose.msra.mxu0 0.0
    %522 = vmatprep.subr.mxu0 0.0
    %523 = vmatpush1.xpose.msra.mxu0 0.0
    %524 = vmatprep.subr.mxu0 0.0
    %525 = vmatpush1.xpose.msra.mxu0 0.0
    %526 = vmatprep.subr.mxu0 0.0
    %527 = vmatpush1.xpose.msra.mxu0 0.0
    %528 = vmatprep.subr.mxu0 0.0
    %529 = vmatpush1.xpose.msra.mxu0 0.0
    %530 = vmatprep.subr.mxu0 0.0
    %531 = vmatpush1.xpose.msra.mxu0 0.0
    %532 = vmatprep.subr.mxu0 0.0
    %533 = vmatpush1.xpose.msra.mxu0 0.0
    %534 = vmatprep.subr.mxu0 0.0
    %535 = vmatpush1.xpose.msra.mxu0 0.0
    %536 = vmatprep.subr.mxu0 0.0
    %537 = vmatpush1.xpose.msra.mxu0 0.0
    %538 = vmatprep.mubr.f32.mxu0 0.0
    %539 = vmatmul.mubr.f32.gmra.mrb[0].mxu0 %v470
    %v540 = vpop.f32.mrb[0].mxu0
    %v541 = vadd.f32 0.0, %v540
    %v542 = vpop.f32.mrb[0].mxu0
    %543 = vdwg.mxu0
    %v544 = vmul.f32 %v541, 0.25
    %v545 = vadd.f32 %v544, %v376
    %v546 = vsel %vm378, %v545, -inf
    %547 = vmax.xlane.f32.xlu0 %v546
    %v548 = vpop.xlane.xlu0 %547
    %v549 = vsub.f32 %v545, %v548
    %v550 = vmul.f32 %v549, 1.442695
    %v551 = vpow.pop %v550
    %v552 = vsel %vm378, %v551, 0.0
    %553 = vadd.xlane.f32.xlu0 %v552
    %v554 = vpop.xlane.xlu0 %553
    %v555 = vrcp.pop %v554
    %v556 = vmul.f32 %v551, %v555
    %557 = vrot.lane.b32.xlu0 %v286, 48
    %v558 = vpop.permute.xlu0 %557
    %v561 = vsel %vm378, %v556, 0
    %563 = vmatprep.subr.mxu0 0.0
    %564 = vmatpush1.msra.mxu0 %v558
    %565 = vmatprep.subr.mxu0 0.0
    %566 = vmatpush1.msra.mxu0 0.0
    %567 = vmatprep.subr.mxu0 0.0
    %568 = vmatpush1.msra.mxu0 0.0
    %569 = vmatprep.subr.mxu0 0.0
    %570 = vmatpush1.msra.mxu0 0.0
    %571 = vmatprep.subr.mxu0 0.0
    %572 = vmatpush1.msra.mxu0 0.0
    %573 = vmatprep.subr.mxu0 0.0
    %574 = vmatpush1.msra.mxu0 0.0
    %575 = vmatprep.subr.mxu0 0.0
    %576 = vmatpush1.msra.mxu0 0.0
    %577 = vmatprep.subr.mxu0 0.0
    %578 = vmatpush1.msra.mxu0 0.0
    %579 = vmatprep.subr.mxu0 0.0
    %580 = vmatpush1.msra.mxu0 0.0
    %581 = vmatprep.subr.mxu0 0.0
    %582 = vmatpush1.msra.mxu0 0.0
    %583 = vmatprep.subr.mxu0 0.0
    %584 = vmatpush1.msra.mxu0 0.0
    %585 = vmatprep.subr.mxu0 0.0
    %586 = vmatpush1.msra.mxu0 0.0
    %587 = vmatprep.subr.mxu0 0.0
    %588 = vmatpush1.msra.mxu0 0.0
    %589 = vmatprep.subr.mxu0 0.0
    %590 = vmatpush1.msra.mxu0 0.0
    %591 = vmatprep.subr.mxu0 0.0
    %592 = vmatpush1.msra.mxu0 0.0
    %593 = vmatprep.subr.mxu0 0.0
    %594 = vmatpush1.msra.mxu0 0.0
    %595 = vmatprep.subr.mxu0 0.0
    %596 = vmatpush1.msra.mxu0 0.0
    %597 = vmatprep.subr.mxu0 0.0
    %598 = vmatpush1.msra.mxu0 0.0
    %599 = vmatprep.subr.mxu0 0.0
    %600 = vmatpush1.msra.mxu0 0.0
    %601 = vmatprep.subr.mxu0 0.0
    %602 = vmatpush1.msra.mxu0 0.0
    %603 = vmatprep.subr.mxu0 0.0
    %604 = vmatpush1.msra.mxu0 0.0
    %605 = vmatprep.subr.mxu0 0.0
    %606 = vmatpush1.msra.mxu0 0.0
    %607 = vmatprep.subr.mxu0 0.0
    %608 = vmatpush1.msra.mxu0 0.0
    %609 = vmatprep.subr.mxu0 0.0
    %610 = vmatpush1.msra.mxu0 0.0
    %611 = vmatprep.subr.mxu0 0.0
    %612 = vmatpush1.msra.mxu0 0.0
    %613 = vmatprep.subr.mxu0 0.0
    %614 = vmatpush1.msra.mxu0 0.0
    %615 = vmatprep.subr.mxu0 0.0
    %616 = vmatpush1.msra.mxu0 0.0
    %617 = vmatprep.subr.mxu0 0.0
    %618 = vmatpush1.msra.mxu0 0.0
    %619 = vmatprep.subr.mxu0 0.0
    %620 = vmatpush1.msra.mxu0 0.0
    %621 = vmatprep.subr.mxu0 0.0
    %622 = vmatpush1.msra.mxu0 0.0
    %623 = vmatprep.subr.mxu0 0.0
    %624 = vmatpush1.msra.mxu0 0.0
    %625 = vmatprep.subr.mxu0 0.0
    %626 = vmatpush1.msra.mxu0 0.0
    %627 = vmatprep.mubr.f32.mxu0 0.0
    %628 = vmatmul.mubr.f32.gmra.mrb[0].mxu0 %v561
    %v629 = vpop.f32.mrb[0].mxu0
    %v630 = vadd.f32 0.0, %v629
    %v631 = vpop.f32.mrb[0].mxu0
    %632 = vdwg.mxu0
    %634 = vrot.lane.b32.xlu0 %v630, 16
    %v635 = vpop.permute.xlu0 %634
    %v637 = vsel %vm297, %v463, %v635
    %639 = vrot.lane.b32.xlu0 %v291, 96
    %v640 = vpop.permute.xlu0 %639
    %v641 = vsel %vm297, %v291, 0
    %v643 = vsel %vm297, %v640, 0
    %645 = vmatprep.subr.mxu0 0.0
    %646 = vmatpush1.xpose.msra.mxu0 %v643
    %647 = vmatprep.subr.mxu0 0.0
    %648 = vmatpush1.xpose.msra.mxu0 0.0
    %649 = vmatprep.subr.mxu0 0.0
    %650 = vmatpush1.xpose.msra.mxu0 0.0
    %651 = vmatprep.subr.mxu0 0.0
    %652 = vmatpush1.xpose.msra.mxu0 0.0
    %653 = vmatprep.subr.mxu0 0.0
    %654 = vmatpush1.xpose.msra.mxu0 0.0
    %655 = vmatprep.subr.mxu0 0.0
    %656 = vmatpush1.xpose.msra.mxu0 0.0
    %657 = vmatprep.subr.mxu0 0.0
    %658 = vmatpush1.xpose.msra.mxu0 0.0
    %659 = vmatprep.subr.mxu0 0.0
    %660 = vmatpush1.xpose.msra.mxu0 0.0
    %661 = vmatprep.subr.mxu0 0.0
    %662 = vmatpush1.xpose.msra.mxu0 0.0
    %663 = vmatprep.subr.mxu0 0.0
    %664 = vmatpush1.xpose.msra.mxu0 0.0
    %665 = vmatprep.subr.mxu0 0.0
    %666 = vmatpush1.xpose.msra.mxu0 0.0
    %667 = vmatprep.subr.mxu0 0.0
    %668 = vmatpush1.xpose.msra.mxu0 0.0
    %669 = vmatprep.subr.mxu0 0.0
    %670 = vmatpush1.xpose.msra.mxu0 0.0
    %671 = vmatprep.subr.mxu0 0.0
    %672 = vmatpush1.xpose.msra.mxu0 0.0
    %673 = vmatprep.subr.mxu0 0.0
    %674 = vmatpush1.xpose.msra.mxu0 0.0
    %675 = vmatprep.subr.mxu0 0.0
    %676 = vmatpush1.xpose.msra.mxu0 0.0
    %677 = vmatprep.subr.mxu0 0.0
    %678 = vmatpush1.xpose.msra.mxu0 0.0
    %679 = vmatprep.subr.mxu0 0.0
    %680 = vmatpush1.xpose.msra.mxu0 0.0
    %681 = vmatprep.subr.mxu0 0.0
    %682 = vmatpush1.xpose.msra.mxu0 0.0
    %683 = vmatprep.subr.mxu0 0.0
    %684 = vmatpush1.xpose.msra.mxu0 0.0
    %685 = vmatprep.subr.mxu0 0.0
    %686 = vmatpush1.xpose.msra.mxu0 0.0
    %687 = vmatprep.subr.mxu0 0.0
    %688 = vmatpush1.xpose.msra.mxu0 0.0
    %689 = vmatprep.subr.mxu0 0.0
    %690 = vmatpush1.xpose.msra.mxu0 0.0
    %691 = vmatprep.subr.mxu0 0.0
    %692 = vmatpush1.xpose.msra.mxu0 0.0
    %693 = vmatprep.subr.mxu0 0.0
    %694 = vmatpush1.xpose.msra.mxu0 0.0
    %695 = vmatprep.subr.mxu0 0.0
    %696 = vmatpush1.xpose.msra.mxu0 0.0
    %697 = vmatprep.subr.mxu0 0.0
    %698 = vmatpush1.xpose.msra.mxu0 0.0
    %699 = vmatprep.subr.mxu0 0.0
    %700 = vmatpush1.xpose.msra.mxu0 0.0
    %701 = vmatprep.subr.mxu0 0.0
    %702 = vmatpush1.xpose.msra.mxu0 0.0
    %703 = vmatprep.subr.mxu0 0.0
    %704 = vmatpush1.xpose.msra.mxu0 0.0
    %705 = vmatprep.subr.mxu0 0.0
    %706 = vmatpush1.xpose.msra.mxu0 0.0
    %707 = vmatprep.subr.mxu0 0.0
    %708 = vmatpush1.xpose.msra.mxu0 0.0
    %709 = vmatprep.mubr.f32.mxu0 0.0
    %710 = vmatmul.mubr.f32.gmra.mrb[0].mxu0 %v641
    %v711 = vpop.f32.mrb[0].mxu0
    %v712 = vadd.f32 0.0, %v711
    %v713 = vpop.f32.mrb[0].mxu0
    %714 = vdwg.mxu0
    %v715 = vmul.f32 %v712, 0.25
    %v716 = vlaneseq
    %v717 = vshrl.u32 %v716, 7
    %v718 = vsub.s32 1, %v717
    %v719 = vrot.slane %v160, %v718
    %v720 = vadd.f32 %v715, %v719
    %v721 = vsel %vm378, %v720, -inf
    %722 = vmax.xlane.f32.xlu0 %v721
    %v723 = vpop.xlane.xlu0 %722
    %v724 = vsub.f32 %v720, %v723
    %v725 = vmul.f32 %v724, 1.442695
    %v726 = vpow.pop %v725
    %v727 = vsel %vm378, %v726, 0.0
    %728 = vadd.xlane.f32.xlu0 %v727
    %v729 = vpop.xlane.xlu0 %728
    %v730 = vrcp.pop %v729
    %v731 = vmul.f32 %v726, %v730
    %732 = vrot.lane.b32.xlu0 %v291, 64
    %v733 = vpop.permute.xlu0 %732
    %v736 = vsel %vm378, %v731, 0
    %738 = vmatprep.subr.mxu0 0.0
    %739 = vmatpush1.msra.mxu0 %v733
    %740 = vmatprep.subr.mxu0 0.0
    %741 = vmatpush1.msra.mxu0 0.0
    %742 = vmatprep.subr.mxu0 0.0
    %743 = vmatpush1.msra.mxu0 0.0
    %744 = vmatprep.subr.mxu0 0.0
    %745 = vmatpush1.msra.mxu0 0.0
    %746 = vmatprep.subr.mxu0 0.0
    %747 = vmatpush1.msra.mxu0 0.0
    %748 = vmatprep.subr.mxu0 0.0
    %749 = vmatpush1.msra.mxu0 0.0
    %750 = vmatprep.subr.mxu0 0.0
    %751 = vmatpush1.msra.mxu0 0.0
    %752 = vmatprep.subr.mxu0 0.0
    %753 = vmatpush1.msra.mxu0 0.0
    %754 = vmatprep.subr.mxu0 0.0
    %755 = vmatpush1.msra.mxu0 0.0
    %756 = vmatprep.subr.mxu0 0.0
    %757 = vmatpush1.msra.mxu0 0.0
    %758 = vmatprep.subr.mxu0 0.0
    %759 = vmatpush1.msra.mxu0 0.0
    %760 = vmatprep.subr.mxu0 0.0
    %761 = vmatpush1.msra.mxu0 0.0
    %762 = vmatprep.subr.mxu0 0.0
    %763 = vmatpush1.msra.mxu0 0.0
    %764 = vmatprep.subr.mxu0 0.0
    %765 = vmatpush1.msra.mxu0 0.0
    %766 = vmatprep.subr.mxu0 0.0
    %767 = vmatpush1.msra.mxu0 0.0
    %768 = vmatprep.subr.mxu0 0.0
    %769 = vmatpush1.msra.mxu0 0.0
    %770 = vmatprep.subr.mxu0 0.0
    %771 = vmatpush1.msra.mxu0 0.0
    %772 = vmatprep.subr.mxu0 0.0
    %773 = vmatpush1.msra.mxu0 0.0
    %774 = vmatprep.subr.mxu0 0.0
    %775 = vmatpush1.msra.mxu0 0.0
    %776 = vmatprep.subr.mxu0 0.0
    %777 = vmatpush1.msra.mxu0 0.0
    %778 = vmatprep.subr.mxu0 0.0
    %779 = vmatpush1.msra.mxu0 0.0
    %780 = vmatprep.subr.mxu0 0.0
    %781 = vmatpush1.msra.mxu0 0.0
    %782 = vmatprep.subr.mxu0 0.0
    %783 = vmatpush1.msra.mxu0 0.0
    %784 = vmatprep.subr.mxu0 0.0
    %785 = vmatpush1.msra.mxu0 0.0
    %786 = vmatprep.subr.mxu0 0.0
    %787 = vmatpush1.msra.mxu0 0.0
    %788 = vmatprep.subr.mxu0 0.0
    %789 = vmatpush1.msra.mxu0 0.0
    %790 = vmatprep.subr.mxu0 0.0
    %791 = vmatpush1.msra.mxu0 0.0
    %792 = vmatprep.subr.mxu0 0.0
    %793 = vmatpush1.msra.mxu0 0.0
    %794 = vmatprep.subr.mxu0 0.0
    %795 = vmatpush1.msra.mxu0 0.0
    %796 = vmatprep.subr.mxu0 0.0
    %797 = vmatpush1.msra.mxu0 0.0
    %798 = vmatprep.subr.mxu0 0.0
    %799 = vmatpush1.msra.mxu0 0.0
    %800 = vmatprep.subr.mxu0 0.0
    %801 = vmatpush1.msra.mxu0 0.0
    %802 = vmatprep.mubr.f32.mxu0 0.0
    %803 = vmatmul.mubr.f32.gmra.mrb[0].mxu0 %v736
    %v804 = vpop.f32.mrb[0].mxu0
    %v805 = vadd.f32 0.0, %v804
    %v806 = vpop.f32.mrb[0].mxu0
    %807 = vdwg.mxu0
    %808 = vrot.lane.b32.xlu0 %v291, 112
    %v809 = vpop.permute.xlu0 %808
    %810 = vrot.lane.b32.xlu0 %v291, 80
    %v811 = vpop.permute.xlu0 %810
    %v812 = vsel %vm297, %v809, 0
    %v814 = vsel %vm297, %v811, 0
    %816 = vmatprep.subr.mxu0 0.0
    %817 = vmatpush1.xpose.msra.mxu0 %v814
    %818 = vmatprep.subr.mxu0 0.0
    %819 = vmatpush1.xpose.msra.mxu0 0.0
    %820 = vmatprep.subr.mxu0 0.0
    %821 = vmatpush1.xpose.msra.mxu0 0.0
    %822 = vmatprep.subr.mxu0 0.0
    %823 = vmatpush1.xpose.msra.mxu0 0.0
    %824 = vmatprep.subr.mxu0 0.0
    %825 = vmatpush1.xpose.msra.mxu0 0.0
    %826 = vmatprep.subr.mxu0 0.0
    %827 = vmatpush1.xpose.msra.mxu0 0.0
    %828 = vmatprep.subr.mxu0 0.0
    %829 = vmatpush1.xpose.msra.mxu0 0.0
    %830 = vmatprep.subr.mxu0 0.0
    %831 = vmatpush1.xpose.msra.mxu0 0.0
    %832 = vmatprep.subr.mxu0 0.0
    %833 = vmatpush1.xpose.msra.mxu0 0.0
    %834 = vmatprep.subr.mxu0 0.0
    %835 = vmatpush1.xpose.msra.mxu0 0.0
    %836 = vmatprep.subr.mxu0 0.0
    %837 = vmatpush1.xpose.msra.mxu0 0.0
    %838 = vmatprep.subr.mxu0 0.0
    %839 = vmatpush1.xpose.msra.mxu0 0.0
    %840 = vmatprep.subr.mxu0 0.0
    %841 = vmatpush1.xpose.msra.mxu0 0.0
    %842 = vmatprep.subr.mxu0 0.0
    %843 = vmatpush1.xpose.msra.mxu0 0.0
    %844 = vmatprep.subr.mxu0 0.0
    %845 = vmatpush1.xpose.msra.mxu0 0.0
    %846 = vmatprep.subr.mxu0 0.0
    %847 = vmatpush1.xpose.msra.mxu0 0.0
    %848 = vmatprep.subr.mxu0 0.0
    %849 = vmatpush1.xpose.msra.mxu0 0.0
    %850 = vmatprep.subr.mxu0 0.0
    %851 = vmatpush1.xpose.msra.mxu0 0.0
    %852 = vmatprep.subr.mxu0 0.0
    %853 = vmatpush1.xpose.msra.mxu0 0.0
    %854 = vmatprep.subr.mxu0 0.0
    %855 = vmatpush1.xpose.msra.mxu0 0.0
    %856 = vmatprep.subr.mxu0 0.0
    %857 = vmatpush1.xpose.msra.mxu0 0.0
    %858 = vmatprep.subr.mxu0 0.0
    %859 = vmatpush1.xpose.msra.mxu0 0.0
    %860 = vmatprep.subr.mxu0 0.0
    %861 = vmatpush1.xpose.msra.mxu0 0.0
    %862 = vmatprep.subr.mxu0 0.0
    %863 = vmatpush1.xpose.msra.mxu0 0.0
    %864 = vmatprep.subr.mxu0 0.0
    %865 = vmatpush1.xpose.msra.mxu0 0.0
    %866 = vmatprep.subr.mxu0 0.0
    %867 = vmatpush1.xpose.msra.mxu0 0.0
    %868 = vmatprep.subr.mxu0 0.0
    %869 = vmatpush1.xpose.msra.mxu0 0.0
    %870 = vmatprep.subr.mxu0 0.0
    %871 = vmatpush1.xpose.msra.mxu0 0.0
    %872 = vmatprep.subr.mxu0 0.0
    %873 = vmatpush1.xpose.msra.mxu0 0.0
    %874 = vmatprep.subr.mxu0 0.0
    %875 = vmatpush1.xpose.msra.mxu0 0.0
    %876 = vmatprep.subr.mxu0 0.0
    %877 = vmatpush1.xpose.msra.mxu0 0.0
    %878 = vmatprep.subr.mxu0 0.0
    %879 = vmatpush1.xpose.msra.mxu0 0.0
    %880 = vmatprep.mubr.f32.mxu0 0.0
    %881 = vmatmul.mubr.f32.gmra.mrb[0].mxu0 %v812
    %v882 = vpop.f32.mrb[0].mxu0
    %v883 = vadd.f32 0.0, %v882
    %v884 = vpop.f32.mrb[0].mxu0
    %885 = vdwg.mxu0
    %v886 = vmul.f32 %v883, 0.25
    %v887 = vadd.f32 %v886, %v719
    %v888 = vsel %vm378, %v887, -inf
    %889 = vmax.xlane.f32.xlu0 %v888
    %v890 = vpop.xlane.xlu0 %889
    %v891 = vsub.f32 %v887, %v890
    %v892 = vmul.f32 %v891, 1.442695
    %v893 = vpow.pop %v892
    %v894 = vsel %vm378, %v893, 0.0
    %895 = vadd.xlane.f32.xlu0 %v894
    %v896 = vpop.xlane.xlu0 %895
    %v897 = vrcp.pop %v896
    %v898 = vmul.f32 %v893, %v897
    %899 = vrot.lane.b32.xlu0 %v291, 48
    %v900 = vpop.permute.xlu0 %899
    %v903 = vsel %vm378, %v898, 0
    %905 = vmatprep.subr.mxu0 0.0
    %906 = vmatpush1.msra.mxu0 %v900
    %907 = vmatprep.subr.mxu0 0.0
    %908 = vmatpush1.msra.mxu0 0.0
    %909 = vmatprep.subr.mxu0 0.0
    %910 = vmatpush1.msra.mxu0 0.0
    %911 = vmatprep.subr.mxu0 0.0
    %912 = vmatpush1.msra.mxu0 0.0
    %913 = vmatprep.subr.mxu0 0.0
    %914 = vmatpush1.msra.mxu0 0.0
    %915 = vmatprep.subr.mxu0 0.0
    %916 = vmatpush1.msra.mxu0 0.0
    %917 = vmatprep.subr.mxu0 0.0
    %918 = vmatpush1.msra.mxu0 0.0
    %919 = vmatprep.subr.mxu0 0.0
    %920 = vmatpush1.msra.mxu0 0.0
    %921 = vmatprep.subr.mxu0 0.0
    %922 = vmatpush1.msra.mxu0 0.0
    %923 = vmatprep.subr.mxu0 0.0
    %924 = vmatpush1.msra.mxu0 0.0
    %925 = vmatprep.subr.mxu0 0.0
    %926 = vmatpush1.msra.mxu0 0.0
    %927 = vmatprep.subr.mxu0 0.0
    %928 = vmatpush1.msra.mxu0 0.0
    %929 = vmatprep.subr.mxu0 0.0
    %930 = vmatpush1.msra.mxu0 0.0
    %931 = vmatprep.subr.mxu0 0.0
    %932 = vmatpush1.msra.mxu0 0.0
    %933 = vmatprep.subr.mxu0 0.0
    %934 = vmatpush1.msra.mxu0 0.0
    %935 = vmatprep.subr.mxu0 0.0
    %936 = vmatpush1.msra.mxu0 0.0
    %937 = vmatprep.subr.mxu0 0.0
    %938 = vmatpush1.msra.mxu0 0.0
    %939 = vmatprep.subr.mxu0 0.0
    %940 = vmatpush1.msra.mxu0 0.0
    %941 = vmatprep.subr.mxu0 0.0
    %942 = vmatpush1.msra.mxu0 0.0
    %943 = vmatprep.subr.mxu0 0.0
    %944 = vmatpush1.msra.mxu0 0.0
    %945 = vmatprep.subr.mxu0 0.0
    %946 = vmatpush1.msra.mxu0 0.0
    %947 = vmatprep.subr.mxu0 0.0
    %948 = vmatpush1.msra.mxu0 0.0
    %949 = vmatprep.subr.mxu0 0.0
    %950 = vmatpush1.msra.mxu0 0.0
    %951 = vmatprep.subr.mxu0 0.0
    %952 = vmatpush1.msra.mxu0 0.0
    %953 = vmatprep.subr.mxu0 0.0
    %954 = vmatpush1.msra.mxu0 0.0
    %955 = vmatprep.subr.mxu0 0.0
    %956 = vmatpush1.msra.mxu0 0.0
    %957 = vmatprep.subr.mxu0 0.0
    %958 = vmatpush1.msra.mxu0 0.0
    %959 = vmatprep.subr.mxu0 0.0
    %960 = vmatpush1.msra.mxu0 0.0
    %961 = vmatprep.subr.mxu0 0.0
    %962 = vmatpush1.msra.mxu0 0.0
    %963 = vmatprep.subr.mxu0 0.0
    %964 = vmatpush1.msra.mxu0 0.0
    %965 = vmatprep.subr.mxu0 0.0
    %966 = vmatpush1.msra.mxu0 0.0
    %967 = vmatprep.subr.mxu0 0.0
    %968 = vmatpush1.msra.mxu0 0.0
    %969 = vmatprep.mubr.f32.mxu0 0.0
    %970 = vmatmul.mubr.f32.gmra.mrb[0].mxu0 %v903
    %v971 = vpop.f32.mrb[0].mxu0
    %v972 = vadd.f32 0.0, %v971
    %v973 = vpop.f32.mrb[0].mxu0
    %974 = vdwg.mxu0
    %976 = vrot.lane.b32.xlu0 %v972, 16
    %v977 = vpop.permute.xlu0 %976
    %v979 = vsel %vm297, %v805, %v977
    %v980 = vld [vmem:[%s6] sm:$0xff]
    %v981 = vld [vmem:[%s6 + $0x8] sm:$0xff]
    %v982 = vld [vmem:[%s6 + $0x10] sm:$0xff]
    %v983 = vld [vmem:[%s6 + $0x18] sm:$0xff]
    %v985 = vsel %vm162, %v637, 0
    %v988 = vsel %vm162, %v979, 0
    %990 = vmatprep.subr.mxu0 0.0
    %991 = vmatpush1.msra.mxu0 %v980
    %992 = vmatprep.subr.mxu0 0.0
    %993 = vmatpush1.msra.mxu0 %v981
    %994 = vmatprep.subr.mxu0 0.0
    %995 = vmatpush1.msra.mxu0 %v982
    %996 = vmatprep.subr.mxu0 0.0
    %997 = vmatpush1.msra.mxu0 %v983
    %998 = vmatprep.subr.mxu0 0.0
    %999 = vmatpush1.msra.mxu0 0.0
    %1000 = vmatprep.subr.mxu0 0.0
    %1001 = vmatpush1.msra.mxu0 0.0
    %1002 = vmatprep.subr.mxu0 0.0
    %1003 = vmatpush1.msra.mxu0 0.0
    %1004 = vmatprep.subr.mxu0 0.0
    %1005 = vmatpush1.msra.mxu0 0.0
    %1006 = vmatprep.subr.mxu0 0.0
    %1007 = vmatpush1.msra.mxu0 0.0
    %1008 = vmatprep.subr.mxu0 0.0
    %1009 = vmatpush1.msra.mxu0 0.0
    %1010 = vmatprep.subr.mxu0 0.0
    %1011 = vmatpush1.msra.mxu0 0.0
    %1012 = vmatprep.subr.mxu0 0.0
    %1013 = vmatpush1.msra.mxu0 0.0
    %1014 = vmatprep.subr.mxu0 0.0
    %1015 = vmatpush1.msra.mxu0 0.0
    %1016 = vmatprep.subr.mxu0 0.0
    %1017 = vmatpush1.msra.mxu0 0.0
    %1018 = vmatprep.subr.mxu0 0.0
    %1019 = vmatpush1.msra.mxu0 0.0
    %1020 = vmatprep.subr.mxu0 0.0
    %1021 = vmatpush1.msra.mxu0 0.0
    %1022 = vmatprep.subr.mxu0 0.0
    %1023 = vmatpush1.msra.mxu0 0.0
    %1024 = vmatprep.subr.mxu0 0.0
    %1025 = vmatpush1.msra.mxu0 0.0
    %1026 = vmatprep.subr.mxu0 0.0
    %1027 = vmatpush1.msra.mxu0 0.0
    %1028 = vmatprep.subr.mxu0 0.0
    %1029 = vmatpush1.msra.mxu0 0.0
    %1030 = vmatprep.subr.mxu0 0.0
    %1031 = vmatpush1.msra.mxu0 0.0
    %1032 = vmatprep.subr.mxu0 0.0
    %1033 = vmatpush1.msra.mxu0 0.0
    %1034 = vmatprep.subr.mxu0 0.0
    %1035 = vmatpush1.msra.mxu0 0.0
    %1036 = vmatprep.subr.mxu0 0.0
    %1037 = vmatpush1.msra.mxu0 0.0
    %1038 = vmatprep.subr.mxu0 0.0
    %1039 = vmatpush1.msra.mxu0 0.0
    %1040 = vmatprep.subr.mxu0 0.0
    %1041 = vmatpush1.msra.mxu0 0.0
    %1042 = vmatprep.subr.mxu0 0.0
    %1043 = vmatpush1.msra.mxu0 0.0
    %1044 = vmatprep.subr.mxu0 0.0
    %1045 = vmatpush1.msra.mxu0 0.0
    %1046 = vmatprep.subr.mxu0 0.0
    %1047 = vmatpush1.msra.mxu0 0.0
    %1048 = vmatprep.subr.mxu0 0.0
    %1049 = vmatpush1.msra.mxu0 0.0
    %1050 = vmatprep.subr.mxu0 0.0
    %1051 = vmatpush1.msra.mxu0 0.0
    %1052 = vmatprep.subr.mxu0 0.0
    %1053 = vmatpush1.msra.mxu0 0.0
    %1054 = vmatprep.mubr.f32.mxu0 0.0
    %1055 = vmatmul.mubr.f32.gmra.mrb[0].mxu0 %v985
    %v1056 = vpop.f32.mrb[0].mxu0
    %v1057 = vadd.f32 0.0, %v1056
    %v1058 = vpop.f32.mrb[0].mxu0
    %1059 = vmatprep.mubr.f32.mxu0 0.0
    %1060 = vmatmul.mubr.f32.gmra.mrb[0].mxu0 %v988
    %v1061 = vpop.f32.mrb[0].mxu0
    %v1062 = vadd.f32 0.0, %v1061
    %v1063 = vpop.f32.mrb[0].mxu0
    %1064 = vdwg.mxu0
    %v1065 = vadd.f32 %v151, %v1057
    %v1066 = vadd.f32 %v156, %v1062
    %v1067 = vld [vmem:[%s7] sm:$0x1]
    %v1069 = vlaneseq
    %v1070 = vshrl.u32 %v1069, 7
    %v1071 = vsub.s32 0, %v1070
    %v1072 = vrot.slane %v1067, %v1071
    %v1074 = vadd.f32 %v1065, %v1072
    %v1075 = vadd.f32 %v1066, %v1072
    %v1076 = vsel %vm162, %v1074, 0.0
    %1077 = vadd.xlane.f32.xlu0 %v1076
    %v1078 = vpop.xlane.xlu0 %1077
    %v1079 = vsel %vm162, %v1075, 0.0
    %1080 = vadd.xlane.f32.xlu0 %v1079
    %v1081 = vpop.xlane.xlu0 %1080
    %v1082 = vmul.f32 %v1078, %v169
    %v1083 = vmul.f32 %v1081, %v169
    %v1084 = vsub.f32 %v1074, %v1082
    %v1085 = vsub.f32 %v1075, %v1083
    %v1086 = vmul.f32 %v1084, %v1084
    %v1087 = vmul.f32 %v1085, %v1085
    %v1088 = vsel %vm162, %v1086, 0.0
    %1089 = vadd.xlane.f32.xlu0 %v1088
    %v1090 = vpop.xlane.xlu0 %1089
    %v1091 = vsel %vm162, %v1087, 0.0
    %1092 = vadd.xlane.f32.xlu0 %v1091
    %v1093 = vpop.xlane.xlu0 %1092
    %v1094 = vmul.f32 %v1090, %v169
    %v1095 = vmul.f32 %v1093, %v169
    %v1096 = vadd.f32 %v1094, 1e-05
    %v1097 = vadd.f32 %v1095, 1e-05
    %v1098 = vrsqrt.pop %v1096
    %v1099 = vrsqrt.pop %v1097
    %v1100 = vmul.f32 %v1084, %v1098
    %v1101 = vmul.f32 %v1085, %v1099
    %v1102 = vlaneseq
    %v1103 = vshrl.u32 %v1102, 7
    %v1104 = vsub.s32 2, %v1103
    %v1105 = vrot.slane %v161, %v1104
    %v1106 = vmul.f32 %v1100, %v1105
    %v1107 = vmul.f32 %v1101, %v1105
    %v1108 = vlaneseq
    %v1109 = vshrl.u32 %v1108, 7
    %v1110 = vsub.s32 3, %v1109
    %v1111 = vrot.slane %v161, %v1110
    %v1112 = vadd.f32 %v1106, %v1111
    %v1113 = vadd.f32 %v1107, %v1111
    %v1114 = vld [vmem:[%s8] sm:$0xff]
    %v1115 = vld [vmem:[%s8 + $0x8] sm:$0xff]
    %v1116 = vld [vmem:[%s8 + $0x10] sm:$0xff]
    %v1117 = vld [vmem:[%s8 + $0x18] sm:$0xff]
    %v1118 = vld [vmem:[%s9] sm:$0x1]
    %v1120 = vlaneseq
    %v1121 = vshrl.u32 %v1120, 7
    %v1122 = vsub.s32 0, %v1121
    %v1123 = vrot.slane %v1118, %v1122
    %v1126 = vsel %vm162, %v1112, 0
    %v1129 = vsel %vm162, %v1113, 0
    %1131 = vmatprep.subr.mxu0 0.0
    %1132 = vmatpush1.msra.mxu0 %v1114
    %1133 = vmatprep.subr.mxu0 0.0
    %1134 = vmatpush1.msra.mxu0 %v1115
    %1135 = vmatprep.subr.mxu0 0.0
    %1136 = vmatpush1.msra.mxu0 %v1116
    %1137 = vmatprep.subr.mxu0 0.0
    %1138 = vmatpush1.msra.mxu0 %v1117
    %1139 = vmatprep.subr.mxu0 0.0
    %1140 = vmatpush1.msra.mxu0 0.0
    %1141 = vmatprep.subr.mxu0 0.0
    %1142 = vmatpush1.msra.mxu0 0.0
    %1143 = vmatprep.subr.mxu0 0.0
    %1144 = vmatpush1.msra.mxu0 0.0
    %1145 = vmatprep.subr.mxu0 0.0
    %1146 = vmatpush1.msra.mxu0 0.0
    %1147 = vmatprep.subr.mxu0 0.0
    %1148 = vmatpush1.msra.mxu0 0.0
    %1149 = vmatprep.subr.mxu0 0.0
    %1150 = vmatpush1.msra.mxu0 0.0
    %1151 = vmatprep.subr.mxu0 0.0
    %1152 = vmatpush1.msra.mxu0 0.0
    %1153 = vmatprep.subr.mxu0 0.0
    %1154 = vmatpush1.msra.mxu0 0.0
    %1155 = vmatprep.subr.mxu0 0.0
    %1156 = vmatpush1.msra.mxu0 0.0
    %1157 = vmatprep.subr.mxu0 0.0
    %1158 = vmatpush1.msra.mxu0 0.0
    %1159 = vmatprep.subr.mxu0 0.0
    %1160 = vmatpush1.msra.mxu0 0.0
    %1161 = vmatprep.subr.mxu0 0.0
    %1162 = vmatpush1.msra.mxu0 0.0
    %1163 = vmatprep.subr.mxu0 0.0
    %1164 = vmatpush1.msra.mxu0 0.0
    %1165 = vmatprep.subr.mxu0 0.0
    %1166 = vmatpush1.msra.mxu0 0.0
    %1167 = vmatprep.subr.mxu0 0.0
    %1168 = vmatpush1.msra.mxu0 0.0
    %1169 = vmatprep.subr.mxu0 0.0
    %1170 = vmatpush1.msra.mxu0 0.0
    %1171 = vmatprep.subr.mxu0 0.0
    %1172 = vmatpush1.msra.mxu0 0.0
    %1173 = vmatprep.subr.mxu0 0.0
    %1174 = vmatpush1.msra.mxu0 0.0
    %1175 = vmatprep.subr.mxu0 0.0
    %1176 = vmatpush1.msra.mxu0 0.0
    %1177 = vmatprep.subr.mxu0 0.0
    %1178 = vmatpush1.msra.mxu0 0.0
    %1179 = vmatprep.subr.mxu0 0.0
    %1180 = vmatpush1.msra.mxu0 0.0
    %1181 = vmatprep.subr.mxu0 0.0
    %1182 = vmatpush1.msra.mxu0 0.0
    %1183 = vmatprep.subr.mxu0 0.0
    %1184 = vmatpush1.msra.mxu0 0.0
    %1185 = vmatprep.subr.mxu0 0.0
    %1186 = vmatpush1.msra.mxu0 0.0
    %1187 = vmatprep.subr.mxu0 0.0
    %1188 = vmatpush1.msra.mxu0 0.0
    %1189 = vmatprep.subr.mxu0 0.0
    %1190 = vmatpush1.msra.mxu0 0.0
    %1191 = vmatprep.subr.mxu0 0.0
    %1192 = vmatpush1.msra.mxu0 0.0
    %1193 = vmatprep.subr.mxu0 0.0
    %1194 = vmatpush1.msra.mxu0 0.0
    %1195 = vmatprep.mubr.f32.mxu0 0.0
    %1196 = vmatmul.mubr.f32.gmra.mrb[0].mxu0 %v1126
    %v1197 = vpop.f32.mrb[0].mxu0
    %v1198 = vadd.f32 %v1123, %v1197
    %v1199 = vpop.f32.mrb[0].mxu0
    %1200 = vmatprep.mubr.f32.mxu0 0.0
    %1201 = vmatmul.mubr.f32.gmra.mrb[0].mxu0 %v1129
    %v1202 = vpop.f32.mrb[0].mxu0
    %v1203 = vadd.f32 %v1123, %v1202
    %v1204 = vpop.f32.mrb[0].mxu0
    %1205 = vdwg.mxu0
    %v1206 = vmul.f32 %v1198, %v1198
    %v1207 = vmul.f32 %v1203, %v1203
    %v1208 = vmul.f32 %v1198, %v1206
    %v1209 = vmul.f32 %v1203, %v1207
    %v1210 = vmul.f32 %v1208, 0.044715
    %v1211 = vmul.f32 %v1209, 0.044715
    %v1212 = vadd.f32 %v1198, %v1210
    %v1213 = vadd.f32 %v1203, %v1211
    %v1214 = vmul.f32 %v1212, 0.7978846
    %v1215 = vmul.f32 %v1213, 0.7978846
    %v1216 = vtanh.pop %v1214
    %v1217 = vtanh.pop %v1215
    %v1218 = vadd.f32 %v1216, 1.0
    %v1219 = vadd.f32 %v1217, 1.0
    %v1220 = vmul.f32 %v1218, 0.5
    %v1221 = vmul.f32 %v1219, 0.5
    %v1222 = vmul.f32 %v1198, %v1220
    %v1223 = vmul.f32 %v1203, %v1221
    %v1224 = vld [vmem:[%s10] sm:$0xff]
    %v1225 = vld [vmem:[%s10 + $0x8] sm:$0xff]
    %v1226 = vld [vmem:[%s10 + $0x10] sm:$0xff]
    %v1227 = vld [vmem:[%s10 + $0x18] sm:$0xff]
    %v1228 = vld [vmem:[%s10 + $0x20] sm:$0xff]
    %v1229 = vld [vmem:[%s10 + $0x28] sm:$0xff]
    %v1230 = vld [vmem:[%s10 + $0x30] sm:$0xff]
    %v1231 = vld [vmem:[%s10 + $0x38] sm:$0xff]
    %v1232 = vld [vmem:[%s10 + $0x40] sm:$0xff]
    %v1233 = vld [vmem:[%s10 + $0x48] sm:$0xff]
    %v1234 = vld [vmem:[%s10 + $0x50] sm:$0xff]
    %v1235 = vld [vmem:[%s10 + $0x58] sm:$0xff]
    %v1236 = vld [vmem:[%s10 + $0x60] sm:$0xff]
    %v1237 = vld [vmem:[%s10 + $0x68] sm:$0xff]
    %v1238 = vld [vmem:[%s10 + $0x70] sm:$0xff]
    %v1239 = vld [vmem:[%s10 + $0x78] sm:$0xff]
    %1240 = vmatprep.subr.mxu0 0.0
    %1241 = vmatpush1.msra.mxu0 %v1224
    %1242 = vmatprep.subr.mxu0 0.0
    %1243 = vmatpush1.msra.mxu0 %v1225
    %1244 = vmatprep.subr.mxu0 0.0
    %1245 = vmatpush1.msra.mxu0 %v1226
    %1246 = vmatprep.subr.mxu0 0.0
    %1247 = vmatpush1.msra.mxu0 %v1227
    %1248 = vmatprep.subr.mxu0 0.0
    %1249 = vmatpush1.msra.mxu0 %v1228
    %1250 = vmatprep.subr.mxu0 0.0
    %1251 = vmatpush1.msra.mxu0 %v1229
    %1252 = vmatprep.subr.mxu0 0.0
    %1253 = vmatpush1.msra.mxu0 %v1230
    %1254 = vmatprep.subr.mxu0 0.0
    %1255 = vmatpush1.msra.mxu0 %v1231
    %1256 = vmatprep.subr.mxu0 0.0
    %1257 = vmatpush1.msra.mxu0 %v1232
    %1258 = vmatprep.subr.mxu0 0.0
    %1259 = vmatpush1.msra.mxu0 %v1233
    %1260 = vmatprep.subr.mxu0 0.0
    %1261 = vmatpush1.msra.mxu0 %v1234
    %1262 = vmatprep.subr.mxu0 0.0
    %1263 = vmatpush1.msra.mxu0 %v1235
    %1264 = vmatprep.subr.mxu0 0.0
    %1265 = vmatpush1.msra.mxu0 %v1236
    %1266 = vmatprep.subr.mxu0 0.0
    %1267 = vmatpush1.msra.mxu0 %v1237
    %1268 = vmatprep.subr.mxu0 0.0
    %1269 = vmatpush1.msra.mxu0 %v1238
    %1270 = vmatprep.subr.mxu0 0.0
    %1271 = vmatpush1.msra.mxu0 %v1239
    %1272 = vmatprep.subr.mxu0 0.0
    %1273 = vmatpush1.msra.mxu0 0.0
    %1274 = vmatprep.subr.mxu0 0.0
    %1275 = vmatpush1.msra.mxu0 0.0
    %1276 = vmatprep.subr.mxu0 0.0
    %1277 = vmatpush1.msra.mxu0 0.0
    %1278 = vmatprep.subr.mxu0 0.0
    %1279 = vmatpush1.msra.mxu0 0.0
    %1280 = vmatprep.subr.mxu0 0.0
    %1281 = vmatpush1.msra.mxu0 0.0
    %1282 = vmatprep.subr.mxu0 0.0
    %1283 = vmatpush1.msra.mxu0 0.0
    %1284 = vmatprep.subr.mxu0 0.0
    %1285 = vmatpush1.msra.mxu0 0.0
    %1286 = vmatprep.subr.mxu0 0.0
    %1287 = vmatpush1.msra.mxu0 0.0
    %1288 = vmatprep.subr.mxu0 0.0
    %1289 = vmatpush1.msra.mxu0 0.0
    %1290 = vmatprep.subr.mxu0 0.0
    %1291 = vmatpush1.msra.mxu0 0.0
    %1292 = vmatprep.subr.mxu0 0.0
    %1293 = vmatpush1.msra.mxu0 0.0
    %1294 = vmatprep.subr.mxu0 0.0
    %1295 = vmatpush1.msra.mxu0 0.0
    %1296 = vmatprep.subr.mxu0 0.0
    %1297 = vmatpush1.msra.mxu0 0.0
    %1298 = vmatprep.subr.mxu0 0.0
    %1299 = vmatpush1.msra.mxu0 0.0
    %1300 = vmatprep.subr.mxu0 0.0
    %1301 = vmatpush1.msra.mxu0 0.0
    %1302 = vmatprep.subr.mxu0 0.0
    %1303 = vmatpush1.msra.mxu0 0.0
    %1304 = vmatprep.mubr.f32.mxu0 0.0
    %1305 = vmatmul.mubr.f32.gmra.mrb[0].mxu0 %v1222
    %v1306 = vpop.f32.mrb[0].mxu0
    %v1307 = vadd.f32 0.0, %v1306
    %v1308 = vpop.f32.mrb[0].mxu0
    %1309 = vmatprep.mubr.f32.mxu0 0.0
    %1310 = vmatmul.mubr.f32.gmra.mrb[0].mxu0 %v1223
    %v1311 = vpop.f32.mrb[0].mxu0
    %v1312 = vadd.f32 0.0, %v1311
    %v1313 = vpop.f32.mrb[0].mxu0
    %1314 = vdwg.mxu0
    %v1315 = vadd.f32 %v1074, %v1307
    %v1316 = vadd.f32 %v1075, %v1312
    %v1317 = vld [vmem:[%s11] sm:$0x1]
    %v1319 = vlaneseq
    %v1320 = vshrl.u32 %v1319, 7
    %v1321 = vsub.s32 0, %v1320
    %v1322 = vrot.slane %v1317, %v1321
    %v1324 = vadd.f32 %v1315, %v1322
    %v1325 = vadd.f32 %v1316, %v1322
    %s1326 = scalar_lea.vmem %s12, 4
    %v1327 = vld [vmem:[%s1326] sm:$0xf]
    %v1328 = vsel %vm162, %v1324, 0.0
    %1329 = vadd.xlane.f32.xlu0 %v1328
    %v1330 = vpop.xlane.xlu0 %1329
    %v1331 = vsel %vm162, %v1325, 0.0
    %1332 = vadd.xlane.f32.xlu0 %v1331
    %v1333 = vpop.xlane.xlu0 %1332
    %v1334 = vmul.f32 %v1330, %v169
    %v1335 = vmul.f32 %v1333, %v169
    %v1336 = vsub.f32 %v1324, %v1334
    %v1337 = vsub.f32 %v1325, %v1335
    %v1338 = vmul.f32 %v1336, %v1336
    %v1339 = vmul.f32 %v1337, %v1337
    %v1340 = vsel %vm162, %v1338, 0.0
    %1341 = vadd.xlane.f32.xlu0 %v1340
    %v1342 = vpop.xlane.xlu0 %1341
    %v1343 = vsel %vm162, %v1339, 0.0
    %1344 = vadd.xlane.f32.xlu0 %v1343
    %v1345 = vpop.xlane.xlu0 %1344
    %v1346 = vmul.f32 %v1342, %v169
    %v1347 = vmul.f32 %v1345, %v169
    %v1348 = vadd.f32 %v1346, 1e-05
    %v1349 = vadd.f32 %v1347, 1e-05
    %v1350 = vrsqrt.pop %v1348
    %v1351 = vrsqrt.pop %v1349
    %v1352 = vmul.f32 %v1336, %v1350
    %v1353 = vmul.f32 %v1337, %v1351
    %v1354 = vlaneseq
    %v1355 = vshrl.u32 %v1354, 7
    %v1356 = vsub.s32 0, %v1355
    %v1357 = vrot.slane %v1327, %v1356
    %v1358 = vmul.f32 %v1352, %v1357
    %v1359 = vmul.f32 %v1353, %v1357
    %v1360 = vlaneseq
    %v1361 = vshrl.u32 %v1360, 7
    %v1362 = vsub.s32 1, %v1361
    %v1363 = vrot.slane %v1327, %v1362
    %v1364 = vadd.f32 %v1358, %v1363
    %v1365 = vadd.f32 %v1359, %v1363
    %s1366 = scalar_lea.vmem %s4, 32
    %v1367 = vld [vmem:[%s1366] sm:$0xff]
    %v1368 = vld [vmem:[%s1366 + $0x8] sm:$0xff]
    %v1369 = vld [vmem:[%s1366 + $0x10] sm:$0xff]
    %v1370 = vld [vmem:[%s1366 + $0x18] sm:$0xff]
    %s1371 = scalar_lea.vmem %s5, 1
    %v1372 = vld [vmem:[%s1371] sm:$0x1]
    %v1374 = vlaneseq
    %v1375 = vshrl.u32 %v1374, 7
    %v1376 = vsub.s32 0, %v1375
    %v1377 = vrot.slane %v1372, %v1376
    %v1380 = vsel %vm162, %v1364, 0
    %v1383 = vsel %vm162, %v1365, 0
    %1385 = vmatprep.subr.mxu0 0.0
    %1386 = vmatpush1.msra.mxu0 %v1367
    %1387 = vmatprep.subr.mxu0 0.0
    %1388 = vmatpush1.msra.mxu0 %v1368
    %1389 = vmatprep.subr.mxu0 0.0
    %1390 = vmatpush1.msra.mxu0 %v1369
    %1391 = vmatprep.subr.mxu0 0.0
    %1392 = vmatpush1.msra.mxu0 %v1370
    %1393 = vmatprep.subr.mxu0 0.0
    %1394 = vmatpush1.msra.mxu0 0.0
    %1395 = vmatprep.subr.mxu0 0.0
    %1396 = vmatpush1.msra.mxu0 0.0
    %1397 = vmatprep.subr.mxu0 0.0
    %1398 = vmatpush1.msra.mxu0 0.0
    %1399 = vmatprep.subr.mxu0 0.0
    %1400 = vmatpush1.msra.mxu0 0.0
    %1401 = vmatprep.subr.mxu0 0.0
    %1402 = vmatpush1.msra.mxu0 0.0
    %1403 = vmatprep.subr.mxu0 0.0
    %1404 = vmatpush1.msra.mxu0 0.0
    %1405 = vmatprep.subr.mxu0 0.0
    %1406 = vmatpush1.msra.mxu0 0.0
    %1407 = vmatprep.subr.mxu0 0.0
    %1408 = vmatpush1.msra.mxu0 0.0
    %1409 = vmatprep.subr.mxu0 0.0
    %1410 = vmatpush1.msra.mxu0 0.0
    %1411 = vmatprep.subr.mxu0 0.0
    %1412 = vmatpush1.msra.mxu0 0.0
    %1413 = vmatprep.subr.mxu0 0.0
    %1414 = vmatpush1.msra.mxu0 0.0
    %1415 = vmatprep.subr.mxu0 0.0
    %1416 = vmatpush1.msra.mxu0 0.0
    %1417 = vmatprep.subr.mxu0 0.0
    %1418 = vmatpush1.msra.mxu0 0.0
    %1419 = vmatprep.subr.mxu0 0.0
    %1420 = vmatpush1.msra.mxu0 0.0
    %1421 = vmatprep.subr.mxu0 0.0
    %1422 = vmatpush1.msra.mxu0 0.0
    %1423 = vmatprep.subr.mxu0 0.0
    %1424 = vmatpush1.msra.mxu0 0.0
    %1425 = vmatprep.subr.mxu0 0.0
    %1426 = vmatpush1.msra.mxu0 0.0
    %1427 = vmatprep.subr.mxu0 0.0
    %1428 = vmatpush1.msra.mxu0 0.0
    %1429 = vmatprep.subr.mxu0 0.0
    %1430 = vmatpush1.msra.mxu0 0.0
    %1431 = vmatprep.subr.mxu0 0.0
    %1432 = vmatpush1.msra.mxu0 0.0
    %1433 = vmatprep.subr.mxu0 0.0
    %1434 = vmatpush1.msra.mxu0 0.0
    %1435 = vmatprep.subr.mxu0 0.0
    %1436 = vmatpush1.msra.mxu0 0.0
    %1437 = vmatprep.subr.mxu0 0.0
    %1438 = vmatpush1.msra.mxu0 0.0
    %1439 = vmatprep.subr.mxu0 0.0
    %1440 = vmatpush1.msra.mxu0 0.0
    %1441 = vmatprep.subr.mxu0 0.0
    %1442 = vmatpush1.msra.mxu0 0.0
    %1443 = vmatprep.subr.mxu0 0.0
    %1444 = vmatpush1.msra.mxu0 0.0
    %1445 = vmatprep.subr.mxu0 0.0
    %1446 = vmatpush1.msra.mxu0 0.0
    %1447 = vmatprep.subr.mxu0 0.0
    %1448 = vmatpush1.msra.mxu0 0.0
    %1449 = vmatprep.mubr.f32.mxu0 0.0
    %1450 = vmatmul.mubr.f32.gmra.mrb[0].mxu0 %v1380
    %v1451 = vpop.f32.mrb[0].mxu0
    %v1452 = vadd.f32 %v1377, %v1451
    %v1453 = vpop.f32.mrb[0].mxu0
    %1454 = vmatprep.mubr.f32.mxu0 0.0
    %1455 = vmatmul.mubr.f32.gmra.mrb[0].mxu0 %v1383
    %v1456 = vpop.f32.mrb[0].mxu0
    %v1457 = vadd.f32 %v1377, %v1456
    %v1458 = vpop.f32.mrb[0].mxu0
    %1459 = vdwg.mxu0
    %1461 = vrot.lane.b32.xlu0 %v1452, 96
    %v1462 = vpop.permute.xlu0 %1461
    %v1463 = vsel %vm297, %v1452, 0
    %v1465 = vsel %vm297, %v1462, 0
    %1467 = vmatprep.subr.mxu0 0.0
    %1468 = vmatpush1.xpose.msra.mxu0 %v1465
    %1469 = vmatprep.subr.mxu0 0.0
    %1470 = vmatpush1.xpose.msra.mxu0 0.0
    %1471 = vmatprep.subr.mxu0 0.0
    %1472 = vmatpush1.xpose.msra.mxu0 0.0
    %1473 = vmatprep.subr.mxu0 0.0
    %1474 = vmatpush1.xpose.msra.mxu0 0.0
    %1475 = vmatprep.subr.mxu0 0.0
    %1476 = vmatpush1.xpose.msra.mxu0 0.0
    %1477 = vmatprep.subr.mxu0 0.0
    %1478 = vmatpush1.xpose.msra.mxu0 0.0
    %1479 = vmatprep.subr.mxu0 0.0
    %1480 = vmatpush1.xpose.msra.mxu0 0.0
    %1481 = vmatprep.subr.mxu0 0.0
    %1482 = vmatpush1.xpose.msra.mxu0 0.0
    %1483 = vmatprep.subr.mxu0 0.0
    %1484 = vmatpush1.xpose.msra.mxu0 0.0
    %1485 = vmatprep.subr.mxu0 0.0
    %1486 = vmatpush1.xpose.msra.mxu0 0.0
    %1487 = vmatprep.subr.mxu0 0.0
    %1488 = vmatpush1.xpose.msra.mxu0 0.0
    %1489 = vmatprep.subr.mxu0 0.0
    %1490 = vmatpush1.xpose.msra.mxu0 0.0
    %1491 = vmatprep.subr.mxu0 0.0
    %1492 = vmatpush1.xpose.msra.mxu0 0.0
    %1493 = vmatprep.subr.mxu0 0.0
    %1494 = vmatpush1.xpose.msra.mxu0 0.0
    %1495 = vmatprep.subr.mxu0 0.0
    %1496 = vmatpush1.xpose.msra.mxu0 0.0
    %1497 = vmatprep.subr.mxu0 0.0
    %1498 = vmatpush1.xpose.msra.mxu0 0.0
    %1499 = vmatprep.subr.mxu0 0.0
    %1500 = vmatpush1.xpose.msra.mxu0 0.0
    %1501 = vmatprep.subr.mxu0 0.0
    %1502 = vmatpush1.xpose.msra.mxu0 0.0
    %1503 = vmatprep.subr.mxu0 0.0
    %1504 = vmatpush1.xpose.msra.mxu0 0.0
    %1505 = vmatprep.subr.mxu0 0.0
    %1506 = vmatpush1.xpose.msra.mxu0 0.0
    %1507 = vmatprep.subr.mxu0 0.0
    %1508 = vmatpush1.xpose.msra.mxu0 0.0
    %1509 = vmatprep.subr.mxu0 0.0
    %1510 = vmatpush1.xpose.msra.mxu0 0.0
    %1511 = vmatprep.subr.mxu0 0.0
    %1512 = vmatpush1.xpose.msra.mxu0 0.0
    %1513 = vmatprep.subr.mxu0 0.0
    %1514 = vmatpush1.xpose.msra.mxu0 0.0
    %1515 = vmatprep.subr.mxu0 0.0
    %1516 = vmatpush1.xpose.msra.mxu0 0.0
    %1517 = vmatprep.subr.mxu0 0.0
    %1518 = vmatpush1.xpose.msra.mxu0 0.0
    %1519 = vmatprep.subr.mxu0 0.0
    %1520 = vmatpush1.xpose.msra.mxu0 0.0
    %1521 = vmatprep.subr.mxu0 0.0
    %1522 = vmatpush1.xpose.msra.mxu0 0.0
    %1523 = vmatprep.subr.mxu0 0.0
    %1524 = vmatpush1.xpose.msra.mxu0 0.0
    %1525 = vmatprep.subr.mxu0 0.0
    %1526 = vmatpush1.xpose.msra.mxu0 0.0
    %1527 = vmatprep.subr.mxu0 0.0
    %1528 = vmatpush1.xpose.msra.mxu0 0.0
    %1529 = vmatprep.subr.mxu0 0.0
    %1530 = vmatpush1.xpose.msra.mxu0 0.0
    %1531 = vmatprep.mubr.f32.mxu0 0.0
    %1532 = vmatmul.mubr.f32.gmra.mrb[0].mxu0 %v1463
    %v1533 = vpop.f32.mrb[0].mxu0
    %v1534 = vadd.f32 0.0, %v1533
    %v1535 = vpop.f32.mrb[0].mxu0
    %1536 = vdwg.mxu0
    %v1537 = vmul.f32 %v1534, 0.25
    %v1538 = vadd.f32 %v1537, %v376
    %v1539 = vsel %vm378, %v1538, -inf
    %1540 = vmax.xlane.f32.xlu0 %v1539
    %v1541 = vpop.xlane.xlu0 %1540
    %v1542 = vsub.f32 %v1538, %v1541
    %v1543 = vmul.f32 %v1542, 1.442695
    %v1544 = vpow.pop %v1543
    %v1545 = vsel %vm378, %v1544, 0.0
    %1546 = vadd.xlane.f32.xlu0 %v1545
    %v1547 = vpop.xlane.xlu0 %1546
    %v1548 = vrcp.pop %v1547
    %v1549 = vmul.f32 %v1544, %v1548
    %1550 = vrot.lane.b32.xlu0 %v1452, 64
    %v1551 = vpop.permute.xlu0 %1550
    %v1554 = vsel %vm378, %v1549, 0
    %1556 = vmatprep.subr.mxu0 0.0
    %1557 = vmatpush1.msra.mxu0 %v1551
    %1558 = vmatprep.subr.mxu0 0.0
    %1559 = vmatpush1.msra.mxu0 0.0
    %1560 = vmatprep.subr.mxu0 0.0
    %1561 = vmatpush1.msra.mxu0 0.0
    %1562 = vmatprep.subr.mxu0 0.0
    %1563 = vmatpush1.msra.mxu0 0.0
    %1564 = vmatprep.subr.mxu0 0.0
    %1565 = vmatpush1.msra.mxu0 0.0
    %1566 = vmatprep.subr.mxu0 0.0
    %1567 = vmatpush1.msra.mxu0 0.0
    %1568 = vmatprep.subr.mxu0 0.0
    %1569 = vmatpush1.msra.mxu0 0.0
    %1570 = vmatprep.subr.mxu0 0.0
    %1571 = vmatpush1.msra.mxu0 0.0
    %1572 = vmatprep.subr.mxu0 0.0
    %1573 = vmatpush1.msra.mxu0 0.0
    %1574 = vmatprep.subr.mxu0 0.0
    %1575 = vmatpush1.msra.mxu0 0.0
    %1576 = vmatprep.subr.mxu0 0.0
    %1577 = vmatpush1.msra.mxu0 0.0
    %1578 = vmatprep.subr.mxu0 0.0
    %1579 = vmatpush1.msra.mxu0 0.0
    %1580 = vmatprep.subr.mxu0 0.0
    %1581 = vmatpush1.msra.mxu0 0.0
    %1582 = vmatprep.subr.mxu0 0.0
    %1583 = vmatpush1.msra.mxu0 0.0
    %1584 = vmatprep.subr.mxu0 0.0
    %1585 = vmatpush1.msra.mxu0 0.0
    %1586 = vmatprep.subr.mxu0 0.0
    %1587 = vmatpush1.msra.mxu0 0.0
    %1588 = vmatprep.subr.mxu0 0.0
    %1589 = vmatpush1.msra.mxu0 0.0
    %1590 = vmatprep.subr.mxu0 0.0
    %1591 = vmatpush1.msra.mxu0 0.0
    %1592 = vmatprep.subr.mxu0 0.0
    %1593 = vmatpush1.msra.mxu0 0.0
    %1594 = vmatprep.subr.mxu0 0.0
    %1595 = vmatpush1.msra.mxu0 0.0
    %1596 = vmatprep.subr.mxu0 0.0
    %1597 = vmatpush1.msra.mxu0 0.0
    %1598 = vmatprep.subr.mxu0 0.0
    %1599 = vmatpush1.msra.mxu0 0.0
    %1600 = vmatprep.subr.mxu0 0.0
    %1601 = vmatpush1.msra.mxu0 0.0
    %1602 = vmatprep.subr.mxu0 0.0
    %1603 = vmatpush1.msra.mxu0 0.0
    %1604 = vmatprep.subr.mxu0 0.0
    %1605 = vmatpush1.msra.mxu0 0.0
    %1606 = vmatprep.subr.mxu0 0.0
    %1607 = vmatpush1.msra.mxu0 0.0
    %1608 = vmatprep.subr.mxu0 0.0
    %1609 = vmatpush1.msra.mxu0 0.0
    %1610 = vmatprep.subr.mxu0 0.0
    %1611 = vmatpush1.msra.mxu0 0.0
    %1612 = vmatprep.subr.mxu0 0.0
    %1613 = vmatpush1.msra.mxu0 0.0
    %1614 = vmatprep.subr.mxu0 0.0
    %1615 = vmatpush1.msra.mxu0 0.0
    %1616 = vmatprep.subr.mxu0 0.0
    %1617 = vmatpush1.msra.mxu0 0.0
    %1618 = vmatprep.subr.mxu0 0.0
    %1619 = vmatpush1.msra.mxu0 0.0
    %1620 = vmatprep.mubr.f32.mxu0 0.0
    %1621 = vmatmul.mubr.f32.gmra.mrb[0].mxu0 %v1554
    %v1622 = vpop.f32.mrb[0].mxu0
    %v1623 = vadd.f32 0.0, %v1622
    %v1624 = vpop.f32.mrb[0].mxu0
    %1625 = vdwg.mxu0
    %1626 = vrot.lane.b32.xlu0 %v1452, 112
    %v1627 = vpop.permute.xlu0 %1626
    %1628 = vrot.lane.b32.xlu0 %v1452, 80
    %v1629 = vpop.permute.xlu0 %1628
    %v1630 = vsel %vm297, %v1627, 0
    %v1632 = vsel %vm297, %v1629, 0
    %1634 = vmatprep.subr.mxu0 0.0
    %1635 = vmatpush1.xpose.msra.mxu0 %v1632
    %1636 = vmatprep.subr.mxu0 0.0
    %1637 = vmatpush1.xpose.msra.mxu0 0.0
    %1638 = vmatprep.subr.mxu0 0.0
    %1639 = vmatpush1.xpose.msra.mxu0 0.0
    %1640 = vmatprep.subr.mxu0 0.0
    %1641 = vmatpush1.xpose.msra.mxu0 0.0
    %1642 = vmatprep.subr.mxu0 0.0
    %1643 = vmatpush1.xpose.msra.mxu0 0.0
    %1644 = vmatprep.subr.mxu0 0.0
    %1645 = vmatpush1.xpose.msra.mxu0 0.0
    %1646 = vmatprep.subr.mxu0 0.0
    %1647 = vmatpush1.xpose.msra.mxu0 0.0
    %1648 = vmatprep.subr.mxu0 0.0
    %1649 = vmatpush1.xpose.msra.mxu0 0.0
    %1650 = vmatprep.subr.mxu0 0.0
    %1651 = vmatpush1.xpose.msra.mxu0 0.0
    %1652 = vmatprep.subr.mxu0 0.0
    %1653 = vmatpush1.xpose.msra.mxu0 0.0
    %1654 = vmatprep.subr.mxu0 0.0
    %1655 = vmatpush1.xpose.msra.mxu0 0.0
    %1656 = vmatprep.subr.mxu0 0.0
    %1657 = vmatpush1.xpose.msra.mxu0 0.0
    %1658 = vmatprep.subr.mxu0 0.0
    %1659 = vmatpush1.xpose.msra.mxu0 0.0
    %1660 = vmatprep.subr.mxu0 0.0
    %1661 = vmatpush1.xpose.msra.mxu0 0.0
    %1662 = vmatprep.subr.mxu0 0.0
    %1663 = vmatpush1.xpose.msra.mxu0 0.0
    %1664 = vmatprep.subr.mxu0 0.0
    %1665 = vmatpush1.xpose.msra.mxu0 0.0
    %1666 = vmatprep.subr.mxu0 0.0
    %1667 = vmatpush1.xpose.msra.mxu0 0.0
    %1668 = vmatprep.subr.mxu0 0.0
    %1669 = vmatpush1.xpose.msra.mxu0 0.0
    %1670 = vmatprep.subr.mxu0 0.0
    %1671 = vmatpush1.xpose.msra.mxu0 0.0
    %1672 = vmatprep.subr.mxu0 0.0
    %1673 = vmatpush1.xpose.msra.mxu0 0.0
    %1674 = vmatprep.subr.mxu0 0.0
    %1675 = vmatpush1.xpose.msra.mxu0 0.0
    %1676 = vmatprep.subr.mxu0 0.0
    %1677 = vmatpush1.xpose.msra.mxu0 0.0
    %1678 = vmatprep.subr.mxu0 0.0
    %1679 = vmatpush1.xpose.msra.mxu0 0.0
    %1680 = vmatprep.subr.mxu0 0.0
    %1681 = vmatpush1.xpose.msra.mxu0 0.0
    %1682 = vmatprep.subr.mxu0 0.0
    %1683 = vmatpush1.xpose.msra.mxu0 0.0
    %1684 = vmatprep.subr.mxu0 0.0
    %1685 = vmatpush1.xpose.msra.mxu0 0.0
    %1686 = vmatprep.subr.mxu0 0.0
    %1687 = vmatpush1.xpose.msra.mxu0 0.0
    %1688 = vmatprep.subr.mxu0 0.0
    %1689 = vmatpush1.xpose.msra.mxu0 0.0
    %1690 = vmatprep.subr.mxu0 0.0
    %1691 = vmatpush1.xpose.msra.mxu0 0.0
    %1692 = vmatprep.subr.mxu0 0.0
    %1693 = vmatpush1.xpose.msra.mxu0 0.0
    %1694 = vmatprep.subr.mxu0 0.0
    %1695 = vmatpush1.xpose.msra.mxu0 0.0
    %1696 = vmatprep.subr.mxu0 0.0
    %1697 = vmatpush1.xpose.msra.mxu0 0.0
    %1698 = vmatprep.mubr.f32.mxu0 0.0
    %1699 = vmatmul.mubr.f32.gmra.mrb[0].mxu0 %v1630
    %v1700 = vpop.f32.mrb[0].mxu0
    %v1701 = vadd.f32 0.0, %v1700
    %v1702 = vpop.f32.mrb[0].mxu0
    %1703 = vdwg.mxu0
    %v1704 = vmul.f32 %v1701, 0.25
    %v1705 = vadd.f32 %v1704, %v376
    %v1706 = vsel %vm378, %v1705, -inf
    %1707 = vmax.xlane.f32.xlu0 %v1706
    %v1708 = vpop.xlane.xlu0 %1707
    %v1709 = vsub.f32 %v1705, %v1708
    %v1710 = vmul.f32 %v1709, 1.442695
    %v1711 = vpow.pop %v1710
    %v1712 = vsel %vm378, %v1711, 0.0
    %1713 = vadd.xlane.f32.xlu0 %v1712
    %v1714 = vpop.xlane.xlu0 %1713
    %v1715 = vrcp.pop %v1714
    %v1716 = vmul.f32 %v1711, %v1715
    %1717 = vrot.lane.b32.xlu0 %v1452, 48
    %v1718 = vpop.permute.xlu0 %1717
    %v1721 = vsel %vm378, %v1716, 0
    %1723 = vmatprep.subr.mxu0 0.0
    %1724 = vmatpush1.msra.mxu0 %v1718
    %1725 = vmatprep.subr.mxu0 0.0
    %1726 = vmatpush1.msra.mxu0 0.0
    %1727 = vmatprep.subr.mxu0 0.0
    %1728 = vmatpush1.msra.mxu0 0.0
    %1729 = vmatprep.subr.mxu0 0.0
    %1730 = vmatpush1.msra.mxu0 0.0
    %1731 = vmatprep.subr.mxu0 0.0
    %1732 = vmatpush1.msra.mxu0 0.0
    %1733 = vmatprep.subr.mxu0 0.0
    %1734 = vmatpush1.msra.mxu0 0.0
    %1735 = vmatprep.subr.mxu0 0.0
    %1736 = vmatpush1.msra.mxu0 0.0
    %1737 = vmatprep.subr.mxu0 0.0
    %1738 = vmatpush1.msra.mxu0 0.0
    %1739 = vmatprep.subr.mxu0 0.0
    %1740 = vmatpush1.msra.mxu0 0.0
    %1741 = vmatprep.subr.mxu0 0.0
    %1742 = vmatpush1.msra.mxu0 0.0
    %1743 = vmatprep.subr.mxu0 0.0
    %1744 = vmatpush1.msra.mxu0 0.0
    %1745 = vmatprep.subr.mxu0 0.0
    %1746 = vmatpush1.msra.mxu0 0.0
    %1747 = vmatprep.subr.mxu0 0.0
    %1748 = vmatpush1.msra.mxu0 0.0
    %1749 = vmatprep.subr.mxu0 0.0
    %1750 = vmatpush1.msra.mxu0 0.0
    %1751 = vmatprep.subr.mxu0 0.0
    %1752 = vmatpush1.msra.mxu0 0.0
    %1753 = vmatprep.subr.mxu0 0.0
    %1754 = vmatpush1.msra.mxu0 0.0
    %1755 = vmatprep.subr.mxu0 0.0
    %1756 = vmatpush1.msra.mxu0 0.0
    %1757 = vmatprep.subr.mxu0 0.0
    %1758 = vmatpush1.msra.mxu0 0.0
    %1759 = vmatprep.subr.mxu0 0.0
    %1760 = vmatpush1.msra.mxu0 0.0
    %1761 = vmatprep.subr.mxu0 0.0
    %1762 = vmatpush1.msra.mxu0 0.0
    %1763 = vmatprep.subr.mxu0 0.0
    %1764 = vmatpush1.msra.mxu0 0.0
    %1765 = vmatprep.subr.mxu0 0.0
    %1766 = vmatpush1.msra.mxu0 0.0
    %1767 = vmatprep.subr.mxu0 0.0
    %1768 = vmatpush1.msra.mxu0 0.0
    %1769 = vmatprep.subr.mxu0 0.0
    %1770 = vmatpush1.msra.mxu0 0.0
    %1771 = vmatprep.subr.mxu0 0.0
    %1772 = vmatpush1.msra.mxu0 0.0
    %1773 = vmatprep.subr.mxu0 0.0
    %1774 = vmatpush1.msra.mxu0 0.0
    %1775 = vmatprep.subr.mxu0 0.0
    %1776 = vmatpush1.msra.mxu0 0.0
    %1777 = vmatprep.subr.mxu0 0.0
    %1778 = vmatpush1.msra.mxu0 0.0
    %1779 = vmatprep.subr.mxu0 0.0
    %1780 = vmatpush1.msra.mxu0 0.0
    %1781 = vmatprep.subr.mxu0 0.0
    %1782 = vmatpush1.msra.mxu0 0.0
    %1783 = vmatprep.subr.mxu0 0.0
    %1784 = vmatpush1.msra.mxu0 0.0
    %1785 = vmatprep.subr.mxu0 0.0
    %1786 = vmatpush1.msra.mxu0 0.0
    %1787 = vmatprep.mubr.f32.mxu0 0.0
    %1788 = vmatmul.mubr.f32.gmra.mrb[0].mxu0 %v1721
    %v1789 = vpop.f32.mrb[0].mxu0
    %v1790 = vadd.f32 0.0, %v1789
    %v1791 = vpop.f32.mrb[0].mxu0
    %1792 = vdwg.mxu0
    %1794 = vrot.lane.b32.xlu0 %v1790, 16
    %v1795 = vpop.permute.xlu0 %1794
    %v1797 = vsel %vm297, %v1623, %v1795
    %1799 = vrot.lane.b32.xlu0 %v1457, 96
    %v1800 = vpop.permute.xlu0 %1799
    %v1801 = vsel %vm297, %v1457, 0
    %v1803 = vsel %vm297, %v1800, 0
    %1805 = vmatprep.subr.mxu0 0.0
    %1806 = vmatpush1.xpose.msra.mxu0 %v1803
    %1807 = vmatprep.subr.mxu0 0.0
    %1808 = vmatpush1.xpose.msra.mxu0 0.0
    %1809 = vmatprep.subr.mxu0 0.0
    %1810 = vmatpush1.xpose.msra.mxu0 0.0
    %1811 = vmatprep.subr.mxu0 0.0
    %1812 = vmatpush1.xpose.msra.mxu0 0.0
    %1813 = vmatprep.subr.mxu0 0.0
    %1814 = vmatpush1.xpose.msra.mxu0 0.0
    %1815 = vmatprep.subr.mxu0 0.0
    %1816 = vmatpush1.xpose.msra.mxu0 0.0
    %1817 = vmatprep.subr.mxu0 0.0
    %1818 = vmatpush1.xpose.msra.mxu0 0.0
    %1819 = vmatprep.subr.mxu0 0.0
    %1820 = vmatpush1.xpose.msra.mxu0 0.0
    %1821 = vmatprep.subr.mxu0 0.0
    %1822 = vmatpush1.xpose.msra.mxu0 0.0
    %1823 = vmatprep.subr.mxu0 0.0
    %1824 = vmatpush1.xpose.msra.mxu0 0.0
    %1825 = vmatprep.subr.mxu0 0.0
    %1826 = vmatpush1.xpose.msra.mxu0 0.0
    %1827 = vmatprep.subr.mxu0 0.0
    %1828 = vmatpush1.xpose.msra.mxu0 0.0
    %1829 = vmatprep.subr.mxu0 0.0
    %1830 = vmatpush1.xpose.msra.mxu0 0.0
    %1831 = vmatprep.subr.mxu0 0.0
    %1832 = vmatpush1.xpose.msra.mxu0 0.0
    %1833 = vmatprep.subr.mxu0 0.0
    %1834 = vmatpush1.xpose.msra.mxu0 0.0
    %1835 = vmatprep.subr.mxu0 0.0
    %1836 = vmatpush1.xpose.msra.mxu0 0.0
    %1837 = vmatprep.subr.mxu0 0.0
    %1838 = vmatpush1.xpose.msra.mxu0 0.0
    %1839 = vmatprep.subr.mxu0 0.0
    %1840 = vmatpush1.xpose.msra.mxu0 0.0
    %1841 = vmatprep.subr.mxu0 0.0
    %1842 = vmatpush1.xpose.msra.mxu0 0.0
    %1843 = vmatprep.subr.mxu0 0.0
    %1844 = vmatpush1.xpose.msra.mxu0 0.0
    %1845 = vmatprep.subr.mxu0 0.0
    %1846 = vmatpush1.xpose.msra.mxu0 0.0
    %1847 = vmatprep.subr.mxu0 0.0
    %1848 = vmatpush1.xpose.msra.mxu0 0.0
    %1849 = vmatprep.subr.mxu0 0.0
    %1850 = vmatpush1.xpose.msra.mxu0 0.0
    %1851 = vmatprep.subr.mxu0 0.0
    %1852 = vmatpush1.xpose.msra.mxu0 0.0
    %1853 = vmatprep.subr.mxu0 0.0
    %1854 = vmatpush1.xpose.msra.mxu0 0.0
    %1855 = vmatprep.subr.mxu0 0.0
    %1856 = vmatpush1.xpose.msra.mxu0 0.0
    %1857 = vmatprep.subr.mxu0 0.0
    %1858 = vmatpush1.xpose.msra.mxu0 0.0
    %1859 = vmatprep.subr.mxu0 0.0
    %1860 = vmatpush1.xpose.msra.mxu0 0.0
    %1861 = vmatprep.subr.mxu0 0.0
    %1862 = vmatpush1.xpose.msra.mxu0 0.0
    %1863 = vmatprep.subr.mxu0 0.0
    %1864 = vmatpush1.xpose.msra.mxu0 0.0
    %1865 = vmatprep.subr.mxu0 0.0
    %1866 = vmatpush1.xpose.msra.mxu0 0.0
    %1867 = vmatprep.subr.mxu0 0.0
    %1868 = vmatpush1.xpose.msra.mxu0 0.0
    %1869 = vmatprep.mubr.f32.mxu0 0.0
    %1870 = vmatmul.mubr.f32.gmra.mrb[0].mxu0 %v1801
    %v1871 = vpop.f32.mrb[0].mxu0
    %v1872 = vadd.f32 0.0, %v1871
    %v1873 = vpop.f32.mrb[0].mxu0
    %1874 = vdwg.mxu0
    %v1875 = vmul.f32 %v1872, 0.25
    %v1876 = vadd.f32 %v1875, %v719
    %v1877 = vsel %vm378, %v1876, -inf
    %1878 = vmax.xlane.f32.xlu0 %v1877
    %v1879 = vpop.xlane.xlu0 %1878
    %v1880 = vsub.f32 %v1876, %v1879
    %v1881 = vmul.f32 %v1880, 1.442695
    %v1882 = vpow.pop %v1881
    %v1883 = vsel %vm378, %v1882, 0.0
    %1884 = vadd.xlane.f32.xlu0 %v1883
    %v1885 = vpop.xlane.xlu0 %1884
    %v1886 = vrcp.pop %v1885
    %v1887 = vmul.f32 %v1882, %v1886
    %1888 = vrot.lane.b32.xlu0 %v1457, 64
    %v1889 = vpop.permute.xlu0 %1888
    %v1892 = vsel %vm378, %v1887, 0
    %1894 = vmatprep.subr.mxu0 0.0
    %1895 = vmatpush1.msra.mxu0 %v1889
    %1896 = vmatprep.subr.mxu0 0.0
    %1897 = vmatpush1.msra.mxu0 0.0
    %1898 = vmatprep.subr.mxu0 0.0
    %1899 = vmatpush1.msra.mxu0 0.0
    %1900 = vmatprep.subr.mxu0 0.0
    %1901 = vmatpush1.msra.mxu0 0.0
    %1902 = vmatprep.subr.mxu0 0.0
    %1903 = vmatpush1.msra.mxu0 0.0
    %1904 = vmatprep.subr.mxu0 0.0
    %1905 = vmatpush1.msra.mxu0 0.0
    %1906 = vmatprep.subr.mxu0 0.0
    %1907 = vmatpush1.msra.mxu0 0.0
    %1908 = vmatprep.subr.mxu0 0.0
    %1909 = vmatpush1.msra.mxu0 0.0
    %1910 = vmatprep.subr.mxu0 0.0
    %1911 = vmatpush1.msra.mxu0 0.0
    %1912 = vmatprep.subr.mxu0 0.0
    %1913 = vmatpush1.msra.mxu0 0.0
    %1914 = vmatprep.subr.mxu0 0.0
    %1915 = vmatpush1.msra.mxu0 0.0
    %1916 = vmatprep.subr.mxu0 0.0
    %1917 = vmatpush1.msra.mxu0 0.0
    %1918 = vmatprep.subr.mxu0 0.0
    %1919 = vmatpush1.msra.mxu0 0.0
    %1920 = vmatprep.subr.mxu0 0.0
    %1921 = vmatpush1.msra.mxu0 0.0
    %1922 = vmatprep.subr.mxu0 0.0
    %1923 = vmatpush1.msra.mxu0 0.0
    %1924 = vmatprep.subr.mxu0 0.0
    %1925 = vmatpush1.msra.mxu0 0.0
    %1926 = vmatprep.subr.mxu0 0.0
    %1927 = vmatpush1.msra.mxu0 0.0
    %1928 = vmatprep.subr.mxu0 0.0
    %1929 = vmatpush1.msra.mxu0 0.0
    %1930 = vmatprep.subr.mxu0 0.0
    %1931 = vmatpush1.msra.mxu0 0.0
    %1932 = vmatprep.subr.mxu0 0.0
    %1933 = vmatpush1.msra.mxu0 0.0
    %1934 = vmatprep.subr.mxu0 0.0
    %1935 = vmatpush1.msra.mxu0 0.0
    %1936 = vmatprep.subr.mxu0 0.0
    %1937 = vmatpush1.msra.mxu0 0.0
    %1938 = vmatprep.subr.mxu0 0.0
    %1939 = vmatpush1.msra.mxu0 0.0
    %1940 = vmatprep.subr.mxu0 0.0
    %1941 = vmatpush1.msra.mxu0 0.0
    %1942 = vmatprep.subr.mxu0 0.0
    %1943 = vmatpush1.msra.mxu0 0.0
    %1944 = vmatprep.subr.mxu0 0.0
    %1945 = vmatpush1.msra.mxu0 0.0
    %1946 = vmatprep.subr.mxu0 0.0
    %1947 = vmatpush1.msra.mxu0 0.0
    %1948 = vmatprep.subr.mxu0 0.0
    %1949 = vmatpush1.msra.mxu0 0.0
    %1950 = vmatprep.subr.mxu0 0.0
    %1951 = vmatpush1.msra.mxu0 0.0
    %1952 = vmatprep.subr.mxu0 0.0
    %1953 = vmatpush1.msra.mxu0 0.0
    %1954 = vmatprep.subr.mxu0 0.0
    %1955 = vmatpush1.msra.mxu0 0.0
    %1956 = vmatprep.subr.mxu0 0.0
    %1957 = vmatpush1.msra.mxu0 0.0
    %1958 = vmatprep.mubr.f32.mxu0 0.0
    %1959 = vmatmul.mubr.f32.gmra.mrb[0].mxu0 %v1892
    %v1960 = vpop.f32.mrb[0].mxu0
    %v1961 = vadd.f32 0.0, %v1960
    %v1962 = vpop.f32.mrb[0].mxu0
    %1963 = vdwg.mxu0
    %1964 = vrot.lane.b32.xlu0 %v1457, 112
    %v1965 = vpop.permute.xlu0 %1964
    %1966 = vrot.lane.b32.xlu0 %v1457, 80
    %v1967 = vpop.permute.xlu0 %1966
    %v1968 = vsel %vm297, %v1965, 0
    %v1970 = vsel %vm297, %v1967, 0
    %1972 = vmatprep.subr.mxu0 0.0
    %1973 = vmatpush1.xpose.msra.mxu0 %v1970
    %1974 = vmatprep.subr.mxu0 0.0
    %1975 = vmatpush1.xpose.msra.mxu0 0.0
    %1976 = vmatprep.subr.mxu0 0.0
    %1977 = vmatpush1.xpose.msra.mxu0 0.0
    %1978 = vmatprep.subr.mxu0 0.0
    %1979 = vmatpush1.xpose.msra.mxu0 0.0
    %1980 = vmatprep.subr.mxu0 0.0
    %1981 = vmatpush1.xpose.msra.mxu0 0.0
    %1982 = vmatprep.subr.mxu0 0.0
    %1983 = vmatpush1.xpose.msra.mxu0 0.0
    %1984 = vmatprep.subr.mxu0 0.0
    %1985 = vmatpush1.xpose.msra.mxu0 0.0
    %1986 = vmatprep.subr.mxu0 0.0
    %1987 = vmatpush1.xpose.msra.mxu0 0.0
    %1988 = vmatprep.subr.mxu0 0.0
    %1989 = vmatpush1.xpose.msra.mxu0 0.0
    %1990 = vmatprep.subr.mxu0 0.0
    %1991 = vmatpush1.xpose.msra.mxu0 0.0
    %1992 = vmatprep.subr.mxu0 0.0
    %1993 = vmatpush1.xpose.msra.mxu0 0.0
    %1994 = vmatprep.subr.mxu0 0.0
    %1995 = vmatpush1.xpose.msra.mxu0 0.0
    %1996 = vmatprep.subr.mxu0 0.0
    %1997 = vmatpush1.xpose.msra.mxu0 0.0
    %1998 = vmatprep.subr.mxu0 0.0
    %1999 = vmatpush1.xpose.msra.mxu0 0.0
    %2000 = vmatprep.subr.mxu0 0.0
    %2001 = vmatpush1.xpose.msra.mxu0 0.0
    %2002 = vmatprep.subr.mxu0 0.0
    %2003 = vmatpush1.xpose.msra.mxu0 0.0
    %2004 = vmatprep.subr.mxu0 0.0
    %2005 = vmatpush1.xpose.msra.mxu0 0.0
    %2006 = vmatprep.subr.mxu0 0.0
    %2007 = vmatpush1.xpose.msra.mxu0 0.0
    %2008 = vmatprep.subr.mxu0 0.0
    %2009 = vmatpush1.xpose.msra.mxu0 0.0
    %2010 = vmatprep.subr.mxu0 0.0
    %2011 = vmatpush1.xpose.msra.mxu0 0.0
    %2012 = vmatprep.subr.mxu0 0.0
    %2013 = vmatpush1.xpose.msra.mxu0 0.0
    %2014 = vmatprep.subr.mxu0 0.0
    %2015 = vmatpush1.xpose.msra.mxu0 0.0
    %2016 = vmatprep.subr.mxu0 0.0
    %2017 = vmatpush1.xpose.msra.mxu0 0.0
    %2018 = vmatprep.subr.mxu0 0.0
    %2019 = vmatpush1.xpose.msra.mxu0 0.0
    %2020 = vmatprep.subr.mxu0 0.0
    %2021 = vmatpush1.xpose.msra.mxu0 0.0
    %2022 = vmatprep.subr.mxu0 0.0
    %2023 = vmatpush1.xpose.msra.mxu0 0.0
    %2024 = vmatprep.subr.mxu0 0.0
    %2025 = vmatpush1.xpose.msra.mxu0 0.0
    %2026 = vmatprep.subr.mxu0 0.0
    %2027 = vmatpush1.xpose.msra.mxu0 0.0
    %2028 = vmatprep.subr.mxu0 0.0
    %2029 = vmatpush1.xpose.msra.mxu0 0.0
    %2030 = vmatprep.subr.mxu0 0.0
    %2031 = vmatpush1.xpose.msra.mxu0 0.0
    %2032 = vmatprep.subr.mxu0 0.0
    %2033 = vmatpush1.xpose.msra.mxu0 0.0
    %2034 = vmatprep.subr.mxu0 0.0
    %2035 = vmatpush1.xpose.msra.mxu0 0.0
    %2036 = vmatprep.mubr.f32.mxu0 0.0
    %2037 = vmatmul.mubr.f32.gmra.mrb[0].mxu0 %v1968
    %v2038 = vpop.f32.mrb[0].mxu0
    %v2039 = vadd.f32 0.0, %v2038
    %v2040 = vpop.f32.mrb[0].mxu0
    %2041 = vdwg.mxu0
    %v2042 = vmul.f32 %v2039, 0.25
    %v2043 = vadd.f32 %v2042, %v719
    %v2044 = vsel %vm378, %v2043, -inf
    %2045 = vmax.xlane.f32.xlu0 %v2044
    %v2046 = vpop.xlane.xlu0 %2045
    %v2047 = vsub.f32 %v2043, %v2046
    %v2048 = vmul.f32 %v2047, 1.442695
    %v2049 = vpow.pop %v2048
    %v2050 = vsel %vm378, %v2049, 0.0
    %2051 = vadd.xlane.f32.xlu0 %v2050
    %v2052 = vpop.xlane.xlu0 %2051
    %v2053 = vrcp.pop %v2052
    %v2054 = vmul.f32 %v2049, %v2053
    %2055 = vrot.lane.b32.xlu0 %v1457, 48
    %v2056 = vpop.permute.xlu0 %2055
    %v2059 = vsel %vm378, %v2054, 0
    %2061 = vmatprep.subr.mxu0 0.0
    %2062 = vmatpush1.msra.mxu0 %v2056
    %2063 = vmatprep.subr.mxu0 0.0
    %2064 = vmatpush1.msra.mxu0 0.0
    %2065 = vmatprep.subr.mxu0 0.0
    %2066 = vmatpush1.msra.mxu0 0.0
    %2067 = vmatprep.subr.mxu0 0.0
    %2068 = vmatpush1.msra.mxu0 0.0
    %2069 = vmatprep.subr.mxu0 0.0
    %2070 = vmatpush1.msra.mxu0 0.0
    %2071 = vmatprep.subr.mxu0 0.0
    %2072 = vmatpush1.msra.mxu0 0.0
    %2073 = vmatprep.subr.mxu0 0.0
    %2074 = vmatpush1.msra.mxu0 0.0
    %2075 = vmatprep.subr.mxu0 0.0
    %2076 = vmatpush1.msra.mxu0 0.0
    %2077 = vmatprep.subr.mxu0 0.0
    %2078 = vmatpush1.msra.mxu0 0.0
    %2079 = vmatprep.subr.mxu0 0.0
    %2080 = vmatpush1.msra.mxu0 0.0
    %2081 = vmatprep.subr.mxu0 0.0
    %2082 = vmatpush1.msra.mxu0 0.0
    %2083 = vmatprep.subr.mxu0 0.0
    %2084 = vmatpush1.msra.mxu0 0.0
    %2085 = vmatprep.subr.mxu0 0.0
    %2086 = vmatpush1.msra.mxu0 0.0
    %2087 = vmatprep.subr.mxu0 0.0
    %2088 = vmatpush1.msra.mxu0 0.0
    %2089 = vmatprep.subr.mxu0 0.0
    %2090 = vmatpush1.msra.mxu0 0.0
    %2091 = vmatprep.subr.mxu0 0.0
    %2092 = vmatpush1.msra.mxu0 0.0
    %2093 = vmatprep.subr.mxu0 0.0
    %2094 = vmatpush1.msra.mxu0 0.0
    %2095 = vmatprep.subr.mxu0 0.0
    %2096 = vmatpush1.msra.mxu0 0.0
    %2097 = vmatprep.subr.mxu0 0.0
    %2098 = vmatpush1.msra.mxu0 0.0
    %2099 = vmatprep.subr.mxu0 0.0
    %2100 = vmatpush1.msra.mxu0 0.0
    %2101 = vmatprep.subr.mxu0 0.0
    %2102 = vmatpush1.msra.mxu0 0.0
    %2103 = vmatprep.subr.mxu0 0.0
    %2104 = vmatpush1.msra.mxu0 0.0
    %2105 = vmatprep.subr.mxu0 0.0
    %2106 = vmatpush1.msra.mxu0 0.0
    %2107 = vmatprep.subr.mxu0 0.0
    %2108 = vmatpush1.msra.mxu0 0.0
    %2109 = vmatprep.subr.mxu0 0.0
    %2110 = vmatpush1.msra.mxu0 0.0
    %2111 = vmatprep.subr.mxu0 0.0
    %2112 = vmatpush1.msra.mxu0 0.0
    %2113 = vmatprep.subr.mxu0 0.0
    %2114 = vmatpush1.msra.mxu0 0.0
    %2115 = vmatprep.subr.mxu0 0.0
    %2116 = vmatpush1.msra.mxu0 0.0
    %2117 = vmatprep.subr.mxu0 0.0
    %2118 = vmatpush1.msra.mxu0 0.0
    %2119 = vmatprep.subr.mxu0 0.0
    %2120 = vmatpush1.msra.mxu0 0.0
    %2121 = vmatprep.subr.mxu0 0.0
    %2122 = vmatpush1.msra.mxu0 0.0
    %2123 = vmatprep.subr.mxu0 0.0
    %2124 = vmatpush1.msra.mxu0 0.0
    %2125 = vmatprep.mubr.f32.mxu0 0.0
    %2126 = vmatmul.mubr.f32.gmra.mrb[0].mxu0 %v2059
    %v2127 = vpop.f32.mrb[0].mxu0
    %v2128 = vadd.f32 0.0, %v2127
    %v2129 = vpop.f32.mrb[0].mxu0
    %2130 = vdwg.mxu0
    %2132 = vrot.lane.b32.xlu0 %v2128, 16
    %v2133 = vpop.permute.xlu0 %2132
    %v2135 = vsel %vm297, %v1961, %v2133
    %s2136 = scalar_lea.vmem %s6, 32
    %v2137 = vld [vmem:[%s2136] sm:$0xff]
    %v2138 = vld [vmem:[%s2136 + $0x8] sm:$0xff]
    %v2139 = vld [vmem:[%s2136 + $0x10] sm:$0xff]
    %v2140 = vld [vmem:[%s2136 + $0x18] sm:$0xff]
    %v2142 = vsel %vm162, %v1797, 0
    %v2145 = vsel %vm162, %v2135, 0
    %2147 = vmatprep.subr.mxu0 0.0
    %2148 = vmatpush1.msra.mxu0 %v2137
    %2149 = vmatprep.subr.mxu0 0.0
    %2150 = vmatpush1.msra.mxu0 %v2138
    %2151 = vmatprep.subr.mxu0 0.0
    %2152 = vmatpush1.msra.mxu0 %v2139
    %2153 = vmatprep.subr.mxu0 0.0
    %2154 = vmatpush1.msra.mxu0 %v2140
    %2155 = vmatprep.subr.mxu0 0.0
    %2156 = vmatpush1.msra.mxu0 0.0
    %2157 = vmatprep.subr.mxu0 0.0
    %2158 = vmatpush1.msra.mxu0 0.0
    %2159 = vmatprep.subr.mxu0 0.0
    %2160 = vmatpush1.msra.mxu0 0.0
    %2161 = vmatprep.subr.mxu0 0.0
    %2162 = vmatpush1.msra.mxu0 0.0
    %2163 = vmatprep.subr.mxu0 0.0
    %2164 = vmatpush1.msra.mxu0 0.0
    %2165 = vmatprep.subr.mxu0 0.0
    %2166 = vmatpush1.msra.mxu0 0.0
    %2167 = vmatprep.subr.mxu0 0.0
    %2168 = vmatpush1.msra.mxu0 0.0
    %2169 = vmatprep.subr.mxu0 0.0
    %2170 = vmatpush1.msra.mxu0 0.0
    %2171 = vmatprep.subr.mxu0 0.0
    %2172 = vmatpush1.msra.mxu0 0.0
    %2173 = vmatprep.subr.mxu0 0.0
    %2174 = vmatpush1.msra.mxu0 0.0
    %2175 = vmatprep.subr.mxu0 0.0
    %2176 = vmatpush1.msra.mxu0 0.0
    %2177 = vmatprep.subr.mxu0 0.0
    %2178 = vmatpush1.msra.mxu0 0.0
    %2179 = vmatprep.subr.mxu0 0.0
    %2180 = vmatpush1.msra.mxu0 0.0
    %2181 = vmatprep.subr.mxu0 0.0
    %2182 = vmatpush1.msra.mxu0 0.0
    %2183 = vmatprep.subr.mxu0 0.0
    %2184 = vmatpush1.msra.mxu0 0.0
    %2185 = vmatprep.subr.mxu0 0.0
    %2186 = vmatpush1.msra.mxu0 0.0
    %2187 = vmatprep.subr.mxu0 0.0
    %2188 = vmatpush1.msra.mxu0 0.0
    %2189 = vmatprep.subr.mxu0 0.0
    %2190 = vmatpush1.msra.mxu0 0.0
    %2191 = vmatprep.subr.mxu0 0.0
    %2192 = vmatpush1.msra.mxu0 0.0
    %2193 = vmatprep.subr.mxu0 0.0
    %2194 = vmatpush1.msra.mxu0 0.0
    %2195 = vmatprep.subr.mxu0 0.0
    %2196 = vmatpush1.msra.mxu0 0.0
    %2197 = vmatprep.subr.mxu0 0.0
    %2198 = vmatpush1.msra.mxu0 0.0
    %2199 = vmatprep.subr.mxu0 0.0
    %2200 = vmatpush1.msra.mxu0 0.0
    %2201 = vmatprep.subr.mxu0 0.0
    %2202 = vmatpush1.msra.mxu0 0.0
    %2203 = vmatprep.subr.mxu0 0.0
    %2204 = vmatpush1.msra.mxu0 0.0
    %2205 = vmatprep.subr.mxu0 0.0
    %2206 = vmatpush1.msra.mxu0 0.0
    %2207 = vmatprep.subr.mxu0 0.0
    %2208 = vmatpush1.msra.mxu0 0.0
    %2209 = vmatprep.subr.mxu0 0.0
    %2210 = vmatpush1.msra.mxu0 0.0
    %2211 = vmatprep.mubr.f32.mxu0 0.0
    %2212 = vmatmul.mubr.f32.gmra.mrb[0].mxu0 %v2142
    %v2213 = vpop.f32.mrb[0].mxu0
    %v2214 = vadd.f32 0.0, %v2213
    %v2215 = vpop.f32.mrb[0].mxu0
    %2216 = vmatprep.mubr.f32.mxu0 0.0
    %2217 = vmatmul.mubr.f32.gmra.mrb[0].mxu0 %v2145
    %v2218 = vpop.f32.mrb[0].mxu0
    %v2219 = vadd.f32 0.0, %v2218
    %v2220 = vpop.f32.mrb[0].mxu0
    %2221 = vdwg.mxu0
    %v2222 = vadd.f32 %v1324, %v2214
    %v2223 = vadd.f32 %v1325, %v2219
    %s2224 = scalar_lea.vmem %s7, 1
    %v2225 = vld [vmem:[%s2224] sm:$0x1]
    %v2227 = vlaneseq
    %v2228 = vshrl.u32 %v2227, 7
    %v2229 = vsub.s32 0, %v2228
    %v2230 = vrot.slane %v2225, %v2229
    %v2232 = vadd.f32 %v2222, %v2230
    %v2233 = vadd.f32 %v2223, %v2230
    %v2234 = vsel %vm162, %v2232, 0.0
    %2235 = vadd.xlane.f32.xlu0 %v2234
    %v2236 = vpop.xlane.xlu0 %2235
    %v2237 = vsel %vm162, %v2233, 0.0
    %2238 = vadd.xlane.f32.xlu0 %v2237
    %v2239 = vpop.xlane.xlu0 %2238
    %v2240 = vmul.f32 %v2236, %v169
    %v2241 = vmul.f32 %v2239, %v169
    %v2242 = vsub.f32 %v2232, %v2240
    %v2243 = vsub.f32 %v2233, %v2241
    %v2244 = vmul.f32 %v2242, %v2242
    %v2245 = vmul.f32 %v2243, %v2243
    %v2246 = vsel %vm162, %v2244, 0.0
    %2247 = vadd.xlane.f32.xlu0 %v2246
    %v2248 = vpop.xlane.xlu0 %2247
    %v2249 = vsel %vm162, %v2245, 0.0
    %2250 = vadd.xlane.f32.xlu0 %v2249
    %v2251 = vpop.xlane.xlu0 %2250
    %v2252 = vmul.f32 %v2248, %v169
    %v2253 = vmul.f32 %v2251, %v169
    %v2254 = vadd.f32 %v2252, 1e-05
    %v2255 = vadd.f32 %v2253, 1e-05
    %v2256 = vrsqrt.pop %v2254
    %v2257 = vrsqrt.pop %v2255
    %v2258 = vmul.f32 %v2242, %v2256
    %v2259 = vmul.f32 %v2243, %v2257
    %v2260 = vlaneseq
    %v2261 = vshrl.u32 %v2260, 7
    %v2262 = vsub.s32 2, %v2261
    %v2263 = vrot.slane %v1327, %v2262
    %v2264 = vmul.f32 %v2258, %v2263
    %v2265 = vmul.f32 %v2259, %v2263
    %v2266 = vlaneseq
    %v2267 = vshrl.u32 %v2266, 7
    %v2268 = vsub.s32 3, %v2267
    %v2269 = vrot.slane %v1327, %v2268
    %v2270 = vadd.f32 %v2264, %v2269
    %v2271 = vadd.f32 %v2265, %v2269
    %s2272 = scalar_lea.vmem %s8, 32
    %v2273 = vld [vmem:[%s2272] sm:$0xff]
    %v2274 = vld [vmem:[%s2272 + $0x8] sm:$0xff]
    %v2275 = vld [vmem:[%s2272 + $0x10] sm:$0xff]
    %v2276 = vld [vmem:[%s2272 + $0x18] sm:$0xff]
    %s2277 = scalar_lea.vmem %s9, 1
    %v2278 = vld [vmem:[%s2277] sm:$0x1]
    %v2280 = vlaneseq
    %v2281 = vshrl.u32 %v2280, 7
    %v2282 = vsub.s32 0, %v2281
    %v2283 = vrot.slane %v2278, %v2282
    %v2286 = vsel %vm162, %v2270, 0
    %v2289 = vsel %vm162, %v2271, 0
    %2291 = vmatprep.subr.mxu0 0.0
    %2292 = vmatpush1.msra.mxu0 %v2273
    %2293 = vmatprep.subr.mxu0 0.0
    %2294 = vmatpush1.msra.mxu0 %v2274
    %2295 = vmatprep.subr.mxu0 0.0
    %2296 = vmatpush1.msra.mxu0 %v2275
    %2297 = vmatprep.subr.mxu0 0.0
    %2298 = vmatpush1.msra.mxu0 %v2276
    %2299 = vmatprep.subr.mxu0 0.0
    %2300 = vmatpush1.msra.mxu0 0.0
    %2301 = vmatprep.subr.mxu0 0.0
    %2302 = vmatpush1.msra.mxu0 0.0
    %2303 = vmatprep.subr.mxu0 0.0
    %2304 = vmatpush1.msra.mxu0 0.0
    %2305 = vmatprep.subr.mxu0 0.0
    %2306 = vmatpush1.msra.mxu0 0.0
    %2307 = vmatprep.subr.mxu0 0.0
    %2308 = vmatpush1.msra.mxu0 0.0
    %2309 = vmatprep.subr.mxu0 0.0
    %2310 = vmatpush1.msra.mxu0 0.0
    %2311 = vmatprep.subr.mxu0 0.0
    %2312 = vmatpush1.msra.mxu0 0.0
    %2313 = vmatprep.subr.mxu0 0.0
    %2314 = vmatpush1.msra.mxu0 0.0
    %2315 = vmatprep.subr.mxu0 0.0
    %2316 = vmatpush1.msra.mxu0 0.0
    %2317 = vmatprep.subr.mxu0 0.0
    %2318 = vmatpush1.msra.mxu0 0.0
    %2319 = vmatprep.subr.mxu0 0.0
    %2320 = vmatpush1.msra.mxu0 0.0
    %2321 = vmatprep.subr.mxu0 0.0
    %2322 = vmatpush1.msra.mxu0 0.0
    %2323 = vmatprep.subr.mxu0 0.0
    %2324 = vmatpush1.msra.mxu0 0.0
    %2325 = vmatprep.subr.mxu0 0.0
    %2326 = vmatpush1.msra.mxu0 0.0
    %2327 = vmatprep.subr.mxu0 0.0
    %2328 = vmatpush1.msra.mxu0 0.0
    %2329 = vmatprep.subr.mxu0 0.0
    %2330 = vmatpush1.msra.mxu0 0.0
    %2331 = vmatprep.subr.mxu0 0.0
    %2332 = vmatpush1.msra.mxu0 0.0
    %2333 = vmatprep.subr.mxu0 0.0
    %2334 = vmatpush1.msra.mxu0 0.0
    %2335 = vmatprep.subr.mxu0 0.0
    %2336 = vmatpush1.msra.mxu0 0.0
    %2337 = vmatprep.subr.mxu0 0.0
    %2338 = vmatpush1.msra.mxu0 0.0
    %2339 = vmatprep.subr.mxu0 0.0
    %2340 = vmatpush1.msra.mxu0 0.0
    %2341 = vmatprep.subr.mxu0 0.0
    %2342 = vmatpush1.msra.mxu0 0.0
    %2343 = vmatprep.subr.mxu0 0.0
    %2344 = vmatpush1.msra.mxu0 0.0
    %2345 = vmatprep.subr.mxu0 0.0
    %2346 = vmatpush1.msra.mxu0 0.0
    %2347 = vmatprep.subr.mxu0 0.0
    %2348 = vmatpush1.msra.mxu0 0.0
    %2349 = vmatprep.subr.mxu0 0.0
    %2350 = vmatpush1.msra.mxu0 0.0
    %2351 = vmatprep.subr.mxu0 0.0
    %2352 = vmatpush1.msra.mxu0 0.0
    %2353 = vmatprep.subr.mxu0 0.0
    %2354 = vmatpush1.msra.mxu0 0.0
    %2355 = vmatprep.mubr.f32.mxu0 0.0
    %2356 = vmatmul.mubr.f32.gmra.mrb[0].mxu0 %v2286
    %v2357 = vpop.f32.mrb[0].mxu0
    %v2358 = vadd.f32 %v2283, %v2357
    %v2359 = vpop.f32.mrb[0].mxu0
    %2360 = vmatprep.mubr.f32.mxu0 0.0
    %2361 = vmatmul.mubr.f32.gmra.mrb[0].mxu0 %v2289
    %v2362 = vpop.f32.mrb[0].mxu0
    %v2363 = vadd.f32 %v2283, %v2362
    %v2364 = vpop.f32.mrb[0].mxu0
    %2365 = vdwg.mxu0
    %v2366 = vmul.f32 %v2358, %v2358
    %v2367 = vmul.f32 %v2363, %v2363
    %v2368 = vmul.f32 %v2358, %v2366
    %v2369 = vmul.f32 %v2363, %v2367
    %v2370 = vmul.f32 %v2368, 0.044715
    %v2371 = vmul.f32 %v2369, 0.044715
    %v2372 = vadd.f32 %v2358, %v2370
    %v2373 = vadd.f32 %v2363, %v2371
    %v2374 = vmul.f32 %v2372, 0.7978846
    %v2375 = vmul.f32 %v2373, 0.7978846
    %v2376 = vtanh.pop %v2374
    %v2377 = vtanh.pop %v2375
    %v2378 = vadd.f32 %v2376, 1.0
    %v2379 = vadd.f32 %v2377, 1.0
    %v2380 = vmul.f32 %v2378, 0.5
    %v2381 = vmul.f32 %v2379, 0.5
    %v2382 = vmul.f32 %v2358, %v2380
    %v2383 = vmul.f32 %v2363, %v2381
    %s2384 = scalar_lea.vmem %s10, 128
    %v2385 = vld [vmem:[%s2384] sm:$0xff]
    %v2386 = vld [vmem:[%s2384 + $0x8] sm:$0xff]
    %v2387 = vld [vmem:[%s2384 + $0x10] sm:$0xff]
    %v2388 = vld [vmem:[%s2384 + $0x18] sm:$0xff]
    %v2389 = vld [vmem:[%s2384 + $0x20] sm:$0xff]
    %v2390 = vld [vmem:[%s2384 + $0x28] sm:$0xff]
    %v2391 = vld [vmem:[%s2384 + $0x30] sm:$0xff]
    %v2392 = vld [vmem:[%s2384 + $0x38] sm:$0xff]
    %v2393 = vld [vmem:[%s2384 + $0x40] sm:$0xff]
    %v2394 = vld [vmem:[%s2384 + $0x48] sm:$0xff]
    %v2395 = vld [vmem:[%s2384 + $0x50] sm:$0xff]
    %v2396 = vld [vmem:[%s2384 + $0x58] sm:$0xff]
    %v2397 = vld [vmem:[%s2384 + $0x60] sm:$0xff]
    %v2398 = vld [vmem:[%s2384 + $0x68] sm:$0xff]
    %v2399 = vld [vmem:[%s2384 + $0x70] sm:$0xff]
    %v2400 = vld [vmem:[%s2384 + $0x78] sm:$0xff]
    %2401 = vmatprep.subr.mxu0 0.0
    %2402 = vmatpush1.msra.mxu0 %v2385
    %2403 = vmatprep.subr.mxu0 0.0
    %2404 = vmatpush1.msra.mxu0 %v2386
    %2405 = vmatprep.subr.mxu0 0.0
    %2406 = vmatpush1.msra.mxu0 %v2387
    %2407 = vmatprep.subr.mxu0 0.0
    %2408 = vmatpush1.msra.mxu0 %v2388
    %2409 = vmatprep.subr.mxu0 0.0
    %2410 = vmatpush1.msra.mxu0 %v2389
    %2411 = vmatprep.subr.mxu0 0.0
    %2412 = vmatpush1.msra.mxu0 %v2390
    %2413 = vmatprep.subr.mxu0 0.0
    %2414 = vmatpush1.msra.mxu0 %v2391
    %2415 = vmatprep.subr.mxu0 0.0
    %2416 = vmatpush1.msra.mxu0 %v2392
    %2417 = vmatprep.subr.mxu0 0.0
    %2418 = vmatpush1.msra.mxu0 %v2393
    %2419 = vmatprep.subr.mxu0 0.0
    %2420 = vmatpush1.msra.mxu0 %v2394
    %2421 = vmatprep.subr.mxu0 0.0
    %2422 = vmatpush1.msra.mxu0 %v2395
    %2423 = vmatprep.subr.mxu0 0.0
    %2424 = vmatpush1.msra.mxu0 %v2396
    %2425 = vmatprep.subr.mxu0 0.0
    %2426 = vmatpush1.msra.mxu0 %v2397
    %2427 = vmatprep.subr.mxu0 0.0
    %2428 = vmatpush1.msra.mxu0 %v2398
    %2429 = vmatprep.subr.mxu0 0.0
    %2430 = vmatpush1.msra.mxu0 %v2399
    %2431 = vmatprep.subr.mxu0 0.0
    %2432 = vmatpush1.msra.mxu0 %v2400
    %2433 = vmatprep.subr.mxu0 0.0
    %2434 = vmatpush1.msra.mxu0 0.0
    %2435 = vmatprep.subr.mxu0 0.0
    %2436 = vmatpush1.msra.mxu0 0.0
    %2437 = vmatprep.subr.mxu0 0.0
    %2438 = vmatpush1.msra.mxu0 0.0
    %2439 = vmatprep.subr.mxu0 0.0
    %2440 = vmatpush1.msra.mxu0 0.0
    %2441 = vmatprep.subr.mxu0 0.0
    %2442 = vmatpush1.msra.mxu0 0.0
    %2443 = vmatprep.subr.mxu0 0.0
    %2444 = vmatpush1.msra.mxu0 0.0
    %2445 = vmatprep.subr.mxu0 0.0
    %2446 = vmatpush1.msra.mxu0 0.0
    %2447 = vmatprep.subr.mxu0 0.0
    %2448 = vmatpush1.msra.mxu0 0.0
    %2449 = vmatprep.subr.mxu0 0.0
    %2450 = vmatpush1.msra.mxu0 0.0
    %2451 = vmatprep.subr.mxu0 0.0
    %2452 = vmatpush1.msra.mxu0 0.0
    %2453 = vmatprep.subr.mxu0 0.0
    %2454 = vmatpush1.msra.mxu0 0.0
    %2455 = vmatprep.subr.mxu0 0.0
    %2456 = vmatpush1.msra.mxu0 0.0
    %2457 = vmatprep.subr.mxu0 0.0
    %2458 = vmatpush1.msra.mxu0 0.0
    %2459 = vmatprep.subr.mxu0 0.0
    %2460 = vmatpush1.msra.mxu0 0.0
    %2461 = vmatprep.subr.mxu0 0.0
    %2462 = vmatpush1.msra.mxu0 0.0
    %2463 = vmatprep.subr.mxu0 0.0
    %2464 = vmatpush1.msra.mxu0 0.0
    %2465 = vmatprep.mubr.f32.mxu0 0.0
    %2466 = vmatmul.mubr.f32.gmra.mrb[0].mxu0 %v2382
    %v2467 = vpop.f32.mrb[0].mxu0
    %v2468 = vadd.f32 0.0, %v2467
    %v2469 = vpop.f32.mrb[0].mxu0
    %2470 = vmatprep.mubr.f32.mxu0 0.0
    %2471 = vmatmul.mubr.f32.gmra.mrb[0].mxu0 %v2383
    %v2472 = vpop.f32.mrb[0].mxu0
    %v2473 = vadd.f32 0.0, %v2472
    %v2474 = vpop.f32.mrb[0].mxu0
    %2475 = vdwg.mxu0
    %v2476 = vadd.f32 %v2232, %v2468
    %v2477 = vadd.f32 %v2233, %v2473
    %s2478 = scalar_lea.vmem %s11, 1
    %v2479 = vld [vmem:[%s2478] sm:$0x1]
    %v2481 = vlaneseq
    %v2482 = vshrl.u32 %v2481, 7
    %v2483 = vsub.s32 0, %v2482
    %v2484 = vrot.slane %v2479, %v2483
    %v2486 = vadd.f32 %v2476, %v2484
    %v2487 = vadd.f32 %v2477, %v2484
    %v2488 = vld [vmem:[%s13] sm:$0x3]
    %v2489 = vsel %vm162, %v2486, 0.0
    %2490 = vadd.xlane.f32.xlu0 %v2489
    %v2491 = vpop.xlane.xlu0 %2490
    %v2492 = vsel %vm162, %v2487, 0.0
    %2493 = vadd.xlane.f32.xlu0 %v2492
    %v2494 = vpop.xlane.xlu0 %2493
    %v2495 = vmul.f32 %v2491, %v169
    %v2496 = vmul.f32 %v2494, %v169
    %v2497 = vsub.f32 %v2486, %v2495
    %v2498 = vsub.f32 %v2487, %v2496
    %v2499 = vmul.f32 %v2497, %v2497
    %v2500 = vmul.f32 %v2498, %v2498
    %v2501 = vsel %vm162, %v2499, 0.0
    %2502 = vadd.xlane.f32.xlu0 %v2501
    %v2503 = vpop.xlane.xlu0 %2502
    %v2504 = vsel %vm162, %v2500, 0.0
    %2505 = vadd.xlane.f32.xlu0 %v2504
    %v2506 = vpop.xlane.xlu0 %2505
    %v2507 = vmul.f32 %v2503, %v169
    %v2508 = vmul.f32 %v2506, %v169
    %v2509 = vadd.f32 %v2507, 1e-05
    %v2510 = vadd.f32 %v2508, 1e-05
    %v2511 = vrsqrt.pop %v2509
    %v2512 = vrsqrt.pop %v2510
    %v2513 = vmul.f32 %v2497, %v2511
    %v2514 = vmul.f32 %v2498, %v2512
    %v2515 = vlaneseq
    %v2516 = vshrl.u32 %v2515, 7
    %v2517 = vsub.s32 0, %v2516
    %v2518 = vrot.slane %v2488, %v2517
    %v2519 = vmul.f32 %v2513, %v2518
    %v2520 = vmul.f32 %v2514, %v2518
    %v2521 = vlaneseq
    %v2522 = vshrl.u32 %v2521, 7
    %v2523 = vsub.s32 1, %v2522
    %v2524 = vrot.slane %v2488, %v2523
    %v2525 = vadd.f32 %v2519, %v2524
    %v2526 = vadd.f32 %v2520, %v2524
    %vm2527 = vcmask 58368
    %v2528 = vsel %vm2527, %v53, 0
    %v2529 = vand.u32 %v2528, 65535
    %v2530 = vshrl.u32 %v2528, 16
    %v2531 = vcvt.s32.f32 %v2529
    %v2532 = vcvt.s32.f32 %v2530
    %2533 = vadd.xlane.f32.xlu0 %v2531
    %v2534 = vpop.xlane.xlu0 %2533
    %2535 = vadd.xlane.f32.xlu0 %v2532
    %v2536 = vpop.xlane.xlu0 %2535
    %v2537 = vcvt.f32.s32 %v2534
    %v2538 = vcvt.f32.s32 %v2536
    %v2539 = vshll.u32 %v2538, 16
    %v2540 = vadd.s32 %v2539, %v2537
    %v2541 = vsub.s32 %v2540, 1
    %v2542 = vlaneseq
    %v2543 = vshrl.u32 %v2542, 7
    %v2544 = vmul.u32 %v2543, 8
    %v2545 = vadd.s32 %v2544, %v2541
    %vm2546 = vcmp.eq.s32.totalorder %v55, %v2545
    %v2547 = vsel %vm2546, 1, 0
    %v2548 = vcvt.s32.f32 %v2547
    %v2550 = vsel %vm297, %v2548, 0
    %2552 = vmatprep.subr.mxu0 0.0
    %2553 = vmatpush1.msra.mxu0 %v2525
    %2554 = vmatprep.subr.mxu0 0.0
    %2555 = vmatpush1.msra.mxu0 %v2526
    %2556 = vmatprep.subr.mxu0 0.0
    %2557 = vmatpush1.msra.mxu0 0.0
    %2558 = vmatprep.subr.mxu0 0.0
    %2559 = vmatpush1.msra.mxu0 0.0
    %2560 = vmatprep.subr.mxu0 0.0
    %2561 = vmatpush1.msra.mxu0 0.0
    %2562 = vmatprep.subr.mxu0 0.0
    %2563 = vmatpush1.msra.mxu0 0.0
    %2564 = vmatprep.subr.mxu0 0.0
    %2565 = vmatpush1.msra.mxu0 0.0
    %2566 = vmatprep.subr.mxu0 0.0
    %2567 = vmatpush1.msra.mxu0 0.0
    %2568 = vmatprep.subr.mxu0 0.0
    %2569 = vmatpush1.msra.mxu0 0.0
    %2570 = vmatprep.subr.mxu0 0.0
    %2571 = vmatpush1.msra.mxu0 0.0
    %2572 = vmatprep.subr.mxu0 0.0
    %2573 = vmatpush1.msra.mxu0 0.0
    %2574 = vmatprep.subr.mxu0 0.0
    %2575 = vmatpush1.msra.mxu0 0.0
    %2576 = vmatprep.subr.mxu0 0.0
    %2577 = vmatpush1.msra.mxu0 0.0
    %2578 = vmatprep.subr.mxu0 0.0
    %2579 = vmatpush1.msra.mxu0 0.0
    %2580 = vmatprep.subr.mxu0 0.0
    %2581 = vmatpush1.msra.mxu0 0.0
    %2582 = vmatprep.subr.mxu0 0.0
    %2583 = vmatpush1.msra.mxu0 0.0
    %2584 = vmatprep.subr.mxu0 0.0
    %2585 = vmatpush1.msra.mxu0 0.0
    %2586 = vmatprep.subr.mxu0 0.0
    %2587 = vmatpush1.msra.mxu0 0.0
    %2588 = vmatprep.subr.mxu0 0.0
    %2589 = vmatpush1.msra.mxu0 0.0
    %2590 = vmatprep.subr.mxu0 0.0
    %2591 = vmatpush1.msra.mxu0 0.0
    %2592 = vmatprep.subr.mxu0 0.0
    %2593 = vmatpush1.msra.mxu0 0.0
    %2594 = vmatprep.subr.mxu0 0.0
    %2595 = vmatpush1.msra.mxu0 0.0
    %2596 = vmatprep.subr.mxu0 0.0
    %2597 = vmatpush1.msra.mxu0 0.0
    %2598 = vmatprep.subr.mxu0 0.0
    %2599 = vmatpush1.msra.mxu0 0.0
    %2600 = vmatprep.subr.mxu0 0.0
    %2601 = vmatpush1.msra.mxu0 0.0
    %2602 = vmatprep.subr.mxu0 0.0
    %2603 = vmatpush1.msra.mxu0 0.0
    %2604 = vmatprep.subr.mxu0 0.0
    %2605 = vmatpush1.msra.mxu0 0.0
    %2606 = vmatprep.subr.mxu0 0.0
    %2607 = vmatpush1.msra.mxu0 0.0
    %2608 = vmatprep.subr.mxu0 0.0
    %2609 = vmatpush1.msra.mxu0 0.0
    %2610 = vmatprep.subr.mxu0 0.0
    %2611 = vmatpush1.msra.mxu0 0.0
    %2612 = vmatprep.subr.mxu0 0.0
    %2613 = vmatpush1.msra.mxu0 0.0
    %2614 = vmatprep.subr.mxu0 0.0
    %2615 = vmatpush1.msra.mxu0 0.0
    %2616 = vmatprep.mubr.f32.mxu0 0.0
    %2617 = vmatmul.mubr.f32.gmra.mrb[0].mxu0 %v2550
    %v2618 = vpop.f32.mrb[0].mxu0
    %v2619 = vadd.f32 0.0, %v2618
    %v2620 = vpop.f32.mrb[0].mxu0
    %2621 = vdwg.mxu0
    %v2622 = vld [vmem:[%s14] sm:$0xff]
    %v2623 = vld [vmem:[%s14 + $0x8] sm:$0xff]
    %v2624 = vld [vmem:[%s14 + $0x10] sm:$0xff]
    %v2625 = vld [vmem:[%s14 + $0x18] sm:$0xff]
    %v2627 = vsel %vm162, %v2619, 0
    %2629 = vmatprep.subr.mxu0 0.0
    %2630 = vmatpush1.msra.mxu0 %v2622
    %2631 = vmatprep.subr.mxu0 0.0
    %2632 = vmatpush1.msra.mxu0 %v2623
    %2633 = vmatprep.subr.mxu0 0.0
    %2634 = vmatpush1.msra.mxu0 %v2624
    %2635 = vmatprep.subr.mxu0 0.0
    %2636 = vmatpush1.msra.mxu0 %v2625
    %2637 = vmatprep.subr.mxu0 0.0
    %2638 = vmatpush1.msra.mxu0 0.0
    %2639 = vmatprep.subr.mxu0 0.0
    %2640 = vmatpush1.msra.mxu0 0.0
    %2641 = vmatprep.subr.mxu0 0.0
    %2642 = vmatpush1.msra.mxu0 0.0
    %2643 = vmatprep.subr.mxu0 0.0
    %2644 = vmatpush1.msra.mxu0 0.0
    %2645 = vmatprep.subr.mxu0 0.0
    %2646 = vmatpush1.msra.mxu0 0.0
    %2647 = vmatprep.subr.mxu0 0.0
    %2648 = vmatpush1.msra.mxu0 0.0
    %2649 = vmatprep.subr.mxu0 0.0
    %2650 = vmatpush1.msra.mxu0 0.0
    %2651 = vmatprep.subr.mxu0 0.0
    %2652 = vmatpush1.msra.mxu0 0.0
    %2653 = vmatprep.subr.mxu0 0.0
    %2654 = vmatpush1.msra.mxu0 0.0
    %2655 = vmatprep.subr.mxu0 0.0
    %2656 = vmatpush1.msra.mxu0 0.0
    %2657 = vmatprep.subr.mxu0 0.0
    %2658 = vmatpush1.msra.mxu0 0.0
    %2659 = vmatprep.subr.mxu0 0.0
    %2660 = vmatpush1.msra.mxu0 0.0
    %2661 = vmatprep.subr.mxu0 0.0
    %2662 = vmatpush1.msra.mxu0 0.0
    %2663 = vmatprep.subr.mxu0 0.0
    %2664 = vmatpush1.msra.mxu0 0.0
    %2665 = vmatprep.subr.mxu0 0.0
    %2666 = vmatpush1.msra.mxu0 0.0
    %2667 = vmatprep.subr.mxu0 0.0
    %2668 = vmatpush1.msra.mxu0 0.0
    %2669 = vmatprep.subr.mxu0 0.0
    %2670 = vmatpush1.msra.mxu0 0.0
    %2671 = vmatprep.subr.mxu0 0.0
    %2672 = vmatpush1.msra.mxu0 0.0
    %2673 = vmatprep.subr.mxu0 0.0
    %2674 = vmatpush1.msra.mxu0 0.0
    %2675 = vmatprep.subr.mxu0 0.0
    %2676 = vmatpush1.msra.mxu0 0.0
    %2677 = vmatprep.subr.mxu0 0.0
    %2678 = vmatpush1.msra.mxu0 0.0
    %2679 = vmatprep.subr.mxu0 0.0
    %2680 = vmatpush1.msra.mxu0 0.0
    %2681 = vmatprep.subr.mxu0 0.0
    %2682 = vmatpush1.msra.mxu0 0.0
    %2683 = vmatprep.subr.mxu0 0.0
    %2684 = vmatpush1.msra.mxu0 0.0
    %2685 = vmatprep.subr.mxu0 0.0
    %2686 = vmatpush1.msra.mxu0 0.0
    %2687 = vmatprep.subr.mxu0 0.0
    %2688 = vmatpush1.msra.mxu0 0.0
    %2689 = vmatprep.subr.mxu0 0.0
    %2690 = vmatpush1.msra.mxu0 0.0
    %2691 = vmatprep.subr.mxu0 0.0
    %2692 = vmatpush1.msra.mxu0 0.0
    %2693 = vmatprep.mubr.f32.mxu0 0.0
    %2694 = vmatmul.mubr.f32.gmra.mrb[0].mxu0 %v2627
    %v2695 = vpop.f32.mrb[0].mxu0
    %v2696 = vadd.f32 0.0, %v2695
    %v2697 = vpop.f32.mrb[0].mxu0
    %2698 = vdwg.mxu0
    %vm2699 = vcmask 123904
    %2700 = vst.msk [vmem:[#allocation2] sm:$0x3] %vm2699, %v2696
    // Predicated region
    $region62: #{tpu_custom_call.1} parent=1 // pred_check
      _
    $region63: #{tpu_custom_call.1} parent=1 // pred_check_branch
      %2702 = sbr.rel (0) target = $region65
    $region64: #{tpu_custom_call.1} parent=1 // pred_region
      %s2704 = ssub.s32 32, 32
      %2705 = vsyncadd [#allocation3], %s2704
      %s2707 = sshll.u32 [#allocation2], 4
      %s2708 = int_to_ptr.vmem [resolvable:$true] %s2707
      %2710 = dma.vmem_to_hbm [thread:$0]  %s2708, 32, %s15, [#allocation3]
    $region65: #{tpu_custom_call.1} parent=1 // pred_fallthru
      _
    // Predicated region
    $region66: #{tpu_custom_call.1} parent=1 // pred_check
      _
    $region67: #{tpu_custom_call.1} parent=1 // pred_check_branch
      %2712 = sbr.rel (0) target = $region69
    $region68: #{tpu_custom_call.1} parent=1 // pred_region
      %2713 = dma.done [#allocation3], 32
    $region69: #{tpu_custom_call.1} parent=1 // pred_fallthru
      _
    %2714 = vsyncpa [#allocation3], 1

</llo_original>
